<compile_context>
chip_gen: v6e
topology: v6e:2x2x1
jax: 0.10.0
libtpu: 0.0.40
codegen_flags: <defaults>
</compile_context>

<pallas_src>
import jax
import jax.numpy as jnp
from jax.experimental import pallas as pl
from jax.experimental.pallas import tpu as pltpu

# ---- model hyper-parameters (small, consistent with the PyTorch module) ----
B = 2            # batch
T = 8            # block_size == sequence length
E = 32           # n_embd
H = 4            # n_head
HS = E // H      # head_size = 8
HID = 64         # n_hidden
V = 16           # vocab_size
L = 2            # n_layer
EPS = 1e-5       # nn.LayerNorm default eps
BT = B * T

MXU_DTYPE = jnp.bfloat16          # MXU operand dtype; accumulation stays f32
SM_STRIDE = 2 * E + HID           # wsml rows per layer: proj(32) + w1(32) + w2(64)
VROWS = 7                         # vpar rows per layer


def _layer_norm(v, g, b):
    # one-pass statistics (single traversal for mean and mean-of-squares)
    mu = jnp.mean(v, axis=-1, keepdims=True)
    ms = jnp.mean(v * v, axis=-1, keepdims=True)
    var = ms - mu * mu
    return (v - mu) * jax.lax.rsqrt(var + EPS) * g + b


def deberta_kernel(data_ref, wqkvp_ref, wsml_ref, vpar_ref, loss_ref):
    x = data_ref[0:BT, :]                        # (B*T, E) f32 token embeddings
    pos_b = data_ref[BT:2 * BT, :]               # (B*T, E) f32 positions (tiled over batch)
    onehot = data_ref[2 * BT:3 * BT, 0:V]        # (B*T, V) f32 one-hot targets

    # causal mask, hoisted out of all loops
    row = jax.lax.broadcasted_iota(jnp.int32, (T, T), 0)
    col = jax.lax.broadcasted_iota(jnp.int32, (T, T), 1)
    causal = (col <= row)[None, :, :]            # (1, T, T)

    for l in range(L):                           # static unrolled layer loop
        vb = l * VROWS
        ln1g = vpar_ref[vb + 0, :E]
        ln1b = vpar_ref[vb + 1, :E]
        ln2g = vpar_ref[vb + 2, :E]
        ln2b = vpar_ref[vb + 3, :E]
        projb = vpar_ref[vb + 4, :E]
        b1 = vpar_ref[vb + 5, :HID]
        b2 = vpar_ref[vb + 6, :E]

        # ---- Block: x = ln1(x); residual is taken from the ln1 output (matches spec) ----
        xn = _layer_norm(x, ln1g, ln1b)                                  # f32

        # ONE fused projection, all heads & roles:
        #   [xn | pos] @ [[Wc],[Wp]] -> per-head cols [cq+pq | cq | ck | pk | v*scale]
        xp = jnp.concatenate([xn, pos_b], axis=-1).astype(MXU_DTYPE)     # (BT, 2E)
        comb = jnp.dot(xp, wqkvp_ref[l * 2 * E:(l + 1) * 2 * E, :],
                       preferred_element_type=jnp.float32)               # (BT, 5E) f32
        comb = comb.astype(MXU_DTYPE)                                    # single hoisted cast

        sb = l * SM_STRIDE                                               # wsml row base
        att = jnp.zeros((BT, E), jnp.float32)
        for h in range(H):                                               # short unrolled loop
            lhs = comb[:, 2 * HS * h:2 * HS * (h + 1)].reshape(B, T, 2 * HS)
            rhs = comb[:, 2 * E + 2 * HS * h:2 * E + 2 * HS * (h + 1)].reshape(B, T, 2 * HS)
            val = comb[:, 4 * E + HS * h:4 * E + HS * (h + 1)].reshape(B, T, HS)

            # wei = (cq+pq)@ck^T + cq@pk^T, merged into ONE contraction of depth 2*HS
            wei = jnp.einsum('btd,bsd->bts', lhs, rhs,
                             preferred_element_type=jnp.float32)         # (B,T,T) f32
            wei = jnp.where(causal, wei, -jnp.inf)
            wei = wei - jnp.max(wei, axis=-1, keepdims=True)
            p = jnp.exp(wei)
            p = p * pl.reciprocal(jnp.sum(p, axis=-1, keepdims=True), approx=True)
            # TODO(synk): attention nn.Dropout(0.1) is stochastic; eval-mode identity here.

            o = jnp.einsum('bts,bsd->btd', p.astype(MXU_DTYPE), val,
                           preferred_element_type=jnp.float32).reshape(BT, HS)
            # per-head output-projection accumulation: sublane (8-row) slice of proj_w,
            # no lane concat of head outputs.
            att = att + jnp.dot(o.astype(MXU_DTYPE),
                                wsml_ref[sb + HS * h:sb + HS * (h + 1), :E],
                                preferred_element_type=jnp.float32)

        x = xn + att + projb

        # ---- FFN ----
        xn2 = _layer_norm(x, ln2g, ln2b)
        h1 = jnp.maximum(
            jnp.dot(xn2.astype(MXU_DTYPE), wsml_ref[sb + E:sb + 2 * E, :HID],
                    preferred_element_type=jnp.float32) + b1, 0.0)
        ff = jnp.dot(h1.astype(MXU_DTYPE),
                     wsml_ref[sb + 2 * E:sb + 2 * E + HID, :E],
                     preferred_element_type=jnp.float32) + b2
        x = x + ff

    # ---- final LayerNorm + vocab projection + mean cross-entropy ----
    vb = L * VROWS
    xf = _layer_norm(x, vpar_ref[vb + 0, :E], vpar_ref[vb + 1, :E])
    pw_base = L * SM_STRIDE
    logits = jnp.dot(xf.astype(MXU_DTYPE), wsml_ref[pw_base:pw_base + E, :V],
                     preferred_element_type=jnp.float32) + vpar_ref[vb + 2, :V]

    m = jnp.max(logits, axis=-1, keepdims=True)
    lse = m + jnp.log(jnp.sum(jnp.exp(logits - m), axis=-1, keepdims=True))
    tgt = jnp.sum(logits * onehot, axis=-1, keepdims=True)
    loss_ref[0, 0] = jnp.sum(lse - tgt) * (1.0 / BT)


# ------------------------- host-side packing & wrapper -------------------------

def _cols(w):
    """(L,H,E,HS) -> (L,E,H*HS) heads contiguous along columns."""
    return jnp.transpose(w, (0, 2, 1, 3)).reshape(L, E, H * HS)


def _pair_cols(wa, wb):
    """(L,H,E,HS) x2 -> (L,E,H*2HS) with per-head column block [wa_h | wb_h]."""
    w = jnp.concatenate([wa, wb], axis=-1)            # (L,H,E,2HS)
    return jnp.transpose(w, (0, 2, 1, 3)).reshape(L, E, H * 2 * HS)


def _pad_cols(w, width):
    return jnp.pad(w, ((0, 0), (0, width - w.shape[1])))


def _row(v, width=64):
    return jnp.pad(v, (0, width - v.shape[0]))[None, :]


def pack_inputs(params, tokens, targets):
    scale = (3.0 * HS) ** -0.5                         # value scaling, folded into Wv

    # --- f32 data pack: token embeddings | tiled positions | one-hot targets ---
    x_emb = params['emb'][tokens].reshape(BT, E)       # gather glue, host-side
    pos_b = jnp.tile(params['pos_emb'][jnp.arange(T)], (B, 1))            # (BT, E)
    onehot = jax.nn.one_hot(targets.reshape(BT), V, dtype=jnp.float32)    # (BT, V)
    data_in = jnp.concatenate(
        [x_emb, pos_b, jnp.pad(onehot, ((0, 0), (0, E - V)))], axis=0)    # (3*BT, E)

    # --- bf16 fused qkv+pos projection weight: (L*2E, 5E) ---
    zero_h = jnp.zeros_like(params['wcq'])
    w_content = jnp.concatenate([_pair_cols(params['wcq'], params['wcq']),
                                 _pair_cols(params['wck'], zero_h),
                                 _cols(params['wv']) * scale], axis=-1)   # (L,E,5E)
    w_pos = jnp.concatenate([_pair_cols(params['wpq'], zero_h),
                             _pair_cols(zero_h, params['wpk']),
                             jnp.zeros((L, E, E), jnp.float32)], axis=-1)  # (L,E,5E)
    w_qkvp = jnp.concatenate([w_content, w_pos], axis=1)                   # (L,2E,5E)
    w_qkvp = w_qkvp.reshape(L * 2 * E, 5 * E).astype(MXU_DTYPE)

    # --- bf16 small weights pack (width 64): per layer [proj_w; w1; w2], then pw ---
    blocks = []
    for l in range(L):
        blocks += [_pad_cols(params['proj_w'][l], 64),     # (E, 64)
                   params['w1'][l],                        # (E, HID=64)
                   _pad_cols(params['w2'][l], 64)]         # (HID, 64)
    blocks.append(_pad_cols(params['pw'], 64))             # (E, 64)
    w_small = jnp.concatenate(blocks, axis=0).astype(MXU_DTYPE)   # (L*128+32, 64)

    # --- f32 vector params pack (one row each, width 64) ---
    rows = []
    for l in range(L):
        rows += [_row(params['ln1_g'][l]), _row(params['ln1_b'][l]),
                 _row(params['ln2_g'][l]), _row(params['ln2_b'][l]),
                 _row(params['proj_b'][l]), _row(params['b1'][l]), _row(params['b2'][l])]
    rows += [_row(params['lnf_g']), _row(params['lnf_b']), _row(params['pb'])]
    vpar = jnp.concatenate(rows, axis=0).astype(jnp.float32)      # (L*7+3, 64)

    return data_in, w_qkvp, w_small, vpar


def deberta_loss(params, tokens, targets):
    """tokens, targets: (B, T) int32.  Returns scalar cross-entropy loss."""
    data_in, w_qkvp, w_small, vpar = pack_inputs(params, tokens, targets)
    loss = pl.pallas_call(
        deberta_kernel,
        out_shape=jax.ShapeDtypeStruct((1, 1), jnp.float32),
        in_specs=[pl.BlockSpec(memory_space=pltpu.MemorySpace.VMEM)] * 4,
        out_specs=pl.BlockSpec(memory_space=pltpu.MemorySpace.SMEM),
    )(data_in, w_qkvp, w_small, vpar)
    return loss[0, 0]


# ------------------------------- reference & init -------------------------------

def init_params(key):
    ks = jax.random.split(key, 16)

    def nrm(k, shape, scale=0.05):
        return (scale * jax.random.normal(k, shape)).astype(jnp.float32)

    return dict(
        emb=nrm(ks[0], (V, E), 1.0),
        pos_emb=nrm(ks[1], (T, E), 1.0),
        ln1_g=jnp.ones((L, E), jnp.float32),
        ln1_b=jnp.zeros((L, E), jnp.float32),
        wck=nrm(ks[2], (L, H, E, HS)),
        wcq=nrm(ks[3], (L, H, E, HS)),
        wpk=nrm(ks[4], (L, H, E, HS)),
        wpq=nrm(ks[5], (L, H, E, HS)),
        wv=nrm(ks[6], (L, H, E, HS)),
        proj_w=nrm(ks[7], (L, E, E)),
        proj_b=nrm(ks[8], (L, E)),
        ln2_g=jnp.ones((L, E), jnp.float32),
        ln2_b=jnp.zeros((L, E), jnp.float32),
        w1=nrm(ks[9], (L, E, HID)),
        b1=nrm(ks[10], (L, HID)),
        w2=nrm(ks[11], (L, HID, E)),
        b2=nrm(ks[12], (L, E)),
        lnf_g=jnp.ones((E,), jnp.float32),
        lnf_b=jnp.zeros((E,), jnp.float32),
        pw=nrm(ks[13], (E, V)),
        pb=nrm(ks[14], (V,)),
    )


def _ln_ref(v, g, b):
    mu = jnp.mean(v, axis=-1, keepdims=True)
    var = jnp.mean((v - mu) ** 2, axis=-1, keepdims=True)
    return (v - mu) * jax.lax.rsqrt(var + EPS) * g + b


def ref_loss(params, tokens, targets):
    """Plain-JAX f32 reference of the same forward pass (for a sanity check)."""
    x = params['emb'][tokens]
    pos = params['pos_emb'][jnp.arange(T)]
    causal = jnp.tril(jnp.ones((T, T), bool))
    scale = (3.0 * HS) ** -0.5
    for l in range(L):
        xn = _ln_ref(x, params['ln1_g'][l], params['ln1_b'][l])
        heads = []
        for h in range(H):
            ck = xn @ params['wck'][l, h]
            cq = xn @ params['wcq'][l, h]
            pk = pos @ params['wpk'][l, h]
            pq = pos @ params['wpq'][l, h]
            val = xn @ params['wv'][l, h] * scale
            wei = (jnp.einsum('btd,bsd->bts', cq, ck)
                   + jnp.einsum('td,bsd->bts', pq, ck)
                   + jnp.einsum('btd,sd->bts', cq, pk))
            wei = jnp.where(causal[None], wei, -jnp.inf)
            heads.append(jax.nn.softmax(wei, axis=-1) @ val)
        att = jnp.concatenate(heads, -1) @ params['proj_w'][l] + params['proj_b'][l]
        x = xn + att
        xn2 = _ln_ref(x, params['ln2_g'][l], params['ln2_b'][l])
        ff = (jnp.maximum(xn2 @ params['w1'][l] + params['b1'][l], 0.0)
              @ params['w2'][l] + params['b2'][l])
        x = x + ff
    xf = _ln_ref(x, params['lnf_g'], params['lnf_b'])
    logits = (xf @ params['pw'] + params['pb']).reshape(BT, V)
    yf = targets.reshape(BT)
    lse = jax.scipy.special.logsumexp(logits, axis=-1)
    tgt = logits[jnp.arange(BT), yf]
    return jnp.mean(lse - tgt)


if __name__ == "__main__":
    key = jax.random.PRNGKey(0)
    kp, kt, ky = jax.random.split(key, 3)
    params = init_params(kp)
    tokens = jax.random.randint(kt, (B, T), 0, V, dtype=jnp.int32)
    targets = jax.random.randint(ky, (B, T), 0, V, dtype=jnp.int32)

    loss = deberta_loss(params, tokens, targets)
    loss = jax.block_until_ready(loss)

    ref = ref_loss(params, tokens, targets)
    # bf16 MXU operands + approx reciprocal -> ~1e-3-level agreement with f32 reference.
    assert bool(jnp.isfinite(loss)), loss
    assert abs(float(loss) - float(ref)) < 1e-2, (float(loss), float(ref))
    print("KERNEL_OK")
</pallas_src>

<mosaic_0001>
module attributes {stable_mosaic.version = 11 : i64} {
  func.func @deberta_kernel(%arg0: memref<48x32xf32, #tpu.memory_space<vmem>>, %arg1: memref<128x160xbf16, #tpu.memory_space<vmem>>, %arg2: memref<288x64xbf16, #tpu.memory_space<vmem>>, %arg3: memref<17x64xf32, #tpu.memory_space<vmem>>, %arg4: memref<1x1xf32, #tpu.memory_space<smem>>) attributes {dimension_semantics = [], scalar_prefetch = 0 : i64, scratch_operands = 0 : i64, tpu.core_type = #tpu.core_type<tc>} {
    %c0 = arith.constant 0 : index
    %c0_0 = arith.constant 0 : index
    %0 = vector.load %arg0[%c0, %c0_0] : memref<48x32xf32, #tpu.memory_space<vmem>>, vector<16x32xf32>
    %c16 = arith.constant 16 : index
    %c0_1 = arith.constant 0 : index
    %1 = vector.load %arg0[%c16, %c0_1] : memref<48x32xf32, #tpu.memory_space<vmem>>, vector<16x32xf32>
    %c32 = arith.constant 32 : index
    %c0_2 = arith.constant 0 : index
    %2 = vector.load %arg0[%c32, %c0_2] : memref<48x32xf32, #tpu.memory_space<vmem>>, vector<16x16xf32>
    %3 = tpu.iota {dimensions = array<i32: 0>} : vector<8x8xi32>
    %4 = tpu.iota {dimensions = array<i32: 1>} : vector<8x8xi32>
    %5 = arith.cmpi sle, %4, %3 : vector<8x8xi32>
    %6 = vector.shape_cast %5 : vector<8x8xi1> to vector<1x8x8xi1>
    %c0_3 = arith.constant 0 : index
    %c0_4 = arith.constant 0 : index
    %7 = vector.load %arg3[%c0_3, %c0_4] : memref<17x64xf32, #tpu.memory_space<vmem>>, vector<1x32xf32>
    %8 = vector.shape_cast %7 : vector<1x32xf32> to vector<32xf32>
    %c1 = arith.constant 1 : index
    %c0_5 = arith.constant 0 : index
    %9 = vector.load %arg3[%c1, %c0_5] : memref<17x64xf32, #tpu.memory_space<vmem>>, vector<1x32xf32>
    %10 = vector.shape_cast %9 : vector<1x32xf32> to vector<32xf32>
    %c2 = arith.constant 2 : index
    %c0_6 = arith.constant 0 : index
    %11 = vector.load %arg3[%c2, %c0_6] : memref<17x64xf32, #tpu.memory_space<vmem>>, vector<1x32xf32>
    %12 = vector.shape_cast %11 : vector<1x32xf32> to vector<32xf32>
    %c3 = arith.constant 3 : index
    %c0_7 = arith.constant 0 : index
    %13 = vector.load %arg3[%c3, %c0_7] : memref<17x64xf32, #tpu.memory_space<vmem>>, vector<1x32xf32>
    %14 = vector.shape_cast %13 : vector<1x32xf32> to vector<32xf32>
    %c4 = arith.constant 4 : index
    %c0_8 = arith.constant 0 : index
    %15 = vector.load %arg3[%c4, %c0_8] : memref<17x64xf32, #tpu.memory_space<vmem>>, vector<1x32xf32>
    %16 = vector.shape_cast %15 : vector<1x32xf32> to vector<32xf32>
    %c5 = arith.constant 5 : index
    %c0_9 = arith.constant 0 : index
    %17 = vector.load %arg3[%c5, %c0_9] : memref<17x64xf32, #tpu.memory_space<vmem>>, vector<1x64xf32>
    %18 = vector.shape_cast %17 : vector<1x64xf32> to vector<64xf32>
    %c6 = arith.constant 6 : index
    %c0_10 = arith.constant 0 : index
    %19 = vector.load %arg3[%c6, %c0_10] : memref<17x64xf32, #tpu.memory_space<vmem>>, vector<1x32xf32>
    %20 = vector.shape_cast %19 : vector<1x32xf32> to vector<32xf32>
    %cst = arith.constant dense<0.000000e+00> : vector<16xf32>
    %21 = vector.multi_reduction <add>, %0, %cst [1] : vector<16x32xf32> to vector<16xf32>
    %22 = vector.shape_cast %21 : vector<16xf32> to vector<16x1xf32>
    %cst_11 = arith.constant 3.200000e+01 : f32
    %23 = vector.broadcast %cst_11 : f32 to vector<16x1xf32>
    %24 = arith.divf %22, %23 : vector<16x1xf32>
    %25 = arith.mulf %0, %0 : vector<16x32xf32>
    %cst_12 = arith.constant dense<0.000000e+00> : vector<16xf32>
    %26 = vector.multi_reduction <add>, %25, %cst_12 [1] : vector<16x32xf32> to vector<16xf32>
    %27 = vector.shape_cast %26 : vector<16xf32> to vector<16x1xf32>
    %cst_13 = arith.constant 3.200000e+01 : f32
    %28 = vector.broadcast %cst_13 : f32 to vector<16x1xf32>
    %29 = arith.divf %27, %28 : vector<16x1xf32>
    %30 = arith.mulf %24, %24 : vector<16x1xf32>
    %31 = arith.subf %29, %30 : vector<16x1xf32>
    %32 = vector.broadcast %24 : vector<16x1xf32> to vector<16x32xf32>
    %33 = arith.subf %0, %32 : vector<16x32xf32>
    %cst_14 = arith.constant 9.99999974E-6 : f32
    %34 = vector.broadcast %cst_14 : f32 to vector<16x1xf32>
    %35 = arith.addf %31, %34 : vector<16x1xf32>
    %36 = math.rsqrt %35 : vector<16x1xf32>
    %37 = vector.broadcast %36 : vector<16x1xf32> to vector<16x32xf32>
    %38 = arith.mulf %33, %37 : vector<16x32xf32>
    %39 = vector.shape_cast %8 : vector<32xf32> to vector<1x32xf32>
    %40 = vector.broadcast %39 : vector<1x32xf32> to vector<16x32xf32>
    %41 = arith.mulf %38, %40 : vector<16x32xf32>
    %42 = vector.shape_cast %10 : vector<32xf32> to vector<1x32xf32>
    %43 = vector.broadcast %42 : vector<1x32xf32> to vector<16x32xf32>
    %44 = arith.addf %41, %43 : vector<16x32xf32>
    %45 = tpu.concatenate %44, %1 in 1 : vector<16x32xf32>, vector<16x32xf32> -> vector<16x64xf32>
    %46 = arith.truncf %45 : vector<16x64xf32> to vector<16x64xbf16>
    %c0_15 = arith.constant 0 : index
    %c0_16 = arith.constant 0 : index
    %47 = vector.load %arg1[%c0_15, %c0_16] : memref<128x160xbf16, #tpu.memory_space<vmem>>, vector<64x160xbf16>
    %cst_17 = arith.constant dense<0.000000e+00> : vector<16x160xf32>
    %48 = tpu.matmul %46, %47, %cst_17 {dimension_numbers = #tpu.dot_dimension_numbers<[1], [0], [0], [1], [0, 0, 1, 1], [], []>} : vector<16x64xbf16>, vector<64x160xbf16>, vector<16x160xf32> -> vector<16x160xf32>
    %49 = arith.truncf %48 : vector<16x160xf32> to vector<16x160xbf16>
    %cst_18 = arith.constant 0.000000e+00 : f32
    %50 = vector.broadcast %cst_18 : f32 to vector<16x32xf32>
    %51 = vector.extract_strided_slice %49 {offsets = [0, 0], sizes = [16, 16], strides = [1, 1]} : vector<16x160xbf16> to vector<16x16xbf16>
    %52 = vector.shape_cast %51 : vector<16x16xbf16> to vector<2x8x16xbf16>
    %53 = vector.extract_strided_slice %49 {offsets = [0, 64], sizes = [16, 16], strides = [1, 1]} : vector<16x160xbf16> to vector<16x16xbf16>
    %54 = vector.shape_cast %53 : vector<16x16xbf16> to vector<2x8x16xbf16>
    %55 = vector.extract_strided_slice %49 {offsets = [0, 128], sizes = [16, 8], strides = [1, 1]} : vector<16x160xbf16> to vector<16x8xbf16>
    %56 = vector.shape_cast %55 : vector<16x8xbf16> to vector<2x8x8xbf16>
    "tpu.trace_start"() <{level = 10 : i32, message = "btd,bsd->bts"}> : () -> ()
    %cst_19 = arith.constant dense<0.000000e+00> : vector<2x8x8xf32>
    %57 = tpu.matmul %52, %54, %cst_19 {dimension_numbers = #tpu.dot_dimension_numbers<[2], [2], [1], [1], [0, 0, 0, 1, 1, 1], [0], [0]>} : vector<2x8x16xbf16>, vector<2x8x16xbf16>, vector<2x8x8xf32> -> vector<2x8x8xf32>
    %cst_20 = arith.constant 0xFF800000 : f32
    "tpu.trace_stop"() : () -> ()
    %58 = vector.shape_cast %6 : vector<1x8x8xi1> to vector<1x8x8xi1>
    %59 = vector.broadcast %58 : vector<1x8x8xi1> to vector<2x8x8xi1>
    %60 = vector.broadcast %cst_20 : f32 to vector<2x8x8xf32>
    %61 = arith.select %59, %57, %60 : vector<2x8x8xi1>, vector<2x8x8xf32>
    %cst_21 = arith.constant dense<0xFF800000> : vector<2x8xf32>
    %62 = vector.multi_reduction <maximumf>, %61, %cst_21 [2] : vector<2x8x8xf32> to vector<2x8xf32>
    %63 = vector.shape_cast %62 : vector<2x8xf32> to vector<2x8x1xf32>
    %64 = vector.broadcast %63 : vector<2x8x1xf32> to vector<2x8x8xf32>
    %65 = arith.subf %61, %64 : vector<2x8x8xf32>
    %66 = math.exp %65 : vector<2x8x8xf32>
    %cst_22 = arith.constant dense<0.000000e+00> : vector<2x8xf32>
    %67 = vector.multi_reduction <add>, %66, %cst_22 [2] : vector<2x8x8xf32> to vector<2x8xf32>
    %68 = vector.shape_cast %67 : vector<2x8xf32> to vector<2x8x1xf32>
    %69 = tpu.reciprocal %68 {approx = true} : vector<2x8x1xf32> -> vector<2x8x1xf32>
    %70 = vector.broadcast %69 : vector<2x8x1xf32> to vector<2x8x8xf32>
    %71 = arith.mulf %66, %70 : vector<2x8x8xf32>
    %72 = arith.truncf %71 : vector<2x8x8xf32> to vector<2x8x8xbf16>
    "tpu.trace_start"() <{level = 10 : i32, message = "bts,bsd->btd"}> : () -> ()
    %cst_23 = arith.constant dense<0.000000e+00> : vector<2x8x8xf32>
    %73 = tpu.matmul %72, %56, %cst_23 {dimension_numbers = #tpu.dot_dimension_numbers<[2], [1], [1], [2], [0, 0, 0, 1, 1, 2], [0], [0]>} : vector<2x8x8xbf16>, vector<2x8x8xbf16>, vector<2x8x8xf32> -> vector<2x8x8xf32>
    "tpu.trace_stop"() : () -> ()
    %74 = vector.shape_cast %73 : vector<2x8x8xf32> to vector<16x8xf32>
    %75 = arith.truncf %74 : vector<16x8xf32> to vector<16x8xbf16>
    %c0_24 = arith.constant 0 : index
    %c0_25 = arith.constant 0 : index
    %76 = vector.load %arg2[%c0_24, %c0_25] : memref<288x64xbf16, #tpu.memory_space<vmem>>, vector<8x32xbf16>
    %cst_26 = arith.constant dense<0.000000e+00> : vector<16x32xf32>
    %77 = tpu.matmul %75, %76, %cst_26 {dimension_numbers = #tpu.dot_dimension_numbers<[1], [0], [0], [1], [0, 0, 1, 1], [], []>} : vector<16x8xbf16>, vector<8x32xbf16>, vector<16x32xf32> -> vector<16x32xf32>
    %78 = arith.addf %50, %77 : vector<16x32xf32>
    %79 = vector.extract_strided_slice %49 {offsets = [0, 16], sizes = [16, 16], strides = [1, 1]} : vector<16x160xbf16> to vector<16x16xbf16>
    %80 = vector.shape_cast %79 : vector<16x16xbf16> to vector<2x8x16xbf16>
    %81 = vector.extract_strided_slice %49 {offsets = [0, 80], sizes = [16, 16], strides = [1, 1]} : vector<16x160xbf16> to vector<16x16xbf16>
    %82 = vector.shape_cast %81 : vector<16x16xbf16> to vector<2x8x16xbf16>
    %83 = vector.extract_strided_slice %49 {offsets = [0, 136], sizes = [16, 8], strides = [1, 1]} : vector<16x160xbf16> to vector<16x8xbf16>
    %84 = vector.shape_cast %83 : vector<16x8xbf16> to vector<2x8x8xbf16>
    "tpu.trace_start"() <{level = 10 : i32, message = "btd,bsd->bts"}> : () -> ()
    %cst_27 = arith.constant dense<0.000000e+00> : vector<2x8x8xf32>
    %85 = tpu.matmul %80, %82, %cst_27 {dimension_numbers = #tpu.dot_dimension_numbers<[2], [2], [1], [1], [0, 0, 0, 1, 1, 1], [0], [0]>} : vector<2x8x16xbf16>, vector<2x8x16xbf16>, vector<2x8x8xf32> -> vector<2x8x8xf32>
    %cst_28 = arith.constant 0xFF800000 : f32
    "tpu.trace_stop"() : () -> ()
    %86 = vector.shape_cast %6 : vector<1x8x8xi1> to vector<1x8x8xi1>
    %87 = vector.broadcast %86 : vector<1x8x8xi1> to vector<2x8x8xi1>
    %88 = vector.broadcast %cst_28 : f32 to vector<2x8x8xf32>
    %89 = arith.select %87, %85, %88 : vector<2x8x8xi1>, vector<2x8x8xf32>
    %cst_29 = arith.constant dense<0xFF800000> : vector<2x8xf32>
    %90 = vector.multi_reduction <maximumf>, %89, %cst_29 [2] : vector<2x8x8xf32> to vector<2x8xf32>
    %91 = vector.shape_cast %90 : vector<2x8xf32> to vector<2x8x1xf32>
    %92 = vector.broadcast %91 : vector<2x8x1xf32> to vector<2x8x8xf32>
    %93 = arith.subf %89, %92 : vector<2x8x8xf32>
    %94 = math.exp %93 : vector<2x8x8xf32>
    %cst_30 = arith.constant dense<0.000000e+00> : vector<2x8xf32>
    %95 = vector.multi_reduction <add>, %94, %cst_30 [2] : vector<2x8x8xf32> to vector<2x8xf32>
    %96 = vector.shape_cast %95 : vector<2x8xf32> to vector<2x8x1xf32>
    %97 = tpu.reciprocal %96 {approx = true} : vector<2x8x1xf32> -> vector<2x8x1xf32>
    %98 = vector.broadcast %97 : vector<2x8x1xf32> to vector<2x8x8xf32>
    %99 = arith.mulf %94, %98 : vector<2x8x8xf32>
    %100 = arith.truncf %99 : vector<2x8x8xf32> to vector<2x8x8xbf16>
    "tpu.trace_start"() <{level = 10 : i32, message = "bts,bsd->btd"}> : () -> ()
    %cst_31 = arith.constant dense<0.000000e+00> : vector<2x8x8xf32>
    %101 = tpu.matmul %100, %84, %cst_31 {dimension_numbers = #tpu.dot_dimension_numbers<[2], [1], [1], [2], [0, 0, 0, 1, 1, 2], [0], [0]>} : vector<2x8x8xbf16>, vector<2x8x8xbf16>, vector<2x8x8xf32> -> vector<2x8x8xf32>
    "tpu.trace_stop"() : () -> ()
    %102 = vector.shape_cast %101 : vector<2x8x8xf32> to vector<16x8xf32>
    %103 = arith.truncf %102 : vector<16x8xf32> to vector<16x8xbf16>
    %c8 = arith.constant 8 : index
    %c0_32 = arith.constant 0 : index
    %104 = vector.load %arg2[%c8, %c0_32] : memref<288x64xbf16, #tpu.memory_space<vmem>>, vector<8x32xbf16>
    %cst_33 = arith.constant dense<0.000000e+00> : vector<16x32xf32>
    %105 = tpu.matmul %103, %104, %cst_33 {dimension_numbers = #tpu.dot_dimension_numbers<[1], [0], [0], [1], [0, 0, 1, 1], [], []>} : vector<16x8xbf16>, vector<8x32xbf16>, vector<16x32xf32> -> vector<16x32xf32>
    %106 = arith.addf %78, %105 : vector<16x32xf32>
    %107 = vector.extract_strided_slice %49 {offsets = [0, 32], sizes = [16, 16], strides = [1, 1]} : vector<16x160xbf16> to vector<16x16xbf16>
    %108 = vector.shape_cast %107 : vector<16x16xbf16> to vector<2x8x16xbf16>
    %109 = vector.extract_strided_slice %49 {offsets = [0, 96], sizes = [16, 16], strides = [1, 1]} : vector<16x160xbf16> to vector<16x16xbf16>
    %110 = vector.shape_cast %109 : vector<16x16xbf16> to vector<2x8x16xbf16>
    %111 = vector.extract_strided_slice %49 {offsets = [0, 144], sizes = [16, 8], strides = [1, 1]} : vector<16x160xbf16> to vector<16x8xbf16>
    %112 = vector.shape_cast %111 : vector<16x8xbf16> to vector<2x8x8xbf16>
    "tpu.trace_start"() <{level = 10 : i32, message = "btd,bsd->bts"}> : () -> ()
    %cst_34 = arith.constant dense<0.000000e+00> : vector<2x8x8xf32>
    %113 = tpu.matmul %108, %110, %cst_34 {dimension_numbers = #tpu.dot_dimension_numbers<[2], [2], [1], [1], [0, 0, 0, 1, 1, 1], [0], [0]>} : vector<2x8x16xbf16>, vector<2x8x16xbf16>, vector<2x8x8xf32> -> vector<2x8x8xf32>
    %cst_35 = arith.constant 0xFF800000 : f32
    "tpu.trace_stop"() : () -> ()
    %114 = vector.shape_cast %6 : vector<1x8x8xi1> to vector<1x8x8xi1>
    %115 = vector.broadcast %114 : vector<1x8x8xi1> to vector<2x8x8xi1>
    %116 = vector.broadcast %cst_35 : f32 to vector<2x8x8xf32>
    %117 = arith.select %115, %113, %116 : vector<2x8x8xi1>, vector<2x8x8xf32>
    %cst_36 = arith.constant dense<0xFF800000> : vector<2x8xf32>
    %118 = vector.multi_reduction <maximumf>, %117, %cst_36 [2] : vector<2x8x8xf32> to vector<2x8xf32>
    %119 = vector.shape_cast %118 : vector<2x8xf32> to vector<2x8x1xf32>
    %120 = vector.broadcast %119 : vector<2x8x1xf32> to vector<2x8x8xf32>
    %121 = arith.subf %117, %120 : vector<2x8x8xf32>
    %122 = math.exp %121 : vector<2x8x8xf32>
    %cst_37 = arith.constant dense<0.000000e+00> : vector<2x8xf32>
    %123 = vector.multi_reduction <add>, %122, %cst_37 [2] : vector<2x8x8xf32> to vector<2x8xf32>
    %124 = vector.shape_cast %123 : vector<2x8xf32> to vector<2x8x1xf32>
    %125 = tpu.reciprocal %124 {approx = true} : vector<2x8x1xf32> -> vector<2x8x1xf32>
    %126 = vector.broadcast %125 : vector<2x8x1xf32> to vector<2x8x8xf32>
    %127 = arith.mulf %122, %126 : vector<2x8x8xf32>
    %128 = arith.truncf %127 : vector<2x8x8xf32> to vector<2x8x8xbf16>
    "tpu.trace_start"() <{level = 10 : i32, message = "bts,bsd->btd"}> : () -> ()
    %cst_38 = arith.constant dense<0.000000e+00> : vector<2x8x8xf32>
    %129 = tpu.matmul %128, %112, %cst_38 {dimension_numbers = #tpu.dot_dimension_numbers<[2], [1], [1], [2], [0, 0, 0, 1, 1, 2], [0], [0]>} : vector<2x8x8xbf16>, vector<2x8x8xbf16>, vector<2x8x8xf32> -> vector<2x8x8xf32>
    "tpu.trace_stop"() : () -> ()
    %130 = vector.shape_cast %129 : vector<2x8x8xf32> to vector<16x8xf32>
    %131 = arith.truncf %130 : vector<16x8xf32> to vector<16x8xbf16>
    %c16_39 = arith.constant 16 : index
    %c0_40 = arith.constant 0 : index
    %132 = vector.load %arg2[%c16_39, %c0_40] : memref<288x64xbf16, #tpu.memory_space<vmem>>, vector<8x32xbf16>
    %cst_41 = arith.constant dense<0.000000e+00> : vector<16x32xf32>
    %133 = tpu.matmul %131, %132, %cst_41 {dimension_numbers = #tpu.dot_dimension_numbers<[1], [0], [0], [1], [0, 0, 1, 1], [], []>} : vector<16x8xbf16>, vector<8x32xbf16>, vector<16x32xf32> -> vector<16x32xf32>
    %134 = arith.addf %106, %133 : vector<16x32xf32>
    %135 = vector.extract_strided_slice %49 {offsets = [0, 48], sizes = [16, 16], strides = [1, 1]} : vector<16x160xbf16> to vector<16x16xbf16>
    %136 = vector.shape_cast %135 : vector<16x16xbf16> to vector<2x8x16xbf16>
    %137 = vector.extract_strided_slice %49 {offsets = [0, 112], sizes = [16, 16], strides = [1, 1]} : vector<16x160xbf16> to vector<16x16xbf16>
    %138 = vector.shape_cast %137 : vector<16x16xbf16> to vector<2x8x16xbf16>
    %139 = vector.extract_strided_slice %49 {offsets = [0, 152], sizes = [16, 8], strides = [1, 1]} : vector<16x160xbf16> to vector<16x8xbf16>
    %140 = vector.shape_cast %139 : vector<16x8xbf16> to vector<2x8x8xbf16>
    "tpu.trace_start"() <{level = 10 : i32, message = "btd,bsd->bts"}> : () -> ()
    %cst_42 = arith.constant dense<0.000000e+00> : vector<2x8x8xf32>
    %141 = tpu.matmul %136, %138, %cst_42 {dimension_numbers = #tpu.dot_dimension_numbers<[2], [2], [1], [1], [0, 0, 0, 1, 1, 1], [0], [0]>} : vector<2x8x16xbf16>, vector<2x8x16xbf16>, vector<2x8x8xf32> -> vector<2x8x8xf32>
    %cst_43 = arith.constant 0xFF800000 : f32
    "tpu.trace_stop"() : () -> ()
    %142 = vector.shape_cast %6 : vector<1x8x8xi1> to vector<1x8x8xi1>
    %143 = vector.broadcast %142 : vector<1x8x8xi1> to vector<2x8x8xi1>
    %144 = vector.broadcast %cst_43 : f32 to vector<2x8x8xf32>
    %145 = arith.select %143, %141, %144 : vector<2x8x8xi1>, vector<2x8x8xf32>
    %cst_44 = arith.constant dense<0xFF800000> : vector<2x8xf32>
    %146 = vector.multi_reduction <maximumf>, %145, %cst_44 [2] : vector<2x8x8xf32> to vector<2x8xf32>
    %147 = vector.shape_cast %146 : vector<2x8xf32> to vector<2x8x1xf32>
    %148 = vector.broadcast %147 : vector<2x8x1xf32> to vector<2x8x8xf32>
    %149 = arith.subf %145, %148 : vector<2x8x8xf32>
    %150 = math.exp %149 : vector<2x8x8xf32>
    %cst_45 = arith.constant dense<0.000000e+00> : vector<2x8xf32>
    %151 = vector.multi_reduction <add>, %150, %cst_45 [2] : vector<2x8x8xf32> to vector<2x8xf32>
    %152 = vector.shape_cast %151 : vector<2x8xf32> to vector<2x8x1xf32>
    %153 = tpu.reciprocal %152 {approx = true} : vector<2x8x1xf32> -> vector<2x8x1xf32>
    %154 = vector.broadcast %153 : vector<2x8x1xf32> to vector<2x8x8xf32>
    %155 = arith.mulf %150, %154 : vector<2x8x8xf32>
    %156 = arith.truncf %155 : vector<2x8x8xf32> to vector<2x8x8xbf16>
    "tpu.trace_start"() <{level = 10 : i32, message = "bts,bsd->btd"}> : () -> ()
    %cst_46 = arith.constant dense<0.000000e+00> : vector<2x8x8xf32>
    %157 = tpu.matmul %156, %140, %cst_46 {dimension_numbers = #tpu.dot_dimension_numbers<[2], [1], [1], [2], [0, 0, 0, 1, 1, 2], [0], [0]>} : vector<2x8x8xbf16>, vector<2x8x8xbf16>, vector<2x8x8xf32> -> vector<2x8x8xf32>
    "tpu.trace_stop"() : () -> ()
    %158 = vector.shape_cast %157 : vector<2x8x8xf32> to vector<16x8xf32>
    %159 = arith.truncf %158 : vector<16x8xf32> to vector<16x8xbf16>
    %c24 = arith.constant 24 : index
    %c0_47 = arith.constant 0 : index
    %160 = vector.load %arg2[%c24, %c0_47] : memref<288x64xbf16, #tpu.memory_space<vmem>>, vector<8x32xbf16>
    %cst_48 = arith.constant dense<0.000000e+00> : vector<16x32xf32>
    %161 = tpu.matmul %159, %160, %cst_48 {dimension_numbers = #tpu.dot_dimension_numbers<[1], [0], [0], [1], [0, 0, 1, 1], [], []>} : vector<16x8xbf16>, vector<8x32xbf16>, vector<16x32xf32> -> vector<16x32xf32>
    %162 = arith.addf %134, %161 : vector<16x32xf32>
    %163 = arith.addf %44, %162 : vector<16x32xf32>
    %164 = vector.shape_cast %16 : vector<32xf32> to vector<1x32xf32>
    %165 = vector.broadcast %164 : vector<1x32xf32> to vector<16x32xf32>
    %166 = arith.addf %163, %165 : vector<16x32xf32>
    %cst_49 = arith.constant dense<0.000000e+00> : vector<16xf32>
    %167 = vector.multi_reduction <add>, %166, %cst_49 [1] : vector<16x32xf32> to vector<16xf32>
    %168 = vector.shape_cast %167 : vector<16xf32> to vector<16x1xf32>
    %cst_50 = arith.constant 3.200000e+01 : f32
    %169 = vector.broadcast %cst_50 : f32 to vector<16x1xf32>
    %170 = arith.divf %168, %169 : vector<16x1xf32>
    %171 = arith.mulf %166, %166 : vector<16x32xf32>
    %cst_51 = arith.constant dense<0.000000e+00> : vector<16xf32>
    %172 = vector.multi_reduction <add>, %171, %cst_51 [1] : vector<16x32xf32> to vector<16xf32>
    %173 = vector.shape_cast %172 : vector<16xf32> to vector<16x1xf32>
    %cst_52 = arith.constant 3.200000e+01 : f32
    %174 = vector.broadcast %cst_52 : f32 to vector<16x1xf32>
    %175 = arith.divf %173, %174 : vector<16x1xf32>
    %176 = arith.mulf %170, %170 : vector<16x1xf32>
    %177 = arith.subf %175, %176 : vector<16x1xf32>
    %178 = vector.broadcast %170 : vector<16x1xf32> to vector<16x32xf32>
    %179 = arith.subf %166, %178 : vector<16x32xf32>
    %cst_53 = arith.constant 9.99999974E-6 : f32
    %180 = vector.broadcast %cst_53 : f32 to vector<16x1xf32>
    %181 = arith.addf %177, %180 : vector<16x1xf32>
    %182 = math.rsqrt %181 : vector<16x1xf32>
    %183 = vector.broadcast %182 : vector<16x1xf32> to vector<16x32xf32>
    %184 = arith.mulf %179, %183 : vector<16x32xf32>
    %185 = vector.shape_cast %12 : vector<32xf32> to vector<1x32xf32>
    %186 = vector.broadcast %185 : vector<1x32xf32> to vector<16x32xf32>
    %187 = arith.mulf %184, %186 : vector<16x32xf32>
    %188 = vector.shape_cast %14 : vector<32xf32> to vector<1x32xf32>
    %189 = vector.broadcast %188 : vector<1x32xf32> to vector<16x32xf32>
    %190 = arith.addf %187, %189 : vector<16x32xf32>
    %191 = arith.truncf %190 : vector<16x32xf32> to vector<16x32xbf16>
    %c32_54 = arith.constant 32 : index
    %c0_55 = arith.constant 0 : index
    %192 = vector.load %arg2[%c32_54, %c0_55] : memref<288x64xbf16, #tpu.memory_space<vmem>>, vector<32x64xbf16>
    %cst_56 = arith.constant dense<0.000000e+00> : vector<16x64xf32>
    %193 = tpu.matmul %191, %192, %cst_56 {dimension_numbers = #tpu.dot_dimension_numbers<[1], [0], [0], [1], [0, 0, 1, 1], [], []>} : vector<16x32xbf16>, vector<32x64xbf16>, vector<16x64xf32> -> vector<16x64xf32>
    %194 = vector.shape_cast %18 : vector<64xf32> to vector<1x64xf32>
    %195 = vector.broadcast %194 : vector<1x64xf32> to vector<16x64xf32>
    %196 = arith.addf %193, %195 : vector<16x64xf32>
    %cst_57 = arith.constant 0.000000e+00 : f32
    %197 = vector.broadcast %cst_57 : f32 to vector<16x64xf32>
    %198 = arith.maximumf %196, %197 : vector<16x64xf32>
    %199 = arith.truncf %198 : vector<16x64xf32> to vector<16x64xbf16>
    %c64 = arith.constant 64 : index
    %c0_58 = arith.constant 0 : index
    %200 = vector.load %arg2[%c64, %c0_58] : memref<288x64xbf16, #tpu.memory_space<vmem>>, vector<64x32xbf16>
    %cst_59 = arith.constant dense<0.000000e+00> : vector<16x32xf32>
    %201 = tpu.matmul %199, %200, %cst_59 {dimension_numbers = #tpu.dot_dimension_numbers<[1], [0], [0], [1], [0, 0, 1, 1], [], []>} : vector<16x64xbf16>, vector<64x32xbf16>, vector<16x32xf32> -> vector<16x32xf32>
    %202 = vector.shape_cast %20 : vector<32xf32> to vector<1x32xf32>
    %203 = vector.broadcast %202 : vector<1x32xf32> to vector<16x32xf32>
    %204 = arith.addf %201, %203 : vector<16x32xf32>
    %205 = arith.addf %166, %204 : vector<16x32xf32>
    %c7 = arith.constant 7 : index
    %c0_60 = arith.constant 0 : index
    %206 = vector.load %arg3[%c7, %c0_60] : memref<17x64xf32, #tpu.memory_space<vmem>>, vector<1x32xf32>
    %207 = vector.shape_cast %206 : vector<1x32xf32> to vector<32xf32>
    %c8_61 = arith.constant 8 : index
    %c0_62 = arith.constant 0 : index
    %208 = vector.load %arg3[%c8_61, %c0_62] : memref<17x64xf32, #tpu.memory_space<vmem>>, vector<1x32xf32>
    %209 = vector.shape_cast %208 : vector<1x32xf32> to vector<32xf32>
    %c9 = arith.constant 9 : index
    %c0_63 = arith.constant 0 : index
    %210 = vector.load %arg3[%c9, %c0_63] : memref<17x64xf32, #tpu.memory_space<vmem>>, vector<1x32xf32>
    %211 = vector.shape_cast %210 : vector<1x32xf32> to vector<32xf32>
    %c10 = arith.constant 10 : index
    %c0_64 = arith.constant 0 : index
    %212 = vector.load %arg3[%c10, %c0_64] : memref<17x64xf32, #tpu.memory_space<vmem>>, vector<1x32xf32>
    %213 = vector.shape_cast %212 : vector<1x32xf32> to vector<32xf32>
    %c11 = arith.constant 11 : index
    %c0_65 = arith.constant 0 : index
    %214 = vector.load %arg3[%c11, %c0_65] : memref<17x64xf32, #tpu.memory_space<vmem>>, vector<1x32xf32>
    %215 = vector.shape_cast %214 : vector<1x32xf32> to vector<32xf32>
    %c12 = arith.constant 12 : index
    %c0_66 = arith.constant 0 : index
    %216 = vector.load %arg3[%c12, %c0_66] : memref<17x64xf32, #tpu.memory_space<vmem>>, vector<1x64xf32>
    %217 = vector.shape_cast %216 : vector<1x64xf32> to vector<64xf32>
    %c13 = arith.constant 13 : index
    %c0_67 = arith.constant 0 : index
    %218 = vector.load %arg3[%c13, %c0_67] : memref<17x64xf32, #tpu.memory_space<vmem>>, vector<1x32xf32>
    %219 = vector.shape_cast %218 : vector<1x32xf32> to vector<32xf32>
    %cst_68 = arith.constant dense<0.000000e+00> : vector<16xf32>
    %220 = vector.multi_reduction <add>, %205, %cst_68 [1] : vector<16x32xf32> to vector<16xf32>
    %221 = vector.shape_cast %220 : vector<16xf32> to vector<16x1xf32>
    %cst_69 = arith.constant 3.200000e+01 : f32
    %222 = vector.broadcast %cst_69 : f32 to vector<16x1xf32>
    %223 = arith.divf %221, %222 : vector<16x1xf32>
    %224 = arith.mulf %205, %205 : vector<16x32xf32>
    %cst_70 = arith.constant dense<0.000000e+00> : vector<16xf32>
    %225 = vector.multi_reduction <add>, %224, %cst_70 [1] : vector<16x32xf32> to vector<16xf32>
    %226 = vector.shape_cast %225 : vector<16xf32> to vector<16x1xf32>
    %cst_71 = arith.constant 3.200000e+01 : f32
    %227 = vector.broadcast %cst_71 : f32 to vector<16x1xf32>
    %228 = arith.divf %226, %227 : vector<16x1xf32>
    %229 = arith.mulf %223, %223 : vector<16x1xf32>
    %230 = arith.subf %228, %229 : vector<16x1xf32>
    %231 = vector.broadcast %223 : vector<16x1xf32> to vector<16x32xf32>
    %232 = arith.subf %205, %231 : vector<16x32xf32>
    %cst_72 = arith.constant 9.99999974E-6 : f32
    %233 = vector.broadcast %cst_72 : f32 to vector<16x1xf32>
    %234 = arith.addf %230, %233 : vector<16x1xf32>
    %235 = math.rsqrt %234 : vector<16x1xf32>
    %236 = vector.broadcast %235 : vector<16x1xf32> to vector<16x32xf32>
    %237 = arith.mulf %232, %236 : vector<16x32xf32>
    %238 = vector.shape_cast %207 : vector<32xf32> to vector<1x32xf32>
    %239 = vector.broadcast %238 : vector<1x32xf32> to vector<16x32xf32>
    %240 = arith.mulf %237, %239 : vector<16x32xf32>
    %241 = vector.shape_cast %209 : vector<32xf32> to vector<1x32xf32>
    %242 = vector.broadcast %241 : vector<1x32xf32> to vector<16x32xf32>
    %243 = arith.addf %240, %242 : vector<16x32xf32>
    %244 = tpu.concatenate %243, %1 in 1 : vector<16x32xf32>, vector<16x32xf32> -> vector<16x64xf32>
    %245 = arith.truncf %244 : vector<16x64xf32> to vector<16x64xbf16>
    %c64_73 = arith.constant 64 : index
    %c0_74 = arith.constant 0 : index
    %246 = vector.load %arg1[%c64_73, %c0_74] : memref<128x160xbf16, #tpu.memory_space<vmem>>, vector<64x160xbf16>
    %cst_75 = arith.constant dense<0.000000e+00> : vector<16x160xf32>
    %247 = tpu.matmul %245, %246, %cst_75 {dimension_numbers = #tpu.dot_dimension_numbers<[1], [0], [0], [1], [0, 0, 1, 1], [], []>} : vector<16x64xbf16>, vector<64x160xbf16>, vector<16x160xf32> -> vector<16x160xf32>
    %248 = arith.truncf %247 : vector<16x160xf32> to vector<16x160xbf16>
    %cst_76 = arith.constant 0.000000e+00 : f32
    %249 = vector.broadcast %cst_76 : f32 to vector<16x32xf32>
    %250 = vector.extract_strided_slice %248 {offsets = [0, 0], sizes = [16, 16], strides = [1, 1]} : vector<16x160xbf16> to vector<16x16xbf16>
    %251 = vector.shape_cast %250 : vector<16x16xbf16> to vector<2x8x16xbf16>
    %252 = vector.extract_strided_slice %248 {offsets = [0, 64], sizes = [16, 16], strides = [1, 1]} : vector<16x160xbf16> to vector<16x16xbf16>
    %253 = vector.shape_cast %252 : vector<16x16xbf16> to vector<2x8x16xbf16>
    %254 = vector.extract_strided_slice %248 {offsets = [0, 128], sizes = [16, 8], strides = [1, 1]} : vector<16x160xbf16> to vector<16x8xbf16>
    %255 = vector.shape_cast %254 : vector<16x8xbf16> to vector<2x8x8xbf16>
    "tpu.trace_start"() <{level = 10 : i32, message = "btd,bsd->bts"}> : () -> ()
    %cst_77 = arith.constant dense<0.000000e+00> : vector<2x8x8xf32>
    %256 = tpu.matmul %251, %253, %cst_77 {dimension_numbers = #tpu.dot_dimension_numbers<[2], [2], [1], [1], [0, 0, 0, 1, 1, 1], [0], [0]>} : vector<2x8x16xbf16>, vector<2x8x16xbf16>, vector<2x8x8xf32> -> vector<2x8x8xf32>
    %cst_78 = arith.constant 0xFF800000 : f32
    "tpu.trace_stop"() : () -> ()
    %257 = vector.shape_cast %6 : vector<1x8x8xi1> to vector<1x8x8xi1>
    %258 = vector.broadcast %257 : vector<1x8x8xi1> to vector<2x8x8xi1>
    %259 = vector.broadcast %cst_78 : f32 to vector<2x8x8xf32>
    %260 = arith.select %258, %256, %259 : vector<2x8x8xi1>, vector<2x8x8xf32>
    %cst_79 = arith.constant dense<0xFF800000> : vector<2x8xf32>
    %261 = vector.multi_reduction <maximumf>, %260, %cst_79 [2] : vector<2x8x8xf32> to vector<2x8xf32>
    %262 = vector.shape_cast %261 : vector<2x8xf32> to vector<2x8x1xf32>
    %263 = vector.broadcast %262 : vector<2x8x1xf32> to vector<2x8x8xf32>
    %264 = arith.subf %260, %263 : vector<2x8x8xf32>
    %265 = math.exp %264 : vector<2x8x8xf32>
    %cst_80 = arith.constant dense<0.000000e+00> : vector<2x8xf32>
    %266 = vector.multi_reduction <add>, %265, %cst_80 [2] : vector<2x8x8xf32> to vector<2x8xf32>
    %267 = vector.shape_cast %266 : vector<2x8xf32> to vector<2x8x1xf32>
    %268 = tpu.reciprocal %267 {approx = true} : vector<2x8x1xf32> -> vector<2x8x1xf32>
    %269 = vector.broadcast %268 : vector<2x8x1xf32> to vector<2x8x8xf32>
    %270 = arith.mulf %265, %269 : vector<2x8x8xf32>
    %271 = arith.truncf %270 : vector<2x8x8xf32> to vector<2x8x8xbf16>
    "tpu.trace_start"() <{level = 10 : i32, message = "bts,bsd->btd"}> : () -> ()
    %cst_81 = arith.constant dense<0.000000e+00> : vector<2x8x8xf32>
    %272 = tpu.matmul %271, %255, %cst_81 {dimension_numbers = #tpu.dot_dimension_numbers<[2], [1], [1], [2], [0, 0, 0, 1, 1, 2], [0], [0]>} : vector<2x8x8xbf16>, vector<2x8x8xbf16>, vector<2x8x8xf32> -> vector<2x8x8xf32>
    "tpu.trace_stop"() : () -> ()
    %273 = vector.shape_cast %272 : vector<2x8x8xf32> to vector<16x8xf32>
    %274 = arith.truncf %273 : vector<16x8xf32> to vector<16x8xbf16>
    %c128 = arith.constant 128 : index
    %c0_82 = arith.constant 0 : index
    %275 = vector.load %arg2[%c128, %c0_82] : memref<288x64xbf16, #tpu.memory_space<vmem>>, vector<8x32xbf16>
    %cst_83 = arith.constant dense<0.000000e+00> : vector<16x32xf32>
    %276 = tpu.matmul %274, %275, %cst_83 {dimension_numbers = #tpu.dot_dimension_numbers<[1], [0], [0], [1], [0, 0, 1, 1], [], []>} : vector<16x8xbf16>, vector<8x32xbf16>, vector<16x32xf32> -> vector<16x32xf32>
    %277 = arith.addf %249, %276 : vector<16x32xf32>
    %278 = vector.extract_strided_slice %248 {offsets = [0, 16], sizes = [16, 16], strides = [1, 1]} : vector<16x160xbf16> to vector<16x16xbf16>
    %279 = vector.shape_cast %278 : vector<16x16xbf16> to vector<2x8x16xbf16>
    %280 = vector.extract_strided_slice %248 {offsets = [0, 80], sizes = [16, 16], strides = [1, 1]} : vector<16x160xbf16> to vector<16x16xbf16>
    %281 = vector.shape_cast %280 : vector<16x16xbf16> to vector<2x8x16xbf16>
    %282 = vector.extract_strided_slice %248 {offsets = [0, 136], sizes = [16, 8], strides = [1, 1]} : vector<16x160xbf16> to vector<16x8xbf16>
    %283 = vector.shape_cast %282 : vector<16x8xbf16> to vector<2x8x8xbf16>
    "tpu.trace_start"() <{level = 10 : i32, message = "btd,bsd->bts"}> : () -> ()
    %cst_84 = arith.constant dense<0.000000e+00> : vector<2x8x8xf32>
    %284 = tpu.matmul %279, %281, %cst_84 {dimension_numbers = #tpu.dot_dimension_numbers<[2], [2], [1], [1], [0, 0, 0, 1, 1, 1], [0], [0]>} : vector<2x8x16xbf16>, vector<2x8x16xbf16>, vector<2x8x8xf32> -> vector<2x8x8xf32>
    %cst_85 = arith.constant 0xFF800000 : f32
    "tpu.trace_stop"() : () -> ()
    %285 = vector.shape_cast %6 : vector<1x8x8xi1> to vector<1x8x8xi1>
    %286 = vector.broadcast %285 : vector<1x8x8xi1> to vector<2x8x8xi1>
    %287 = vector.broadcast %cst_85 : f32 to vector<2x8x8xf32>
    %288 = arith.select %286, %284, %287 : vector<2x8x8xi1>, vector<2x8x8xf32>
    %cst_86 = arith.constant dense<0xFF800000> : vector<2x8xf32>
    %289 = vector.multi_reduction <maximumf>, %288, %cst_86 [2] : vector<2x8x8xf32> to vector<2x8xf32>
    %290 = vector.shape_cast %289 : vector<2x8xf32> to vector<2x8x1xf32>
    %291 = vector.broadcast %290 : vector<2x8x1xf32> to vector<2x8x8xf32>
    %292 = arith.subf %288, %291 : vector<2x8x8xf32>
    %293 = math.exp %292 : vector<2x8x8xf32>
    %cst_87 = arith.constant dense<0.000000e+00> : vector<2x8xf32>
    %294 = vector.multi_reduction <add>, %293, %cst_87 [2] : vector<2x8x8xf32> to vector<2x8xf32>
    %295 = vector.shape_cast %294 : vector<2x8xf32> to vector<2x8x1xf32>
    %296 = tpu.reciprocal %295 {approx = true} : vector<2x8x1xf32> -> vector<2x8x1xf32>
    %297 = vector.broadcast %296 : vector<2x8x1xf32> to vector<2x8x8xf32>
    %298 = arith.mulf %293, %297 : vector<2x8x8xf32>
    %299 = arith.truncf %298 : vector<2x8x8xf32> to vector<2x8x8xbf16>
    "tpu.trace_start"() <{level = 10 : i32, message = "bts,bsd->btd"}> : () -> ()
    %cst_88 = arith.constant dense<0.000000e+00> : vector<2x8x8xf32>
    %300 = tpu.matmul %299, %283, %cst_88 {dimension_numbers = #tpu.dot_dimension_numbers<[2], [1], [1], [2], [0, 0, 0, 1, 1, 2], [0], [0]>} : vector<2x8x8xbf16>, vector<2x8x8xbf16>, vector<2x8x8xf32> -> vector<2x8x8xf32>
    "tpu.trace_stop"() : () -> ()
    %301 = vector.shape_cast %300 : vector<2x8x8xf32> to vector<16x8xf32>
    %302 = arith.truncf %301 : vector<16x8xf32> to vector<16x8xbf16>
    %c136 = arith.constant 136 : index
    %c0_89 = arith.constant 0 : index
    %303 = vector.load %arg2[%c136, %c0_89] : memref<288x64xbf16, #tpu.memory_space<vmem>>, vector<8x32xbf16>
    %cst_90 = arith.constant dense<0.000000e+00> : vector<16x32xf32>
    %304 = tpu.matmul %302, %303, %cst_90 {dimension_numbers = #tpu.dot_dimension_numbers<[1], [0], [0], [1], [0, 0, 1, 1], [], []>} : vector<16x8xbf16>, vector<8x32xbf16>, vector<16x32xf32> -> vector<16x32xf32>
    %305 = arith.addf %277, %304 : vector<16x32xf32>
    %306 = vector.extract_strided_slice %248 {offsets = [0, 32], sizes = [16, 16], strides = [1, 1]} : vector<16x160xbf16> to vector<16x16xbf16>
    %307 = vector.shape_cast %306 : vector<16x16xbf16> to vector<2x8x16xbf16>
    %308 = vector.extract_strided_slice %248 {offsets = [0, 96], sizes = [16, 16], strides = [1, 1]} : vector<16x160xbf16> to vector<16x16xbf16>
    %309 = vector.shape_cast %308 : vector<16x16xbf16> to vector<2x8x16xbf16>
    %310 = vector.extract_strided_slice %248 {offsets = [0, 144], sizes = [16, 8], strides = [1, 1]} : vector<16x160xbf16> to vector<16x8xbf16>
    %311 = vector.shape_cast %310 : vector<16x8xbf16> to vector<2x8x8xbf16>
    "tpu.trace_start"() <{level = 10 : i32, message = "btd,bsd->bts"}> : () -> ()
    %cst_91 = arith.constant dense<0.000000e+00> : vector<2x8x8xf32>
    %312 = tpu.matmul %307, %309, %cst_91 {dimension_numbers = #tpu.dot_dimension_numbers<[2], [2], [1], [1], [0, 0, 0, 1, 1, 1], [0], [0]>} : vector<2x8x16xbf16>, vector<2x8x16xbf16>, vector<2x8x8xf32> -> vector<2x8x8xf32>
    %cst_92 = arith.constant 0xFF800000 : f32
    "tpu.trace_stop"() : () -> ()
    %313 = vector.shape_cast %6 : vector<1x8x8xi1> to vector<1x8x8xi1>
    %314 = vector.broadcast %313 : vector<1x8x8xi1> to vector<2x8x8xi1>
    %315 = vector.broadcast %cst_92 : f32 to vector<2x8x8xf32>
    %316 = arith.select %314, %312, %315 : vector<2x8x8xi1>, vector<2x8x8xf32>
    %cst_93 = arith.constant dense<0xFF800000> : vector<2x8xf32>
    %317 = vector.multi_reduction <maximumf>, %316, %cst_93 [2] : vector<2x8x8xf32> to vector<2x8xf32>
    %318 = vector.shape_cast %317 : vector<2x8xf32> to vector<2x8x1xf32>
    %319 = vector.broadcast %318 : vector<2x8x1xf32> to vector<2x8x8xf32>
    %320 = arith.subf %316, %319 : vector<2x8x8xf32>
    %321 = math.exp %320 : vector<2x8x8xf32>
    %cst_94 = arith.constant dense<0.000000e+00> : vector<2x8xf32>
    %322 = vector.multi_reduction <add>, %321, %cst_94 [2] : vector<2x8x8xf32> to vector<2x8xf32>
    %323 = vector.shape_cast %322 : vector<2x8xf32> to vector<2x8x1xf32>
    %324 = tpu.reciprocal %323 {approx = true} : vector<2x8x1xf32> -> vector<2x8x1xf32>
    %325 = vector.broadcast %324 : vector<2x8x1xf32> to vector<2x8x8xf32>
    %326 = arith.mulf %321, %325 : vector<2x8x8xf32>
    %327 = arith.truncf %326 : vector<2x8x8xf32> to vector<2x8x8xbf16>
    "tpu.trace_start"() <{level = 10 : i32, message = "bts,bsd->btd"}> : () -> ()
    %cst_95 = arith.constant dense<0.000000e+00> : vector<2x8x8xf32>
    %328 = tpu.matmul %327, %311, %cst_95 {dimension_numbers = #tpu.dot_dimension_numbers<[2], [1], [1], [2], [0, 0, 0, 1, 1, 2], [0], [0]>} : vector<2x8x8xbf16>, vector<2x8x8xbf16>, vector<2x8x8xf32> -> vector<2x8x8xf32>
    "tpu.trace_stop"() : () -> ()
    %329 = vector.shape_cast %328 : vector<2x8x8xf32> to vector<16x8xf32>
    %330 = arith.truncf %329 : vector<16x8xf32> to vector<16x8xbf16>
    %c144 = arith.constant 144 : index
    %c0_96 = arith.constant 0 : index
    %331 = vector.load %arg2[%c144, %c0_96] : memref<288x64xbf16, #tpu.memory_space<vmem>>, vector<8x32xbf16>
    %cst_97 = arith.constant dense<0.000000e+00> : vector<16x32xf32>
    %332 = tpu.matmul %330, %331, %cst_97 {dimension_numbers = #tpu.dot_dimension_numbers<[1], [0], [0], [1], [0, 0, 1, 1], [], []>} : vector<16x8xbf16>, vector<8x32xbf16>, vector<16x32xf32> -> vector<16x32xf32>
    %333 = arith.addf %305, %332 : vector<16x32xf32>
    %334 = vector.extract_strided_slice %248 {offsets = [0, 48], sizes = [16, 16], strides = [1, 1]} : vector<16x160xbf16> to vector<16x16xbf16>
    %335 = vector.shape_cast %334 : vector<16x16xbf16> to vector<2x8x16xbf16>
    %336 = vector.extract_strided_slice %248 {offsets = [0, 112], sizes = [16, 16], strides = [1, 1]} : vector<16x160xbf16> to vector<16x16xbf16>
    %337 = vector.shape_cast %336 : vector<16x16xbf16> to vector<2x8x16xbf16>
    %338 = vector.extract_strided_slice %248 {offsets = [0, 152], sizes = [16, 8], strides = [1, 1]} : vector<16x160xbf16> to vector<16x8xbf16>
    %339 = vector.shape_cast %338 : vector<16x8xbf16> to vector<2x8x8xbf16>
    "tpu.trace_start"() <{level = 10 : i32, message = "btd,bsd->bts"}> : () -> ()
    %cst_98 = arith.constant dense<0.000000e+00> : vector<2x8x8xf32>
    %340 = tpu.matmul %335, %337, %cst_98 {dimension_numbers = #tpu.dot_dimension_numbers<[2], [2], [1], [1], [0, 0, 0, 1, 1, 1], [0], [0]>} : vector<2x8x16xbf16>, vector<2x8x16xbf16>, vector<2x8x8xf32> -> vector<2x8x8xf32>
    %cst_99 = arith.constant 0xFF800000 : f32
    "tpu.trace_stop"() : () -> ()
    %341 = vector.shape_cast %6 : vector<1x8x8xi1> to vector<1x8x8xi1>
    %342 = vector.broadcast %341 : vector<1x8x8xi1> to vector<2x8x8xi1>
    %343 = vector.broadcast %cst_99 : f32 to vector<2x8x8xf32>
    %344 = arith.select %342, %340, %343 : vector<2x8x8xi1>, vector<2x8x8xf32>
    %cst_100 = arith.constant dense<0xFF800000> : vector<2x8xf32>
    %345 = vector.multi_reduction <maximumf>, %344, %cst_100 [2] : vector<2x8x8xf32> to vector<2x8xf32>
    %346 = vector.shape_cast %345 : vector<2x8xf32> to vector<2x8x1xf32>
    %347 = vector.broadcast %346 : vector<2x8x1xf32> to vector<2x8x8xf32>
    %348 = arith.subf %344, %347 : vector<2x8x8xf32>
    %349 = math.exp %348 : vector<2x8x8xf32>
    %cst_101 = arith.constant dense<0.000000e+00> : vector<2x8xf32>
    %350 = vector.multi_reduction <add>, %349, %cst_101 [2] : vector<2x8x8xf32> to vector<2x8xf32>
    %351 = vector.shape_cast %350 : vector<2x8xf32> to vector<2x8x1xf32>
    %352 = tpu.reciprocal %351 {approx = true} : vector<2x8x1xf32> -> vector<2x8x1xf32>
    %353 = vector.broadcast %352 : vector<2x8x1xf32> to vector<2x8x8xf32>
    %354 = arith.mulf %349, %353 : vector<2x8x8xf32>
    %355 = arith.truncf %354 : vector<2x8x8xf32> to vector<2x8x8xbf16>
    "tpu.trace_start"() <{level = 10 : i32, message = "bts,bsd->btd"}> : () -> ()
    %cst_102 = arith.constant dense<0.000000e+00> : vector<2x8x8xf32>
    %356 = tpu.matmul %355, %339, %cst_102 {dimension_numbers = #tpu.dot_dimension_numbers<[2], [1], [1], [2], [0, 0, 0, 1, 1, 2], [0], [0]>} : vector<2x8x8xbf16>, vector<2x8x8xbf16>, vector<2x8x8xf32> -> vector<2x8x8xf32>
    "tpu.trace_stop"() : () -> ()
    %357 = vector.shape_cast %356 : vector<2x8x8xf32> to vector<16x8xf32>
    %358 = arith.truncf %357 : vector<16x8xf32> to vector<16x8xbf16>
    %c152 = arith.constant 152 : index
    %c0_103 = arith.constant 0 : index
    %359 = vector.load %arg2[%c152, %c0_103] : memref<288x64xbf16, #tpu.memory_space<vmem>>, vector<8x32xbf16>
    %cst_104 = arith.constant dense<0.000000e+00> : vector<16x32xf32>
    %360 = tpu.matmul %358, %359, %cst_104 {dimension_numbers = #tpu.dot_dimension_numbers<[1], [0], [0], [1], [0, 0, 1, 1], [], []>} : vector<16x8xbf16>, vector<8x32xbf16>, vector<16x32xf32> -> vector<16x32xf32>
    %361 = arith.addf %333, %360 : vector<16x32xf32>
    %362 = arith.addf %243, %361 : vector<16x32xf32>
    %363 = vector.shape_cast %215 : vector<32xf32> to vector<1x32xf32>
    %364 = vector.broadcast %363 : vector<1x32xf32> to vector<16x32xf32>
    %365 = arith.addf %362, %364 : vector<16x32xf32>
    %cst_105 = arith.constant dense<0.000000e+00> : vector<16xf32>
    %366 = vector.multi_reduction <add>, %365, %cst_105 [1] : vector<16x32xf32> to vector<16xf32>
    %367 = vector.shape_cast %366 : vector<16xf32> to vector<16x1xf32>
    %cst_106 = arith.constant 3.200000e+01 : f32
    %368 = vector.broadcast %cst_106 : f32 to vector<16x1xf32>
    %369 = arith.divf %367, %368 : vector<16x1xf32>
    %370 = arith.mulf %365, %365 : vector<16x32xf32>
    %cst_107 = arith.constant dense<0.000000e+00> : vector<16xf32>
    %371 = vector.multi_reduction <add>, %370, %cst_107 [1] : vector<16x32xf32> to vector<16xf32>
    %372 = vector.shape_cast %371 : vector<16xf32> to vector<16x1xf32>
    %cst_108 = arith.constant 3.200000e+01 : f32
    %373 = vector.broadcast %cst_108 : f32 to vector<16x1xf32>
    %374 = arith.divf %372, %373 : vector<16x1xf32>
    %375 = arith.mulf %369, %369 : vector<16x1xf32>
    %376 = arith.subf %374, %375 : vector<16x1xf32>
    %377 = vector.broadcast %369 : vector<16x1xf32> to vector<16x32xf32>
    %378 = arith.subf %365, %377 : vector<16x32xf32>
    %cst_109 = arith.constant 9.99999974E-6 : f32
    %379 = vector.broadcast %cst_109 : f32 to vector<16x1xf32>
    %380 = arith.addf %376, %379 : vector<16x1xf32>
    %381 = math.rsqrt %380 : vector<16x1xf32>
    %382 = vector.broadcast %381 : vector<16x1xf32> to vector<16x32xf32>
    %383 = arith.mulf %378, %382 : vector<16x32xf32>
    %384 = vector.shape_cast %211 : vector<32xf32> to vector<1x32xf32>
    %385 = vector.broadcast %384 : vector<1x32xf32> to vector<16x32xf32>
    %386 = arith.mulf %383, %385 : vector<16x32xf32>
    %387 = vector.shape_cast %213 : vector<32xf32> to vector<1x32xf32>
    %388 = vector.broadcast %387 : vector<1x32xf32> to vector<16x32xf32>
    %389 = arith.addf %386, %388 : vector<16x32xf32>
    %390 = arith.truncf %389 : vector<16x32xf32> to vector<16x32xbf16>
    %c160 = arith.constant 160 : index
    %c0_110 = arith.constant 0 : index
    %391 = vector.load %arg2[%c160, %c0_110] : memref<288x64xbf16, #tpu.memory_space<vmem>>, vector<32x64xbf16>
    %cst_111 = arith.constant dense<0.000000e+00> : vector<16x64xf32>
    %392 = tpu.matmul %390, %391, %cst_111 {dimension_numbers = #tpu.dot_dimension_numbers<[1], [0], [0], [1], [0, 0, 1, 1], [], []>} : vector<16x32xbf16>, vector<32x64xbf16>, vector<16x64xf32> -> vector<16x64xf32>
    %393 = vector.shape_cast %217 : vector<64xf32> to vector<1x64xf32>
    %394 = vector.broadcast %393 : vector<1x64xf32> to vector<16x64xf32>
    %395 = arith.addf %392, %394 : vector<16x64xf32>
    %cst_112 = arith.constant 0.000000e+00 : f32
    %396 = vector.broadcast %cst_112 : f32 to vector<16x64xf32>
    %397 = arith.maximumf %395, %396 : vector<16x64xf32>
    %398 = arith.truncf %397 : vector<16x64xf32> to vector<16x64xbf16>
    %c192 = arith.constant 192 : index
    %c0_113 = arith.constant 0 : index
    %399 = vector.load %arg2[%c192, %c0_113] : memref<288x64xbf16, #tpu.memory_space<vmem>>, vector<64x32xbf16>
    %cst_114 = arith.constant dense<0.000000e+00> : vector<16x32xf32>
    %400 = tpu.matmul %398, %399, %cst_114 {dimension_numbers = #tpu.dot_dimension_numbers<[1], [0], [0], [1], [0, 0, 1, 1], [], []>} : vector<16x64xbf16>, vector<64x32xbf16>, vector<16x32xf32> -> vector<16x32xf32>
    %401 = vector.shape_cast %219 : vector<32xf32> to vector<1x32xf32>
    %402 = vector.broadcast %401 : vector<1x32xf32> to vector<16x32xf32>
    %403 = arith.addf %400, %402 : vector<16x32xf32>
    %404 = arith.addf %365, %403 : vector<16x32xf32>
    %c14 = arith.constant 14 : index
    %c0_115 = arith.constant 0 : index
    %405 = vector.load %arg3[%c14, %c0_115] : memref<17x64xf32, #tpu.memory_space<vmem>>, vector<1x32xf32>
    %406 = vector.shape_cast %405 : vector<1x32xf32> to vector<32xf32>
    %c15 = arith.constant 15 : index
    %c0_116 = arith.constant 0 : index
    %407 = vector.load %arg3[%c15, %c0_116] : memref<17x64xf32, #tpu.memory_space<vmem>>, vector<1x32xf32>
    %408 = vector.shape_cast %407 : vector<1x32xf32> to vector<32xf32>
    %cst_117 = arith.constant dense<0.000000e+00> : vector<16xf32>
    %409 = vector.multi_reduction <add>, %404, %cst_117 [1] : vector<16x32xf32> to vector<16xf32>
    %410 = vector.shape_cast %409 : vector<16xf32> to vector<16x1xf32>
    %cst_118 = arith.constant 3.200000e+01 : f32
    %411 = vector.broadcast %cst_118 : f32 to vector<16x1xf32>
    %412 = arith.divf %410, %411 : vector<16x1xf32>
    %413 = arith.mulf %404, %404 : vector<16x32xf32>
    %cst_119 = arith.constant dense<0.000000e+00> : vector<16xf32>
    %414 = vector.multi_reduction <add>, %413, %cst_119 [1] : vector<16x32xf32> to vector<16xf32>
    %415 = vector.shape_cast %414 : vector<16xf32> to vector<16x1xf32>
    %cst_120 = arith.constant 3.200000e+01 : f32
    %416 = vector.broadcast %cst_120 : f32 to vector<16x1xf32>
    %417 = arith.divf %415, %416 : vector<16x1xf32>
    %418 = arith.mulf %412, %412 : vector<16x1xf32>
    %419 = arith.subf %417, %418 : vector<16x1xf32>
    %420 = vector.broadcast %412 : vector<16x1xf32> to vector<16x32xf32>
    %421 = arith.subf %404, %420 : vector<16x32xf32>
    %cst_121 = arith.constant 9.99999974E-6 : f32
    %422 = vector.broadcast %cst_121 : f32 to vector<16x1xf32>
    %423 = arith.addf %419, %422 : vector<16x1xf32>
    %424 = math.rsqrt %423 : vector<16x1xf32>
    %425 = vector.broadcast %424 : vector<16x1xf32> to vector<16x32xf32>
    %426 = arith.mulf %421, %425 : vector<16x32xf32>
    %427 = vector.shape_cast %406 : vector<32xf32> to vector<1x32xf32>
    %428 = vector.broadcast %427 : vector<1x32xf32> to vector<16x32xf32>
    %429 = arith.mulf %426, %428 : vector<16x32xf32>
    %430 = vector.shape_cast %408 : vector<32xf32> to vector<1x32xf32>
    %431 = vector.broadcast %430 : vector<1x32xf32> to vector<16x32xf32>
    %432 = arith.addf %429, %431 : vector<16x32xf32>
    %433 = arith.truncf %432 : vector<16x32xf32> to vector<16x32xbf16>
    %c256 = arith.constant 256 : index
    %c0_122 = arith.constant 0 : index
    %434 = vector.load %arg2[%c256, %c0_122] : memref<288x64xbf16, #tpu.memory_space<vmem>>, vector<32x16xbf16>
    %cst_123 = arith.constant dense<0.000000e+00> : vector<16x16xf32>
    %435 = tpu.matmul %433, %434, %cst_123 {dimension_numbers = #tpu.dot_dimension_numbers<[1], [0], [0], [1], [0, 0, 1, 1], [], []>} : vector<16x32xbf16>, vector<32x16xbf16>, vector<16x16xf32> -> vector<16x16xf32>
    %c16_124 = arith.constant 16 : index
    %c0_125 = arith.constant 0 : index
    %436 = vector.load %arg3[%c16_124, %c0_125] : memref<17x64xf32, #tpu.memory_space<vmem>>, vector<1x16xf32>
    %437 = vector.shape_cast %436 : vector<1x16xf32> to vector<16xf32>
    %438 = vector.shape_cast %437 : vector<16xf32> to vector<1x16xf32>
    %439 = vector.broadcast %438 : vector<1x16xf32> to vector<16x16xf32>
    %440 = arith.addf %435, %439 : vector<16x16xf32>
    %cst_126 = arith.constant dense<0xFF800000> : vector<16xf32>
    %441 = vector.multi_reduction <maximumf>, %440, %cst_126 [1] : vector<16x16xf32> to vector<16xf32>
    %442 = vector.shape_cast %441 : vector<16xf32> to vector<16x1xf32>
    %443 = vector.broadcast %442 : vector<16x1xf32> to vector<16x16xf32>
    %444 = arith.subf %440, %443 : vector<16x16xf32>
    %445 = math.exp %444 : vector<16x16xf32>
    %cst_127 = arith.constant dense<0.000000e+00> : vector<16xf32>
    %446 = vector.multi_reduction <add>, %445, %cst_127 [1] : vector<16x16xf32> to vector<16xf32>
    %447 = vector.shape_cast %446 : vector<16xf32> to vector<16x1xf32>
    %448 = math.log %447 : vector<16x1xf32>
    %449 = arith.addf %442, %448 : vector<16x1xf32>
    %450 = arith.mulf %440, %2 : vector<16x16xf32>
    %cst_128 = arith.constant dense<0.000000e+00> : vector<16xf32>
    %451 = vector.multi_reduction <add>, %450, %cst_128 [1] : vector<16x16xf32> to vector<16xf32>
    %452 = vector.shape_cast %451 : vector<16xf32> to vector<16x1xf32>
    %453 = arith.subf %449, %452 : vector<16x1xf32>
    %454 = vector.shape_cast %453 : vector<16x1xf32> to vector<1x16x1xf32>
    %cst_129 = arith.constant dense<0.000000e+00> : vector<1xf32>
    %455 = vector.multi_reduction <add>, %454, %cst_129 [1, 2] : vector<1x16x1xf32> to vector<1xf32>
    %456 = vector.shape_cast %455 : vector<1xf32> to vector<1x1x1xf32>
    %457 = vector.extract %456[0, 0, 0] : f32 from vector<1x1x1xf32>
    %cst_130 = arith.constant 6.250000e-02 : f32
    %458 = arith.mulf %457, %cst_130 : f32
    %c0_131 = arith.constant 0 : index
    %c0_132 = arith.constant 0 : index
    %459 = memref.load %arg4[%c0_131, %c0_132] : memref<1x1xf32, #tpu.memory_space<smem>>
    memref.store %458, %arg4[%c0_131, %c0_132] : memref<1x1xf32, #tpu.memory_space<smem>>
    return
  }
}

</mosaic_0001>

<llo_original>
// kernel: tpu_custom_call.1
$region0: #{tpu_custom_call.1}
  #allocation0 [shape = 'u32[]', space=smem, size = 0x4, offset = 0x4, fixed_abs, tag = 'smem constant byte address 0x4 - core index']
  #allocation1 [shape = 'u32[144,128]{1,0:T(1,128)}', space=vmem, size = 0x12000, scoped, tag = 'internal scratch']
  %s0 = inlined_call_operand.vmem [shape: f32[48,32], index: 0, kind: input, shape index: {}]
  %s1 = inlined_call_operand.vmem [shape: bf16[128,160], index: 1, kind: input, shape index: {}]
  %s2 = inlined_call_operand.vmem [shape: bf16[288,64], index: 2, kind: input, shape index: {}]
  %s3 = inlined_call_operand.vmem [shape: f32[17,64], index: 3, kind: input, shape index: {}]
  %s4 = inlined_call_operand.hbm [shape: f32[1,1], index: 4, kind: output, shape index: {}]
  %s5 = sld [smem:[#allocation0]]
  $region26: #{tpu_custom_call.1} parent=0
    _
  %s7 = ssub.s32 1, %s5
  %s8 = scalar_select 0, %s7, %s5
  $region1: #{tpu_custom_call.1} parent=0
    #allocation2 [shape = 'u8[512]{0}', space=smem, size = 0x200, scoped, tag = 'output window, operand 0, single buffered']
    #allocation3 [shape = 's32[1]{0}', space=sflag, size = 0x4, scoped, tag = 'scoped memory for tpu_custom_call.1']
    %9 = vsyncpa [#allocation3], 0
    // Predicated region
    $region2: #{tpu_custom_call.1} parent=1 // pred_check
      _
    $region3: #{tpu_custom_call.1} parent=1 // pred_check_branch
      %11 = sbr.rel (0) target = $region5
    $region4: #{tpu_custom_call.1} parent=1 // pred_region
      _
    $region5: #{tpu_custom_call.1} parent=1 // pred_fallthru
      _
    // Predicated region
    $region6: #{tpu_custom_call.1} parent=1 // pred_check
      _
    $region7: #{tpu_custom_call.1} parent=1 // pred_check_branch
      %13 = sbr.rel (0) target = $region9
    $region8: #{tpu_custom_call.1} parent=1 // pred_region
      _
    $region9: #{tpu_custom_call.1} parent=1 // pred_fallthru
      _
    // Predicated region
    $region10: #{tpu_custom_call.1} parent=1 // pred_check
      _
    $region11: #{tpu_custom_call.1} parent=1 // pred_check_branch
      %15 = sbr.rel (0) target = $region13
    $region12: #{tpu_custom_call.1} parent=1 // pred_region
      _
    $region13: #{tpu_custom_call.1} parent=1 // pred_fallthru
      _
    // Predicated region
    $region14: #{tpu_custom_call.1} parent=1 // pred_check
      _
    $region15: #{tpu_custom_call.1} parent=1 // pred_check_branch
      %17 = sbr.rel (0) target = $region17
    $region16: #{tpu_custom_call.1} parent=1 // pred_region
      _
    $region17: #{tpu_custom_call.1} parent=1 // pred_fallthru
      _
    %v19 = vld [vmem:[%s0] sm:$0xff]
    %v20 = vld [vmem:[%s0 + $0x8] sm:$0xff]
    %v21 = vld [vmem:[%s0 + $0x10] sm:$0xff]
    %v22 = vld [vmem:[%s0 + $0x18] sm:$0xff]
    %v23 = vld [vmem:[%s0 + $0x20] sm:$0xff]
    %v24 = vld [vmem:[%s0 + $0x28] sm:$0xff]
    %v25 = vlaneseq
    %v26 = vshrl.u32 %v25, 7
    %v27 = vlaneseq
    %v28 = vand.u32 %v27, 127
    %vm29 = vcmp.le.s32.totalorder %v28, %v26
    %v30 = vld [vmem:[%s3] sm:$0x1]
    %v31 = vld [vmem:[%s3 + $0x1] sm:$0x1]
    %v32 = vld [vmem:[%s3 + $0x2] sm:$0x1]
    %v33 = vld [vmem:[%s3 + $0x3] sm:$0x1]
    %v34 = vld [vmem:[%s3 + $0x4] sm:$0x1]
    %v35 = vld [vmem:[%s3 + $0x5] sm:$0x1]
    %v36 = vld [vmem:[%s3 + $0x6] sm:$0x1]
    %vm37 = vcmask 261120
    %v38 = vsel %vm37, %v19, 0.0
    %39 = vadd.xlane.f32.xlu0 %v38
    %v40 = vpop.xlane.xlu0 %39
    %v41 = vsel %vm37, %v20, 0.0
    %42 = vadd.xlane.f32.xlu0 %v41
    %v43 = vpop.xlane.xlu0 %42
    %v44 = vrcp.pop 32.0
    %v45 = vmul.f32 %v40, %v44
    %v46 = vmul.f32 %v43, %v44
    %v47 = vmul.f32 %v19, %v19
    %v48 = vmul.f32 %v20, %v20
    %v49 = vsel %vm37, %v47, 0.0
    %50 = vadd.xlane.f32.xlu0 %v49
    %v51 = vpop.xlane.xlu0 %50
    %v52 = vsel %vm37, %v48, 0.0
    %53 = vadd.xlane.f32.xlu0 %v52
    %v54 = vpop.xlane.xlu0 %53
    %v55 = vmul.f32 %v51, %v44
    %v56 = vmul.f32 %v54, %v44
    %v57 = vmul.f32 %v45, %v45
    %v58 = vmul.f32 %v46, %v46
    %v59 = vsub.f32 %v55, %v57
    %v60 = vsub.f32 %v56, %v58
    %v61 = vsub.f32 %v19, %v45
    %v62 = vsub.f32 %v20, %v46
    %v63 = vadd.f32 %v59, 1e-05
    %v64 = vadd.f32 %v60, 1e-05
    %v65 = vrsqrt.pop %v63
    %v66 = vrsqrt.pop %v64
    %v67 = vmul.f32 %v61, %v65
    %v68 = vmul.f32 %v62, %v66
    %v69 = vlaneseq
    %v70 = vshrl.u32 %v69, 7
    %v71 = vsub.s32 0, %v70
    %v72 = vrot.slane %v30, %v71
    %v73 = vmul.f32 %v67, %v72
    %v74 = vmul.f32 %v68, %v72
    %v75 = vlaneseq
    %v76 = vshrl.u32 %v75, 7
    %v77 = vsub.s32 0, %v76
    %v78 = vrot.slane %v31, %v77
    %v79 = vadd.f32 %v73, %v78
    %v80 = vadd.f32 %v74, %v78
    %83 = vrot.lane.b32.xlu0 %v21, 32
    %v84 = vpop.permute.xlu0 %83
    %85 = vrot.lane.b32.xlu0 %v22, 32
    %v86 = vpop.permute.xlu0 %85
    %v89 = vsel %vm37, %v79, %v84
    %v90 = vsel %vm37, %v80, %v86
    %v91 = vpack.c.bf16 %v90, %v89
    %v92 = vld [vmem:[%s1] sm:$0xff]
    %v93 = vld [vmem:[%s1 + $0x8] sm:$0xff]
    %v94 = vld [vmem:[%s1 + $0x10] sm:$0xff]
    %v95 = vld [vmem:[%s1 + $0x18] sm:$0xff]
    %v96 = vld [vmem:[%s1 + $0x20] sm:$0xff]
    %v97 = vld [vmem:[%s1 + $0x28] sm:$0xff]
    %v98 = vld [vmem:[%s1 + $0x30] sm:$0xff]
    %v99 = vld [vmem:[%s1 + $0x38] sm:$0xff]
    %v108 = vunpack.c.l.b16 %v92
    %v109 = vunpack.c.h.b16 %v92
    %v110 = vunpack.c.l.b16 %v93
    %v111 = vunpack.c.h.b16 %v93
    %v112 = vunpack.c.l.b16 %v94
    %v113 = vunpack.c.h.b16 %v94
    %v114 = vunpack.c.l.b16 %v95
    %v115 = vunpack.c.h.b16 %v95
    %v116 = vunpack.c.l.b16 %v96
    %v117 = vunpack.c.h.b16 %v96
    %v118 = vunpack.c.l.b16 %v97
    %v119 = vunpack.c.h.b16 %v97
    %v120 = vunpack.c.l.b16 %v98
    %v121 = vunpack.c.h.b16 %v98
    %v122 = vunpack.c.l.b16 %v99
    %v123 = vunpack.c.h.b16 %v99
    %v124 = vpack.c.b16 %v110, %v108
    %v125 = vpack.c.b16 %v111, %v109
    %v126 = vpack.c.b16 %v114, %v112
    %v127 = vpack.c.b16 %v115, %v113
    %v128 = vpack.c.b16 %v118, %v116
    %v129 = vpack.c.b16 %v119, %v117
    %v130 = vpack.c.b16 %v122, %v120
    %v131 = vpack.c.b16 %v123, %v121
    %vm140 = vcmask 523264
    %v142 = vsel %vm140, %v91, 0
    %144 = vmatprep.subr.bf16.mxu0 0
    %145 = vmatpush1.bf16.msra.mxu0 0
    %146 = vmatprep.subr.bf16.mxu0 0
    %147 = vmatpush1.bf16.msra.mxu0 0
    %148 = vmatprep.subr.bf16.mxu0 0
    %149 = vmatpush1.bf16.msra.mxu0 0
    %150 = vmatprep.subr.bf16.mxu0 0
    %151 = vmatpush1.bf16.msra.mxu0 0
    %152 = vmatprep.subr.bf16.mxu0 %v131
    %153 = vmatpush1.bf16.msra.mxu0 %v130
    %154 = vmatprep.subr.bf16.mxu0 %v129
    %155 = vmatpush1.bf16.msra.mxu0 %v128
    %156 = vmatprep.subr.bf16.mxu0 %v127
    %157 = vmatpush1.bf16.msra.mxu0 %v126
    %158 = vmatprep.subr.bf16.mxu0 %v125
    %159 = vmatpush1.bf16.msra.mxu0 %v124
    %160 = vmatprep.subr.bf16.mxu0 0
    %161 = vmatpush2.bf16.msra.mxu0 0
    %162 = vmatprep.subr.bf16.mxu0 0
    %163 = vmatpush2.bf16.msra.mxu0 0
    %164 = vmatprep.subr.bf16.mxu0 0
    %165 = vmatpush2.bf16.msra.mxu0 0
    %166 = vmatprep.subr.bf16.mxu0 0
    %167 = vmatpush2.bf16.msra.mxu0 0
    %168 = vmatprep.subr.bf16.mxu0 0
    %169 = vmatpush2.bf16.msra.mxu0 0
    %170 = vmatprep.subr.bf16.mxu0 0
    %171 = vmatpush2.bf16.msra.mxu0 0
    %172 = vmatprep.subr.bf16.mxu0 0
    %173 = vmatpush2.bf16.msra.mxu0 0
    %174 = vmatprep.subr.bf16.mxu0 0
    %175 = vmatpush2.bf16.msra.mxu0 0
    %176 = vmatprep.mubr.bf16.mxu0 0
    %177 = vmatmul.mubr.bf16.gmra.mxu0 %v142
    %v178 = vpop.f32.mrf.mxu0
    %v179 = vadd.f32 0.0, %v178
    %v180 = vpop.f32.mrf.mxu0
    %v181 = vadd.f32 0.0, %v180
    %v182 = vpop.f32.mrf.mxu0
    %v183 = vadd.f32 0.0, %v182
    %v184 = vpop.f32.mrf.mxu0
    %v185 = vadd.f32 0.0, %v184
    %186 = vdwg.mxu0
    %v187 = vpack.c.bf16 %v183, %v179
    %v188 = vpack.c.bf16 %v185, %v181
    %v190 = vunpack.c.l.b16 %v187
    %v191 = vunpack.c.h.b16 %v187
    %v192 = vpack.c.b16 %v190, %v190
    %v193 = vpack.c.b16 %v191, %v191
    %v195 = vunpack.c.l.b16 %v188
    %v196 = vunpack.c.h.b16 %v188
    %v197 = vpack.c.b16 %v195, %v195
    %v198 = vpack.c.b16 %v196, %v196
    %199 = vrot.lane.b32.xlu0 %v192, 64
    %v200 = vpop.permute.xlu0 %199
    %vm201 = vcmask 130048
    %v203 = vsel %vm201, %v192, 0
    %v206 = vsel %vm201, %v200, 0
    %208 = vmatprep.subr.bf16.mxu0 0
    %209 = vmatpush1.bf16.xpose.msra.mxu0 0
    %210 = vmatprep.subr.bf16.mxu0 0
    %211 = vmatpush1.bf16.xpose.msra.mxu0 0
    %212 = vmatprep.subr.bf16.mxu0 0
    %213 = vmatpush1.bf16.xpose.msra.mxu0 0
    %214 = vmatprep.subr.bf16.mxu0 0
    %215 = vmatpush1.bf16.xpose.msra.mxu0 0
    %216 = vmatprep.subr.bf16.mxu0 0
    %217 = vmatpush1.bf16.xpose.msra.mxu0 0
    %218 = vmatprep.subr.bf16.mxu0 0
    %219 = vmatpush1.bf16.xpose.msra.mxu0 0
    %220 = vmatprep.subr.bf16.mxu0 0
    %221 = vmatpush1.bf16.xpose.msra.mxu0 0
    %222 = vmatprep.subr.bf16.mxu0 0
    %223 = vmatpush1.bf16.xpose.msra.mxu0 %v206
    %224 = vmatprep.subr.bf16.mxu0 0
    %225 = vmatpush2.bf16.xpose.msra.mxu0 0
    %226 = vmatprep.subr.bf16.mxu0 0
    %227 = vmatpush2.bf16.xpose.msra.mxu0 0
    %228 = vmatprep.subr.bf16.mxu0 0
    %229 = vmatpush2.bf16.xpose.msra.mxu0 0
    %230 = vmatprep.subr.bf16.mxu0 0
    %231 = vmatpush2.bf16.xpose.msra.mxu0 0
    %232 = vmatprep.subr.bf16.mxu0 0
    %233 = vmatpush2.bf16.xpose.msra.mxu0 0
    %234 = vmatprep.subr.bf16.mxu0 0
    %235 = vmatpush2.bf16.xpose.msra.mxu0 0
    %236 = vmatprep.subr.bf16.mxu0 0
    %237 = vmatpush2.bf16.xpose.msra.mxu0 0
    %238 = vmatprep.subr.bf16.mxu0 0
    %239 = vmatpush2.bf16.xpose.msra.mxu0 0
    %240 = vmatprep.mubr.bf16.mxu0 0
    %241 = vmatmul.mubr.bf16.gmra.mxu0 %v203
    %v242 = vpop.f32.mrf.mxu0
    %v243 = vadd.f32 0.0, %v242
    %v244 = vpop.f32.mrf.mxu0
    %v245 = vpop.f32.mrf.mxu0
    %v246 = vpop.f32.mrf.mxu0
    %247 = vdwg.mxu0
    %248 = vrot.lane.b32.xlu0 %v193, 64
    %v249 = vpop.permute.xlu0 %248
    %v251 = vsel %vm201, %v193, 0
    %v254 = vsel %vm201, %v249, 0
    %256 = vmatprep.subr.bf16.mxu0 0
    %257 = vmatpush1.bf16.xpose.msra.mxu0 0
    %258 = vmatprep.subr.bf16.mxu0 0
    %259 = vmatpush1.bf16.xpose.msra.mxu0 0
    %260 = vmatprep.subr.bf16.mxu0 0
    %261 = vmatpush1.bf16.xpose.msra.mxu0 0
    %262 = vmatprep.subr.bf16.mxu0 0
    %263 = vmatpush1.bf16.xpose.msra.mxu0 0
    %264 = vmatprep.subr.bf16.mxu0 0
    %265 = vmatpush1.bf16.xpose.msra.mxu0 0
    %266 = vmatprep.subr.bf16.mxu0 0
    %267 = vmatpush1.bf16.xpose.msra.mxu0 0
    %268 = vmatprep.subr.bf16.mxu0 0
    %269 = vmatpush1.bf16.xpose.msra.mxu0 0
    %270 = vmatprep.subr.bf16.mxu0 0
    %271 = vmatpush1.bf16.xpose.msra.mxu0 %v254
    %272 = vmatprep.subr.bf16.mxu0 0
    %273 = vmatpush2.bf16.xpose.msra.mxu0 0
    %274 = vmatprep.subr.bf16.mxu0 0
    %275 = vmatpush2.bf16.xpose.msra.mxu0 0
    %276 = vmatprep.subr.bf16.mxu0 0
    %277 = vmatpush2.bf16.xpose.msra.mxu0 0
    %278 = vmatprep.subr.bf16.mxu0 0
    %279 = vmatpush2.bf16.xpose.msra.mxu0 0
    %280 = vmatprep.subr.bf16.mxu0 0
    %281 = vmatpush2.bf16.xpose.msra.mxu0 0
    %282 = vmatprep.subr.bf16.mxu0 0
    %283 = vmatpush2.bf16.xpose.msra.mxu0 0
    %284 = vmatprep.subr.bf16.mxu0 0
    %285 = vmatpush2.bf16.xpose.msra.mxu0 0
    %286 = vmatprep.subr.bf16.mxu0 0
    %287 = vmatpush2.bf16.xpose.msra.mxu0 0
    %288 = vmatprep.mubr.bf16.mxu0 0
    %289 = vmatmul.mubr.bf16.gmra.mxu0 %v251
    %v290 = vpop.f32.mrf.mxu0
    %v291 = vadd.f32 0.0, %v290
    %v292 = vpop.f32.mrf.mxu0
    %v293 = vpop.f32.mrf.mxu0
    %v294 = vpop.f32.mrf.mxu0
    %295 = vdwg.mxu0
    %v296 = vsel %vm29, 1, 0
    %vm297 = vcmp.eq.s32.totalorder %v296, 1
    %v298 = vsel %vm297, %v243, -inf
    %v299 = vsel %vm297, %v291, -inf
    %vm300 = vcmask 64512
    %v301 = vsel %vm300, %v298, -inf
    %302 = vmax.xlane.f32.xlu0 %v301
    %v303 = vpop.xlane.xlu0 %302
    %v304 = vsel %vm300, %v299, -inf
    %305 = vmax.xlane.f32.xlu0 %v304
    %v306 = vpop.xlane.xlu0 %305
    %v307 = vsub.f32 %v298, %v303
    %v308 = vsub.f32 %v299, %v306
    %v309 = vmul.f32 %v307, 1.442695
    %v310 = vpow.pop %v309
    %v311 = vmul.f32 %v308, 1.442695
    %v312 = vpow.pop %v311
    %v313 = vsel %vm300, %v310, 0.0
    %314 = vadd.xlane.f32.xlu0 %v313
    %v315 = vpop.xlane.xlu0 %314
    %v316 = vsel %vm300, %v312, 0.0
    %317 = vadd.xlane.f32.xlu0 %v316
    %v318 = vpop.xlane.xlu0 %317
    %v319 = vrcp.pop %v315
    %v320 = vrcp.pop %v318
    %v321 = vmul.f32 %v310, %v319
    %v322 = vmul.f32 %v312, %v320
    %v323 = vpack.c.bf16 %v321, %v321
    %v324 = vpack.c.bf16 %v322, %v322
    %v326 = vsel %vm300, %v323, 0
    %vm328 = vcmask 1043456
    %v330 = vsel %vm328, %v197, 0
    %332 = vmatprep.subr.bf16.mxu0 0
    %333 = vmatpush1.bf16.msra.mxu0 0
    %334 = vmatprep.subr.bf16.mxu0 0
    %335 = vmatpush1.bf16.msra.mxu0 0
    %336 = vmatprep.subr.bf16.mxu0 0
    %337 = vmatpush1.bf16.msra.mxu0 0
    %338 = vmatprep.subr.bf16.mxu0 0
    %339 = vmatpush1.bf16.msra.mxu0 0
    %340 = vmatprep.subr.bf16.mxu0 0
    %341 = vmatpush1.bf16.msra.mxu0 0
    %342 = vmatprep.subr.bf16.mxu0 0
    %343 = vmatpush1.bf16.msra.mxu0 0
    %344 = vmatprep.subr.bf16.mxu0 0
    %345 = vmatpush1.bf16.msra.mxu0 0
    %346 = vmatprep.subr.bf16.mxu0 0
    %347 = vmatpush1.bf16.msra.mxu0 %v330
    %348 = vmatprep.subr.bf16.mxu0 0
    %349 = vmatpush2.bf16.msra.mxu0 0
    %350 = vmatprep.subr.bf16.mxu0 0
    %351 = vmatpush2.bf16.msra.mxu0 0
    %352 = vmatprep.subr.bf16.mxu0 0
    %353 = vmatpush2.bf16.msra.mxu0 0
    %354 = vmatprep.subr.bf16.mxu0 0
    %355 = vmatpush2.bf16.msra.mxu0 0
    %356 = vmatprep.subr.bf16.mxu0 0
    %357 = vmatpush2.bf16.msra.mxu0 0
    %358 = vmatprep.subr.bf16.mxu0 0
    %359 = vmatpush2.bf16.msra.mxu0 0
    %360 = vmatprep.subr.bf16.mxu0 0
    %361 = vmatpush2.bf16.msra.mxu0 0
    %362 = vmatprep.subr.bf16.mxu0 0
    %363 = vmatpush2.bf16.msra.mxu0 0
    %364 = vmatprep.mubr.bf16.mxu0 0
    %365 = vmatmul.mubr.bf16.gmra.mxu0 %v326
    %v366 = vpop.f32.mrf.mxu0
    %v367 = vadd.f32 0.0, %v366
    %v368 = vpop.f32.mrf.mxu0
    %v369 = vpop.f32.mrf.mxu0
    %v370 = vpop.f32.mrf.mxu0
    %371 = vdwg.mxu0
    %v373 = vsel %vm300, %v324, 0
    %v376 = vsel %vm328, %v198, 0
    %378 = vmatprep.subr.bf16.mxu0 0
    %379 = vmatpush1.bf16.msra.mxu0 0
    %380 = vmatprep.subr.bf16.mxu0 0
    %381 = vmatpush1.bf16.msra.mxu0 0
    %382 = vmatprep.subr.bf16.mxu0 0
    %383 = vmatpush1.bf16.msra.mxu0 0
    %384 = vmatprep.subr.bf16.mxu0 0
    %385 = vmatpush1.bf16.msra.mxu0 0
    %386 = vmatprep.subr.bf16.mxu0 0
    %387 = vmatpush1.bf16.msra.mxu0 0
    %388 = vmatprep.subr.bf16.mxu0 0
    %389 = vmatpush1.bf16.msra.mxu0 0
    %390 = vmatprep.subr.bf16.mxu0 0
    %391 = vmatpush1.bf16.msra.mxu0 0
    %392 = vmatprep.subr.bf16.mxu0 0
    %393 = vmatpush1.bf16.msra.mxu0 %v376
    %394 = vmatprep.subr.bf16.mxu0 0
    %395 = vmatpush2.bf16.msra.mxu0 0
    %396 = vmatprep.subr.bf16.mxu0 0
    %397 = vmatpush2.bf16.msra.mxu0 0
    %398 = vmatprep.subr.bf16.mxu0 0
    %399 = vmatpush2.bf16.msra.mxu0 0
    %400 = vmatprep.subr.bf16.mxu0 0
    %401 = vmatpush2.bf16.msra.mxu0 0
    %402 = vmatprep.subr.bf16.mxu0 0
    %403 = vmatpush2.bf16.msra.mxu0 0
    %404 = vmatprep.subr.bf16.mxu0 0
    %405 = vmatpush2.bf16.msra.mxu0 0
    %406 = vmatprep.subr.bf16.mxu0 0
    %407 = vmatpush2.bf16.msra.mxu0 0
    %408 = vmatprep.subr.bf16.mxu0 0
    %409 = vmatpush2.bf16.msra.mxu0 0
    %410 = vmatprep.mubr.bf16.mxu0 0
    %411 = vmatmul.mubr.bf16.gmra.mxu0 %v373
    %v412 = vpop.f32.mrf.mxu0
    %v413 = vadd.f32 0.0, %v412
    %v414 = vpop.f32.mrf.mxu0
    %v415 = vpop.f32.mrf.mxu0
    %v416 = vpop.f32.mrf.mxu0
    %417 = vdwg.mxu0
    %v418 = vpack.c.bf16 %v413, %v367
    %v419 = vld [vmem:[%s2] sm:$0xf]
    %420 = vrot.lane.b32.xlu0 %v192, 112
    %v421 = vpop.permute.xlu0 %420
    %422 = vrot.lane.b32.xlu0 %v192, 48
    %v423 = vpop.permute.xlu0 %422
    %v425 = vsel %vm201, %v421, 0
    %v428 = vsel %vm201, %v423, 0
    %430 = vmatprep.subr.bf16.mxu0 0
    %431 = vmatpush1.bf16.xpose.msra.mxu0 0
    %432 = vmatprep.subr.bf16.mxu0 0
    %433 = vmatpush1.bf16.xpose.msra.mxu0 0
    %434 = vmatprep.subr.bf16.mxu0 0
    %435 = vmatpush1.bf16.xpose.msra.mxu0 0
    %436 = vmatprep.subr.bf16.mxu0 0
    %437 = vmatpush1.bf16.xpose.msra.mxu0 0
    %438 = vmatprep.subr.bf16.mxu0 0
    %439 = vmatpush1.bf16.xpose.msra.mxu0 0
    %440 = vmatprep.subr.bf16.mxu0 0
    %441 = vmatpush1.bf16.xpose.msra.mxu0 0
    %442 = vmatprep.subr.bf16.mxu0 0
    %443 = vmatpush1.bf16.xpose.msra.mxu0 0
    %444 = vmatprep.subr.bf16.mxu0 0
    %445 = vmatpush1.bf16.xpose.msra.mxu0 %v428
    %446 = vmatprep.subr.bf16.mxu0 0
    %447 = vmatpush2.bf16.xpose.msra.mxu0 0
    %448 = vmatprep.subr.bf16.mxu0 0
    %449 = vmatpush2.bf16.xpose.msra.mxu0 0
    %450 = vmatprep.subr.bf16.mxu0 0
    %451 = vmatpush2.bf16.xpose.msra.mxu0 0
    %452 = vmatprep.subr.bf16.mxu0 0
    %453 = vmatpush2.bf16.xpose.msra.mxu0 0
    %454 = vmatprep.subr.bf16.mxu0 0
    %455 = vmatpush2.bf16.xpose.msra.mxu0 0
    %456 = vmatprep.subr.bf16.mxu0 0
    %457 = vmatpush2.bf16.xpose.msra.mxu0 0
    %458 = vmatprep.subr.bf16.mxu0 0
    %459 = vmatpush2.bf16.xpose.msra.mxu0 0
    %460 = vmatprep.subr.bf16.mxu0 0
    %461 = vmatpush2.bf16.xpose.msra.mxu0 0
    %462 = vmatprep.mubr.bf16.mxu0 0
    %463 = vmatmul.mubr.bf16.gmra.mxu0 %v425
    %v464 = vpop.f32.mrf.mxu0
    %v465 = vadd.f32 0.0, %v464
    %v466 = vpop.f32.mrf.mxu0
    %v467 = vpop.f32.mrf.mxu0
    %v468 = vpop.f32.mrf.mxu0
    %469 = vdwg.mxu0
    %470 = vrot.lane.b32.xlu0 %v193, 112
    %v471 = vpop.permute.xlu0 %470
    %472 = vrot.lane.b32.xlu0 %v193, 48
    %v473 = vpop.permute.xlu0 %472
    %v475 = vsel %vm201, %v471, 0
    %v478 = vsel %vm201, %v473, 0
    %480 = vmatprep.subr.bf16.mxu0 0
    %481 = vmatpush1.bf16.xpose.msra.mxu0 0
    %482 = vmatprep.subr.bf16.mxu0 0
    %483 = vmatpush1.bf16.xpose.msra.mxu0 0
    %484 = vmatprep.subr.bf16.mxu0 0
    %485 = vmatpush1.bf16.xpose.msra.mxu0 0
    %486 = vmatprep.subr.bf16.mxu0 0
    %487 = vmatpush1.bf16.xpose.msra.mxu0 0
    %488 = vmatprep.subr.bf16.mxu0 0
    %489 = vmatpush1.bf16.xpose.msra.mxu0 0
    %490 = vmatprep.subr.bf16.mxu0 0
    %491 = vmatpush1.bf16.xpose.msra.mxu0 0
    %492 = vmatprep.subr.bf16.mxu0 0
    %493 = vmatpush1.bf16.xpose.msra.mxu0 0
    %494 = vmatprep.subr.bf16.mxu0 0
    %495 = vmatpush1.bf16.xpose.msra.mxu0 %v478
    %496 = vmatprep.subr.bf16.mxu0 0
    %497 = vmatpush2.bf16.xpose.msra.mxu0 0
    %498 = vmatprep.subr.bf16.mxu0 0
    %499 = vmatpush2.bf16.xpose.msra.mxu0 0
    %500 = vmatprep.subr.bf16.mxu0 0
    %501 = vmatpush2.bf16.xpose.msra.mxu0 0
    %502 = vmatprep.subr.bf16.mxu0 0
    %503 = vmatpush2.bf16.xpose.msra.mxu0 0
    %504 = vmatprep.subr.bf16.mxu0 0
    %505 = vmatpush2.bf16.xpose.msra.mxu0 0
    %506 = vmatprep.subr.bf16.mxu0 0
    %507 = vmatpush2.bf16.xpose.msra.mxu0 0
    %508 = vmatprep.subr.bf16.mxu0 0
    %509 = vmatpush2.bf16.xpose.msra.mxu0 0
    %510 = vmatprep.subr.bf16.mxu0 0
    %511 = vmatpush2.bf16.xpose.msra.mxu0 0
    %512 = vmatprep.mubr.bf16.mxu0 0
    %513 = vmatmul.mubr.bf16.gmra.mxu0 %v475
    %v514 = vpop.f32.mrf.mxu0
    %v515 = vadd.f32 0.0, %v514
    %v516 = vpop.f32.mrf.mxu0
    %v517 = vpop.f32.mrf.mxu0
    %v518 = vpop.f32.mrf.mxu0
    %519 = vdwg.mxu0
    %v520 = vsel %vm297, %v465, -inf
    %v521 = vsel %vm297, %v515, -inf
    %v522 = vsel %vm300, %v520, -inf
    %523 = vmax.xlane.f32.xlu0 %v522
    %v524 = vpop.xlane.xlu0 %523
    %v525 = vsel %vm300, %v521, -inf
    %526 = vmax.xlane.f32.xlu0 %v525
    %v527 = vpop.xlane.xlu0 %526
    %v528 = vsub.f32 %v520, %v524
    %v529 = vsub.f32 %v521, %v527
    %v530 = vmul.f32 %v528, 1.442695
    %v531 = vpow.pop %v530
    %v532 = vmul.f32 %v529, 1.442695
    %v533 = vpow.pop %v532
    %v534 = vsel %vm300, %v531, 0.0
    %535 = vadd.xlane.f32.xlu0 %v534
    %v536 = vpop.xlane.xlu0 %535
    %v537 = vsel %vm300, %v533, 0.0
    %538 = vadd.xlane.f32.xlu0 %v537
    %v539 = vpop.xlane.xlu0 %538
    %v540 = vrcp.pop %v536
    %v541 = vrcp.pop %v539
    %v542 = vmul.f32 %v531, %v540
    %v543 = vmul.f32 %v533, %v541
    %v544 = vpack.c.bf16 %v542, %v542
    %v545 = vpack.c.bf16 %v543, %v543
    %546 = vrot.lane.b32.xlu0 %v197, 120
    %v547 = vpop.permute.xlu0 %546
    %v549 = vsel %vm300, %v544, 0
    %v552 = vsel %vm328, %v547, 0
    %554 = vmatprep.subr.bf16.mxu0 0
    %555 = vmatpush1.bf16.msra.mxu0 0
    %556 = vmatprep.subr.bf16.mxu0 0
    %557 = vmatpush1.bf16.msra.mxu0 0
    %558 = vmatprep.subr.bf16.mxu0 0
    %559 = vmatpush1.bf16.msra.mxu0 0
    %560 = vmatprep.subr.bf16.mxu0 0
    %561 = vmatpush1.bf16.msra.mxu0 0
    %562 = vmatprep.subr.bf16.mxu0 0
    %563 = vmatpush1.bf16.msra.mxu0 0
    %564 = vmatprep.subr.bf16.mxu0 0
    %565 = vmatpush1.bf16.msra.mxu0 0
    %566 = vmatprep.subr.bf16.mxu0 0
    %567 = vmatpush1.bf16.msra.mxu0 0
    %568 = vmatprep.subr.bf16.mxu0 0
    %569 = vmatpush1.bf16.msra.mxu0 %v552
    %570 = vmatprep.subr.bf16.mxu0 0
    %571 = vmatpush2.bf16.msra.mxu0 0
    %572 = vmatprep.subr.bf16.mxu0 0
    %573 = vmatpush2.bf16.msra.mxu0 0
    %574 = vmatprep.subr.bf16.mxu0 0
    %575 = vmatpush2.bf16.msra.mxu0 0
    %576 = vmatprep.subr.bf16.mxu0 0
    %577 = vmatpush2.bf16.msra.mxu0 0
    %578 = vmatprep.subr.bf16.mxu0 0
    %579 = vmatpush2.bf16.msra.mxu0 0
    %580 = vmatprep.subr.bf16.mxu0 0
    %581 = vmatpush2.bf16.msra.mxu0 0
    %582 = vmatprep.subr.bf16.mxu0 0
    %583 = vmatpush2.bf16.msra.mxu0 0
    %584 = vmatprep.subr.bf16.mxu0 0
    %585 = vmatpush2.bf16.msra.mxu0 0
    %586 = vmatprep.mubr.bf16.mxu0 0
    %587 = vmatmul.mubr.bf16.gmra.mxu0 %v549
    %v588 = vpop.f32.mrf.mxu0
    %v589 = vadd.f32 0.0, %v588
    %v590 = vpop.f32.mrf.mxu0
    %v591 = vpop.f32.mrf.mxu0
    %v592 = vpop.f32.mrf.mxu0
    %593 = vdwg.mxu0
    %594 = vrot.lane.b32.xlu0 %v198, 120
    %v595 = vpop.permute.xlu0 %594
    %v597 = vsel %vm300, %v545, 0
    %v600 = vsel %vm328, %v595, 0
    %602 = vmatprep.subr.bf16.mxu0 0
    %603 = vmatpush1.bf16.msra.mxu0 0
    %604 = vmatprep.subr.bf16.mxu0 0
    %605 = vmatpush1.bf16.msra.mxu0 0
    %606 = vmatprep.subr.bf16.mxu0 0
    %607 = vmatpush1.bf16.msra.mxu0 0
    %608 = vmatprep.subr.bf16.mxu0 0
    %609 = vmatpush1.bf16.msra.mxu0 0
    %610 = vmatprep.subr.bf16.mxu0 0
    %611 = vmatpush1.bf16.msra.mxu0 0
    %612 = vmatprep.subr.bf16.mxu0 0
    %613 = vmatpush1.bf16.msra.mxu0 0
    %614 = vmatprep.subr.bf16.mxu0 0
    %615 = vmatpush1.bf16.msra.mxu0 0
    %616 = vmatprep.subr.bf16.mxu0 0
    %617 = vmatpush1.bf16.msra.mxu0 %v600
    %618 = vmatprep.subr.bf16.mxu0 0
    %619 = vmatpush2.bf16.msra.mxu0 0
    %620 = vmatprep.subr.bf16.mxu0 0
    %621 = vmatpush2.bf16.msra.mxu0 0
    %622 = vmatprep.subr.bf16.mxu0 0
    %623 = vmatpush2.bf16.msra.mxu0 0
    %624 = vmatprep.subr.bf16.mxu0 0
    %625 = vmatpush2.bf16.msra.mxu0 0
    %626 = vmatprep.subr.bf16.mxu0 0
    %627 = vmatpush2.bf16.msra.mxu0 0
    %628 = vmatprep.subr.bf16.mxu0 0
    %629 = vmatpush2.bf16.msra.mxu0 0
    %630 = vmatprep.subr.bf16.mxu0 0
    %631 = vmatpush2.bf16.msra.mxu0 0
    %632 = vmatprep.subr.bf16.mxu0 0
    %633 = vmatpush2.bf16.msra.mxu0 0
    %634 = vmatprep.mubr.bf16.mxu0 0
    %635 = vmatmul.mubr.bf16.gmra.mxu0 %v597
    %v636 = vpop.f32.mrf.mxu0
    %v637 = vadd.f32 0.0, %v636
    %v638 = vpop.f32.mrf.mxu0
    %v639 = vpop.f32.mrf.mxu0
    %v640 = vpop.f32.mrf.mxu0
    %641 = vdwg.mxu0
    %v642 = vpack.c.bf16 %v637, %v589
    %v643 = vld [vmem:[%s2 + $0x4] sm:$0xf]
    %v645 = vsel %vm300, %v642, 0
    %v648 = vsel %vm328, %v643, 0
    %650 = vmatprep.subr.bf16.mxu0 0
    %651 = vmatpush1.bf16.msra.mxu0 0
    %652 = vmatprep.subr.bf16.mxu0 0
    %653 = vmatpush1.bf16.msra.mxu0 0
    %654 = vmatprep.subr.bf16.mxu0 0
    %655 = vmatpush1.bf16.msra.mxu0 0
    %656 = vmatprep.subr.bf16.mxu0 0
    %657 = vmatpush1.bf16.msra.mxu0 0
    %658 = vmatprep.subr.bf16.mxu0 0
    %659 = vmatpush1.bf16.msra.mxu0 0
    %660 = vmatprep.subr.bf16.mxu0 0
    %661 = vmatpush1.bf16.msra.mxu0 0
    %662 = vmatprep.subr.bf16.mxu0 0
    %663 = vmatpush1.bf16.msra.mxu0 0
    %664 = vmatprep.subr.bf16.mxu0 0
    %665 = vmatpush1.bf16.msra.mxu0 %v648
    %666 = vmatprep.subr.bf16.mxu0 0
    %667 = vmatpush2.bf16.msra.mxu0 0
    %668 = vmatprep.subr.bf16.mxu0 0
    %669 = vmatpush2.bf16.msra.mxu0 0
    %670 = vmatprep.subr.bf16.mxu0 0
    %671 = vmatpush2.bf16.msra.mxu0 0
    %672 = vmatprep.subr.bf16.mxu0 0
    %673 = vmatpush2.bf16.msra.mxu0 0
    %674 = vmatprep.subr.bf16.mxu0 0
    %675 = vmatpush2.bf16.msra.mxu0 0
    %676 = vmatprep.subr.bf16.mxu0 0
    %677 = vmatpush2.bf16.msra.mxu0 0
    %678 = vmatprep.subr.bf16.mxu0 0
    %679 = vmatpush2.bf16.msra.mxu0 0
    %680 = vmatprep.subr.bf16.mxu0 0
    %681 = vmatpush2.bf16.msra.mxu0 0
    %682 = vmatprep.mubr.bf16.mxu0 0
    %683 = vmatmul.mubr.bf16.gmra.mxu0 %v645
    %v684 = vpop.f32.mrf.mxu0
    %v685 = vadd.f32 0.0, %v684
    %v686 = vpop.f32.mrf.mxu0
    %v687 = vpop.f32.mrf.mxu0
    %v688 = vadd.f32 0.0, %v687
    %v689 = vpop.f32.mrf.mxu0
    %690 = vdwg.mxu0
    %v692 = vsel %vm300, %v418, 0
    %v695 = vsel %vm328, %v419, 0
    %697 = vmatprep.subr.bf16.mxu0 0
    %698 = vmatpush1.bf16.msra.mxu0 0
    %699 = vmatprep.subr.bf16.mxu0 0
    %700 = vmatpush1.bf16.msra.mxu0 0
    %701 = vmatprep.subr.bf16.mxu0 0
    %702 = vmatpush1.bf16.msra.mxu0 0
    %703 = vmatprep.subr.bf16.mxu0 0
    %704 = vmatpush1.bf16.msra.mxu0 0
    %705 = vmatprep.subr.bf16.mxu0 0
    %706 = vmatpush1.bf16.msra.mxu0 0
    %707 = vmatprep.subr.bf16.mxu0 0
    %708 = vmatpush1.bf16.msra.mxu0 0
    %709 = vmatprep.subr.bf16.mxu0 0
    %710 = vmatpush1.bf16.msra.mxu0 0
    %711 = vmatprep.subr.bf16.mxu0 0
    %712 = vmatpush1.bf16.msra.mxu0 %v695
    %713 = vmatprep.subr.bf16.mxu0 0
    %714 = vmatpush2.bf16.msra.mxu0 0
    %715 = vmatprep.subr.bf16.mxu0 0
    %716 = vmatpush2.bf16.msra.mxu0 0
    %717 = vmatprep.subr.bf16.mxu0 0
    %718 = vmatpush2.bf16.msra.mxu0 0
    %719 = vmatprep.subr.bf16.mxu0 0
    %720 = vmatpush2.bf16.msra.mxu0 0
    %721 = vmatprep.subr.bf16.mxu0 0
    %722 = vmatpush2.bf16.msra.mxu0 0
    %723 = vmatprep.subr.bf16.mxu0 0
    %724 = vmatpush2.bf16.msra.mxu0 0
    %725 = vmatprep.subr.bf16.mxu0 0
    %726 = vmatpush2.bf16.msra.mxu0 0
    %727 = vmatprep.subr.bf16.mxu0 0
    %728 = vmatpush2.bf16.msra.mxu0 0
    %729 = vmatprep.mubr.bf16.mxu0 0
    %730 = vmatmul.mubr.bf16.gmra.mxu0 %v692
    %v731 = vpop.f32.mrf.mxu0
    %v732 = vadd.f32 %v685, %v731
    %v733 = vpop.f32.mrf.mxu0
    %v734 = vpop.f32.mrf.mxu0
    %v735 = vadd.f32 %v688, %v734
    %v736 = vpop.f32.mrf.mxu0
    %737 = vdwg.mxu0
    %738 = vrot.lane.b32.xlu0 %v192, 96
    %v739 = vpop.permute.xlu0 %738
    %740 = vrot.lane.b32.xlu0 %v192, 32
    %v741 = vpop.permute.xlu0 %740
    %v743 = vsel %vm201, %v739, 0
    %v746 = vsel %vm201, %v741, 0
    %748 = vmatprep.subr.bf16.mxu0 0
    %749 = vmatpush1.bf16.xpose.msra.mxu0 0
    %750 = vmatprep.subr.bf16.mxu0 0
    %751 = vmatpush1.bf16.xpose.msra.mxu0 0
    %752 = vmatprep.subr.bf16.mxu0 0
    %753 = vmatpush1.bf16.xpose.msra.mxu0 0
    %754 = vmatprep.subr.bf16.mxu0 0
    %755 = vmatpush1.bf16.xpose.msra.mxu0 0
    %756 = vmatprep.subr.bf16.mxu0 0
    %757 = vmatpush1.bf16.xpose.msra.mxu0 0
    %758 = vmatprep.subr.bf16.mxu0 0
    %759 = vmatpush1.bf16.xpose.msra.mxu0 0
    %760 = vmatprep.subr.bf16.mxu0 0
    %761 = vmatpush1.bf16.xpose.msra.mxu0 0
    %762 = vmatprep.subr.bf16.mxu0 0
    %763 = vmatpush1.bf16.xpose.msra.mxu0 %v746
    %764 = vmatprep.subr.bf16.mxu0 0
    %765 = vmatpush2.bf16.xpose.msra.mxu0 0
    %766 = vmatprep.subr.bf16.mxu0 0
    %767 = vmatpush2.bf16.xpose.msra.mxu0 0
    %768 = vmatprep.subr.bf16.mxu0 0
    %769 = vmatpush2.bf16.xpose.msra.mxu0 0
    %770 = vmatprep.subr.bf16.mxu0 0
    %771 = vmatpush2.bf16.xpose.msra.mxu0 0
    %772 = vmatprep.subr.bf16.mxu0 0
    %773 = vmatpush2.bf16.xpose.msra.mxu0 0
    %774 = vmatprep.subr.bf16.mxu0 0
    %775 = vmatpush2.bf16.xpose.msra.mxu0 0
    %776 = vmatprep.subr.bf16.mxu0 0
    %777 = vmatpush2.bf16.xpose.msra.mxu0 0
    %778 = vmatprep.subr.bf16.mxu0 0
    %779 = vmatpush2.bf16.xpose.msra.mxu0 0
    %780 = vmatprep.mubr.bf16.mxu0 0
    %781 = vmatmul.mubr.bf16.gmra.mxu0 %v743
    %v782 = vpop.f32.mrf.mxu0
    %v783 = vadd.f32 0.0, %v782
    %v784 = vpop.f32.mrf.mxu0
    %v785 = vpop.f32.mrf.mxu0
    %v786 = vpop.f32.mrf.mxu0
    %787 = vdwg.mxu0
    %788 = vrot.lane.b32.xlu0 %v193, 96
    %v789 = vpop.permute.xlu0 %788
    %790 = vrot.lane.b32.xlu0 %v193, 32
    %v791 = vpop.permute.xlu0 %790
    %v793 = vsel %vm201, %v789, 0
    %v796 = vsel %vm201, %v791, 0
    %798 = vmatprep.subr.bf16.mxu0 0
    %799 = vmatpush1.bf16.xpose.msra.mxu0 0
    %800 = vmatprep.subr.bf16.mxu0 0
    %801 = vmatpush1.bf16.xpose.msra.mxu0 0
    %802 = vmatprep.subr.bf16.mxu0 0
    %803 = vmatpush1.bf16.xpose.msra.mxu0 0
    %804 = vmatprep.subr.bf16.mxu0 0
    %805 = vmatpush1.bf16.xpose.msra.mxu0 0
    %806 = vmatprep.subr.bf16.mxu0 0
    %807 = vmatpush1.bf16.xpose.msra.mxu0 0
    %808 = vmatprep.subr.bf16.mxu0 0
    %809 = vmatpush1.bf16.xpose.msra.mxu0 0
    %810 = vmatprep.subr.bf16.mxu0 0
    %811 = vmatpush1.bf16.xpose.msra.mxu0 0
    %812 = vmatprep.subr.bf16.mxu0 0
    %813 = vmatpush1.bf16.xpose.msra.mxu0 %v796
    %814 = vmatprep.subr.bf16.mxu0 0
    %815 = vmatpush2.bf16.xpose.msra.mxu0 0
    %816 = vmatprep.subr.bf16.mxu0 0
    %817 = vmatpush2.bf16.xpose.msra.mxu0 0
    %818 = vmatprep.subr.bf16.mxu0 0
    %819 = vmatpush2.bf16.xpose.msra.mxu0 0
    %820 = vmatprep.subr.bf16.mxu0 0
    %821 = vmatpush2.bf16.xpose.msra.mxu0 0
    %822 = vmatprep.subr.bf16.mxu0 0
    %823 = vmatpush2.bf16.xpose.msra.mxu0 0
    %824 = vmatprep.subr.bf16.mxu0 0
    %825 = vmatpush2.bf16.xpose.msra.mxu0 0
    %826 = vmatprep.subr.bf16.mxu0 0
    %827 = vmatpush2.bf16.xpose.msra.mxu0 0
    %828 = vmatprep.subr.bf16.mxu0 0
    %829 = vmatpush2.bf16.xpose.msra.mxu0 0
    %830 = vmatprep.mubr.bf16.mxu0 0
    %831 = vmatmul.mubr.bf16.gmra.mxu0 %v793
    %v832 = vpop.f32.mrf.mxu0
    %v833 = vadd.f32 0.0, %v832
    %v834 = vpop.f32.mrf.mxu0
    %v835 = vpop.f32.mrf.mxu0
    %v836 = vpop.f32.mrf.mxu0
    %837 = vdwg.mxu0
    %v838 = vsel %vm297, %v783, -inf
    %v839 = vsel %vm297, %v833, -inf
    %v840 = vsel %vm300, %v838, -inf
    %841 = vmax.xlane.f32.xlu0 %v840
    %v842 = vpop.xlane.xlu0 %841
    %v843 = vsel %vm300, %v839, -inf
    %844 = vmax.xlane.f32.xlu0 %v843
    %v845 = vpop.xlane.xlu0 %844
    %v846 = vsub.f32 %v838, %v842
    %v847 = vsub.f32 %v839, %v845
    %v848 = vmul.f32 %v846, 1.442695
    %v849 = vpow.pop %v848
    %v850 = vmul.f32 %v847, 1.442695
    %v851 = vpow.pop %v850
    %v852 = vsel %vm300, %v849, 0.0
    %853 = vadd.xlane.f32.xlu0 %v852
    %v854 = vpop.xlane.xlu0 %853
    %v855 = vsel %vm300, %v851, 0.0
    %856 = vadd.xlane.f32.xlu0 %v855
    %v857 = vpop.xlane.xlu0 %856
    %v858 = vrcp.pop %v854
    %v859 = vrcp.pop %v857
    %v860 = vmul.f32 %v849, %v858
    %v861 = vmul.f32 %v851, %v859
    %v862 = vpack.c.bf16 %v860, %v860
    %v863 = vpack.c.bf16 %v861, %v861
    %864 = vrot.lane.b32.xlu0 %v197, 112
    %v865 = vpop.permute.xlu0 %864
    %v867 = vsel %vm300, %v862, 0
    %v870 = vsel %vm328, %v865, 0
    %872 = vmatprep.subr.bf16.mxu0 0
    %873 = vmatpush1.bf16.msra.mxu0 0
    %874 = vmatprep.subr.bf16.mxu0 0
    %875 = vmatpush1.bf16.msra.mxu0 0
    %876 = vmatprep.subr.bf16.mxu0 0
    %877 = vmatpush1.bf16.msra.mxu0 0
    %878 = vmatprep.subr.bf16.mxu0 0
    %879 = vmatpush1.bf16.msra.mxu0 0
    %880 = vmatprep.subr.bf16.mxu0 0
    %881 = vmatpush1.bf16.msra.mxu0 0
    %882 = vmatprep.subr.bf16.mxu0 0
    %883 = vmatpush1.bf16.msra.mxu0 0
    %884 = vmatprep.subr.bf16.mxu0 0
    %885 = vmatpush1.bf16.msra.mxu0 0
    %886 = vmatprep.subr.bf16.mxu0 0
    %887 = vmatpush1.bf16.msra.mxu0 %v870
    %888 = vmatprep.subr.bf16.mxu0 0
    %889 = vmatpush2.bf16.msra.mxu0 0
    %890 = vmatprep.subr.bf16.mxu0 0
    %891 = vmatpush2.bf16.msra.mxu0 0
    %892 = vmatprep.subr.bf16.mxu0 0
    %893 = vmatpush2.bf16.msra.mxu0 0
    %894 = vmatprep.subr.bf16.mxu0 0
    %895 = vmatpush2.bf16.msra.mxu0 0
    %896 = vmatprep.subr.bf16.mxu0 0
    %897 = vmatpush2.bf16.msra.mxu0 0
    %898 = vmatprep.subr.bf16.mxu0 0
    %899 = vmatpush2.bf16.msra.mxu0 0
    %900 = vmatprep.subr.bf16.mxu0 0
    %901 = vmatpush2.bf16.msra.mxu0 0
    %902 = vmatprep.subr.bf16.mxu0 0
    %903 = vmatpush2.bf16.msra.mxu0 0
    %904 = vmatprep.mubr.bf16.mxu0 0
    %905 = vmatmul.mubr.bf16.gmra.mxu0 %v867
    %v906 = vpop.f32.mrf.mxu0
    %v907 = vadd.f32 0.0, %v906
    %v908 = vpop.f32.mrf.mxu0
    %v909 = vpop.f32.mrf.mxu0
    %v910 = vpop.f32.mrf.mxu0
    %911 = vdwg.mxu0
    %912 = vrot.lane.b32.xlu0 %v198, 112
    %v913 = vpop.permute.xlu0 %912
    %v915 = vsel %vm300, %v863, 0
    %v918 = vsel %vm328, %v913, 0
    %920 = vmatprep.subr.bf16.mxu0 0
    %921 = vmatpush1.bf16.msra.mxu0 0
    %922 = vmatprep.subr.bf16.mxu0 0
    %923 = vmatpush1.bf16.msra.mxu0 0
    %924 = vmatprep.subr.bf16.mxu0 0
    %925 = vmatpush1.bf16.msra.mxu0 0
    %926 = vmatprep.subr.bf16.mxu0 0
    %927 = vmatpush1.bf16.msra.mxu0 0
    %928 = vmatprep.subr.bf16.mxu0 0
    %929 = vmatpush1.bf16.msra.mxu0 0
    %930 = vmatprep.subr.bf16.mxu0 0
    %931 = vmatpush1.bf16.msra.mxu0 0
    %932 = vmatprep.subr.bf16.mxu0 0
    %933 = vmatpush1.bf16.msra.mxu0 0
    %934 = vmatprep.subr.bf16.mxu0 0
    %935 = vmatpush1.bf16.msra.mxu0 %v918
    %936 = vmatprep.subr.bf16.mxu0 0
    %937 = vmatpush2.bf16.msra.mxu0 0
    %938 = vmatprep.subr.bf16.mxu0 0
    %939 = vmatpush2.bf16.msra.mxu0 0
    %940 = vmatprep.subr.bf16.mxu0 0
    %941 = vmatpush2.bf16.msra.mxu0 0
    %942 = vmatprep.subr.bf16.mxu0 0
    %943 = vmatpush2.bf16.msra.mxu0 0
    %944 = vmatprep.subr.bf16.mxu0 0
    %945 = vmatpush2.bf16.msra.mxu0 0
    %946 = vmatprep.subr.bf16.mxu0 0
    %947 = vmatpush2.bf16.msra.mxu0 0
    %948 = vmatprep.subr.bf16.mxu0 0
    %949 = vmatpush2.bf16.msra.mxu0 0
    %950 = vmatprep.subr.bf16.mxu0 0
    %951 = vmatpush2.bf16.msra.mxu0 0
    %952 = vmatprep.mubr.bf16.mxu0 0
    %953 = vmatmul.mubr.bf16.gmra.mxu0 %v915
    %v954 = vpop.f32.mrf.mxu0
    %v955 = vadd.f32 0.0, %v954
    %v956 = vpop.f32.mrf.mxu0
    %v957 = vpop.f32.mrf.mxu0
    %v958 = vpop.f32.mrf.mxu0
    %959 = vdwg.mxu0
    %v960 = vpack.c.bf16 %v955, %v907
    %v961 = vld [vmem:[%s2 + $0x8] sm:$0xf]
    %v963 = vsel %vm300, %v960, 0
    %v966 = vsel %vm328, %v961, 0
    %968 = vmatprep.subr.bf16.mxu0 0
    %969 = vmatpush1.bf16.msra.mxu0 0
    %970 = vmatprep.subr.bf16.mxu0 0
    %971 = vmatpush1.bf16.msra.mxu0 0
    %972 = vmatprep.subr.bf16.mxu0 0
    %973 = vmatpush1.bf16.msra.mxu0 0
    %974 = vmatprep.subr.bf16.mxu0 0
    %975 = vmatpush1.bf16.msra.mxu0 0
    %976 = vmatprep.subr.bf16.mxu0 0
    %977 = vmatpush1.bf16.msra.mxu0 0
    %978 = vmatprep.subr.bf16.mxu0 0
    %979 = vmatpush1.bf16.msra.mxu0 0
    %980 = vmatprep.subr.bf16.mxu0 0
    %981 = vmatpush1.bf16.msra.mxu0 0
    %982 = vmatprep.subr.bf16.mxu0 0
    %983 = vmatpush1.bf16.msra.mxu0 %v966
    %984 = vmatprep.subr.bf16.mxu0 0
    %985 = vmatpush2.bf16.msra.mxu0 0
    %986 = vmatprep.subr.bf16.mxu0 0
    %987 = vmatpush2.bf16.msra.mxu0 0
    %988 = vmatprep.subr.bf16.mxu0 0
    %989 = vmatpush2.bf16.msra.mxu0 0
    %990 = vmatprep.subr.bf16.mxu0 0
    %991 = vmatpush2.bf16.msra.mxu0 0
    %992 = vmatprep.subr.bf16.mxu0 0
    %993 = vmatpush2.bf16.msra.mxu0 0
    %994 = vmatprep.subr.bf16.mxu0 0
    %995 = vmatpush2.bf16.msra.mxu0 0
    %996 = vmatprep.subr.bf16.mxu0 0
    %997 = vmatpush2.bf16.msra.mxu0 0
    %998 = vmatprep.subr.bf16.mxu0 0
    %999 = vmatpush2.bf16.msra.mxu0 0
    %1000 = vmatprep.mubr.bf16.mxu0 0
    %1001 = vmatmul.mubr.bf16.gmra.mxu0 %v963
    %v1002 = vpop.f32.mrf.mxu0
    %v1003 = vadd.f32 0.0, %v1002
    %v1004 = vpop.f32.mrf.mxu0
    %v1005 = vpop.f32.mrf.mxu0
    %v1006 = vadd.f32 0.0, %v1005
    %v1007 = vpop.f32.mrf.mxu0
    %1008 = vdwg.mxu0
    %v1009 = vadd.f32 %v732, %v1003
    %v1010 = vadd.f32 %v735, %v1006
    %1011 = vrot.lane.b32.xlu0 %v192, 80
    %v1012 = vpop.permute.xlu0 %1011
    %1013 = vrot.lane.b32.xlu0 %v192, 16
    %v1014 = vpop.permute.xlu0 %1013
    %v1016 = vsel %vm201, %v1012, 0
    %v1019 = vsel %vm201, %v1014, 0
    %1021 = vmatprep.subr.bf16.mxu0 0
    %1022 = vmatpush1.bf16.xpose.msra.mxu0 0
    %1023 = vmatprep.subr.bf16.mxu0 0
    %1024 = vmatpush1.bf16.xpose.msra.mxu0 0
    %1025 = vmatprep.subr.bf16.mxu0 0
    %1026 = vmatpush1.bf16.xpose.msra.mxu0 0
    %1027 = vmatprep.subr.bf16.mxu0 0
    %1028 = vmatpush1.bf16.xpose.msra.mxu0 0
    %1029 = vmatprep.subr.bf16.mxu0 0
    %1030 = vmatpush1.bf16.xpose.msra.mxu0 0
    %1031 = vmatprep.subr.bf16.mxu0 0
    %1032 = vmatpush1.bf16.xpose.msra.mxu0 0
    %1033 = vmatprep.subr.bf16.mxu0 0
    %1034 = vmatpush1.bf16.xpose.msra.mxu0 0
    %1035 = vmatprep.subr.bf16.mxu0 0
    %1036 = vmatpush1.bf16.xpose.msra.mxu0 %v1019
    %1037 = vmatprep.subr.bf16.mxu0 0
    %1038 = vmatpush2.bf16.xpose.msra.mxu0 0
    %1039 = vmatprep.subr.bf16.mxu0 0
    %1040 = vmatpush2.bf16.xpose.msra.mxu0 0
    %1041 = vmatprep.subr.bf16.mxu0 0
    %1042 = vmatpush2.bf16.xpose.msra.mxu0 0
    %1043 = vmatprep.subr.bf16.mxu0 0
    %1044 = vmatpush2.bf16.xpose.msra.mxu0 0
    %1045 = vmatprep.subr.bf16.mxu0 0
    %1046 = vmatpush2.bf16.xpose.msra.mxu0 0
    %1047 = vmatprep.subr.bf16.mxu0 0
    %1048 = vmatpush2.bf16.xpose.msra.mxu0 0
    %1049 = vmatprep.subr.bf16.mxu0 0
    %1050 = vmatpush2.bf16.xpose.msra.mxu0 0
    %1051 = vmatprep.subr.bf16.mxu0 0
    %1052 = vmatpush2.bf16.xpose.msra.mxu0 0
    %1053 = vmatprep.mubr.bf16.mxu0 0
    %1054 = vmatmul.mubr.bf16.gmra.mxu0 %v1016
    %v1055 = vpop.f32.mrf.mxu0
    %v1056 = vadd.f32 0.0, %v1055
    %v1057 = vpop.f32.mrf.mxu0
    %v1058 = vpop.f32.mrf.mxu0
    %v1059 = vpop.f32.mrf.mxu0
    %1060 = vdwg.mxu0
    %1061 = vrot.lane.b32.xlu0 %v193, 80
    %v1062 = vpop.permute.xlu0 %1061
    %1063 = vrot.lane.b32.xlu0 %v193, 16
    %v1064 = vpop.permute.xlu0 %1063
    %v1066 = vsel %vm201, %v1062, 0
    %v1069 = vsel %vm201, %v1064, 0
    %1071 = vmatprep.subr.bf16.mxu0 0
    %1072 = vmatpush1.bf16.xpose.msra.mxu0 0
    %1073 = vmatprep.subr.bf16.mxu0 0
    %1074 = vmatpush1.bf16.xpose.msra.mxu0 0
    %1075 = vmatprep.subr.bf16.mxu0 0
    %1076 = vmatpush1.bf16.xpose.msra.mxu0 0
    %1077 = vmatprep.subr.bf16.mxu0 0
    %1078 = vmatpush1.bf16.xpose.msra.mxu0 0
    %1079 = vmatprep.subr.bf16.mxu0 0
    %1080 = vmatpush1.bf16.xpose.msra.mxu0 0
    %1081 = vmatprep.subr.bf16.mxu0 0
    %1082 = vmatpush1.bf16.xpose.msra.mxu0 0
    %1083 = vmatprep.subr.bf16.mxu0 0
    %1084 = vmatpush1.bf16.xpose.msra.mxu0 0
    %1085 = vmatprep.subr.bf16.mxu0 0
    %1086 = vmatpush1.bf16.xpose.msra.mxu0 %v1069
    %1087 = vmatprep.subr.bf16.mxu0 0
    %1088 = vmatpush2.bf16.xpose.msra.mxu0 0
    %1089 = vmatprep.subr.bf16.mxu0 0
    %1090 = vmatpush2.bf16.xpose.msra.mxu0 0
    %1091 = vmatprep.subr.bf16.mxu0 0
    %1092 = vmatpush2.bf16.xpose.msra.mxu0 0
    %1093 = vmatprep.subr.bf16.mxu0 0
    %1094 = vmatpush2.bf16.xpose.msra.mxu0 0
    %1095 = vmatprep.subr.bf16.mxu0 0
    %1096 = vmatpush2.bf16.xpose.msra.mxu0 0
    %1097 = vmatprep.subr.bf16.mxu0 0
    %1098 = vmatpush2.bf16.xpose.msra.mxu0 0
    %1099 = vmatprep.subr.bf16.mxu0 0
    %1100 = vmatpush2.bf16.xpose.msra.mxu0 0
    %1101 = vmatprep.subr.bf16.mxu0 0
    %1102 = vmatpush2.bf16.xpose.msra.mxu0 0
    %1103 = vmatprep.mubr.bf16.mxu0 0
    %1104 = vmatmul.mubr.bf16.gmra.mxu0 %v1066
    %v1105 = vpop.f32.mrf.mxu0
    %v1106 = vadd.f32 0.0, %v1105
    %v1107 = vpop.f32.mrf.mxu0
    %v1108 = vpop.f32.mrf.mxu0
    %v1109 = vpop.f32.mrf.mxu0
    %1110 = vdwg.mxu0
    %v1111 = vsel %vm297, %v1056, -inf
    %v1112 = vsel %vm297, %v1106, -inf
    %v1113 = vsel %vm300, %v1111, -inf
    %1114 = vmax.xlane.f32.xlu0 %v1113
    %v1115 = vpop.xlane.xlu0 %1114
    %v1116 = vsel %vm300, %v1112, -inf
    %1117 = vmax.xlane.f32.xlu0 %v1116
    %v1118 = vpop.xlane.xlu0 %1117
    %v1119 = vsub.f32 %v1111, %v1115
    %v1120 = vsub.f32 %v1112, %v1118
    %v1121 = vmul.f32 %v1119, 1.442695
    %v1122 = vpow.pop %v1121
    %v1123 = vmul.f32 %v1120, 1.442695
    %v1124 = vpow.pop %v1123
    %v1125 = vsel %vm300, %v1122, 0.0
    %1126 = vadd.xlane.f32.xlu0 %v1125
    %v1127 = vpop.xlane.xlu0 %1126
    %v1128 = vsel %vm300, %v1124, 0.0
    %1129 = vadd.xlane.f32.xlu0 %v1128
    %v1130 = vpop.xlane.xlu0 %1129
    %v1131 = vrcp.pop %v1127
    %v1132 = vrcp.pop %v1130
    %v1133 = vmul.f32 %v1122, %v1131
    %v1134 = vmul.f32 %v1124, %v1132
    %v1135 = vpack.c.bf16 %v1133, %v1133
    %v1136 = vpack.c.bf16 %v1134, %v1134
    %1137 = vrot.lane.b32.xlu0 %v197, 104
    %v1138 = vpop.permute.xlu0 %1137
    %v1140 = vsel %vm300, %v1135, 0
    %v1143 = vsel %vm328, %v1138, 0
    %1145 = vmatprep.subr.bf16.mxu0 0
    %1146 = vmatpush1.bf16.msra.mxu0 0
    %1147 = vmatprep.subr.bf16.mxu0 0
    %1148 = vmatpush1.bf16.msra.mxu0 0
    %1149 = vmatprep.subr.bf16.mxu0 0
    %1150 = vmatpush1.bf16.msra.mxu0 0
    %1151 = vmatprep.subr.bf16.mxu0 0
    %1152 = vmatpush1.bf16.msra.mxu0 0
    %1153 = vmatprep.subr.bf16.mxu0 0
    %1154 = vmatpush1.bf16.msra.mxu0 0
    %1155 = vmatprep.subr.bf16.mxu0 0
    %1156 = vmatpush1.bf16.msra.mxu0 0
    %1157 = vmatprep.subr.bf16.mxu0 0
    %1158 = vmatpush1.bf16.msra.mxu0 0
    %1159 = vmatprep.subr.bf16.mxu0 0
    %1160 = vmatpush1.bf16.msra.mxu0 %v1143
    %1161 = vmatprep.subr.bf16.mxu0 0
    %1162 = vmatpush2.bf16.msra.mxu0 0
    %1163 = vmatprep.subr.bf16.mxu0 0
    %1164 = vmatpush2.bf16.msra.mxu0 0
    %1165 = vmatprep.subr.bf16.mxu0 0
    %1166 = vmatpush2.bf16.msra.mxu0 0
    %1167 = vmatprep.subr.bf16.mxu0 0
    %1168 = vmatpush2.bf16.msra.mxu0 0
    %1169 = vmatprep.subr.bf16.mxu0 0
    %1170 = vmatpush2.bf16.msra.mxu0 0
    %1171 = vmatprep.subr.bf16.mxu0 0
    %1172 = vmatpush2.bf16.msra.mxu0 0
    %1173 = vmatprep.subr.bf16.mxu0 0
    %1174 = vmatpush2.bf16.msra.mxu0 0
    %1175 = vmatprep.subr.bf16.mxu0 0
    %1176 = vmatpush2.bf16.msra.mxu0 0
    %1177 = vmatprep.mubr.bf16.mxu0 0
    %1178 = vmatmul.mubr.bf16.gmra.mxu0 %v1140
    %v1179 = vpop.f32.mrf.mxu0
    %v1180 = vadd.f32 0.0, %v1179
    %v1181 = vpop.f32.mrf.mxu0
    %v1182 = vpop.f32.mrf.mxu0
    %v1183 = vpop.f32.mrf.mxu0
    %1184 = vdwg.mxu0
    %1185 = vrot.lane.b32.xlu0 %v198, 104
    %v1186 = vpop.permute.xlu0 %1185
    %v1188 = vsel %vm300, %v1136, 0
    %v1191 = vsel %vm328, %v1186, 0
    %1193 = vmatprep.subr.bf16.mxu0 0
    %1194 = vmatpush1.bf16.msra.mxu0 0
    %1195 = vmatprep.subr.bf16.mxu0 0
    %1196 = vmatpush1.bf16.msra.mxu0 0
    %1197 = vmatprep.subr.bf16.mxu0 0
    %1198 = vmatpush1.bf16.msra.mxu0 0
    %1199 = vmatprep.subr.bf16.mxu0 0
    %1200 = vmatpush1.bf16.msra.mxu0 0
    %1201 = vmatprep.subr.bf16.mxu0 0
    %1202 = vmatpush1.bf16.msra.mxu0 0
    %1203 = vmatprep.subr.bf16.mxu0 0
    %1204 = vmatpush1.bf16.msra.mxu0 0
    %1205 = vmatprep.subr.bf16.mxu0 0
    %1206 = vmatpush1.bf16.msra.mxu0 0
    %1207 = vmatprep.subr.bf16.mxu0 0
    %1208 = vmatpush1.bf16.msra.mxu0 %v1191
    %1209 = vmatprep.subr.bf16.mxu0 0
    %1210 = vmatpush2.bf16.msra.mxu0 0
    %1211 = vmatprep.subr.bf16.mxu0 0
    %1212 = vmatpush2.bf16.msra.mxu0 0
    %1213 = vmatprep.subr.bf16.mxu0 0
    %1214 = vmatpush2.bf16.msra.mxu0 0
    %1215 = vmatprep.subr.bf16.mxu0 0
    %1216 = vmatpush2.bf16.msra.mxu0 0
    %1217 = vmatprep.subr.bf16.mxu0 0
    %1218 = vmatpush2.bf16.msra.mxu0 0
    %1219 = vmatprep.subr.bf16.mxu0 0
    %1220 = vmatpush2.bf16.msra.mxu0 0
    %1221 = vmatprep.subr.bf16.mxu0 0
    %1222 = vmatpush2.bf16.msra.mxu0 0
    %1223 = vmatprep.subr.bf16.mxu0 0
    %1224 = vmatpush2.bf16.msra.mxu0 0
    %1225 = vmatprep.mubr.bf16.mxu0 0
    %1226 = vmatmul.mubr.bf16.gmra.mxu0 %v1188
    %v1227 = vpop.f32.mrf.mxu0
    %v1228 = vadd.f32 0.0, %v1227
    %v1229 = vpop.f32.mrf.mxu0
    %v1230 = vpop.f32.mrf.mxu0
    %v1231 = vpop.f32.mrf.mxu0
    %1232 = vdwg.mxu0
    %v1233 = vpack.c.bf16 %v1228, %v1180
    %v1234 = vld [vmem:[%s2 + $0xc] sm:$0xf]
    %v1236 = vsel %vm300, %v1233, 0
    %v1239 = vsel %vm328, %v1234, 0
    %1241 = vmatprep.subr.bf16.mxu0 0
    %1242 = vmatpush1.bf16.msra.mxu0 0
    %1243 = vmatprep.subr.bf16.mxu0 0
    %1244 = vmatpush1.bf16.msra.mxu0 0
    %1245 = vmatprep.subr.bf16.mxu0 0
    %1246 = vmatpush1.bf16.msra.mxu0 0
    %1247 = vmatprep.subr.bf16.mxu0 0
    %1248 = vmatpush1.bf16.msra.mxu0 0
    %1249 = vmatprep.subr.bf16.mxu0 0
    %1250 = vmatpush1.bf16.msra.mxu0 0
    %1251 = vmatprep.subr.bf16.mxu0 0
    %1252 = vmatpush1.bf16.msra.mxu0 0
    %1253 = vmatprep.subr.bf16.mxu0 0
    %1254 = vmatpush1.bf16.msra.mxu0 0
    %1255 = vmatprep.subr.bf16.mxu0 0
    %1256 = vmatpush1.bf16.msra.mxu0 %v1239
    %1257 = vmatprep.subr.bf16.mxu0 0
    %1258 = vmatpush2.bf16.msra.mxu0 0
    %1259 = vmatprep.subr.bf16.mxu0 0
    %1260 = vmatpush2.bf16.msra.mxu0 0
    %1261 = vmatprep.subr.bf16.mxu0 0
    %1262 = vmatpush2.bf16.msra.mxu0 0
    %1263 = vmatprep.subr.bf16.mxu0 0
    %1264 = vmatpush2.bf16.msra.mxu0 0
    %1265 = vmatprep.subr.bf16.mxu0 0
    %1266 = vmatpush2.bf16.msra.mxu0 0
    %1267 = vmatprep.subr.bf16.mxu0 0
    %1268 = vmatpush2.bf16.msra.mxu0 0
    %1269 = vmatprep.subr.bf16.mxu0 0
    %1270 = vmatpush2.bf16.msra.mxu0 0
    %1271 = vmatprep.subr.bf16.mxu0 0
    %1272 = vmatpush2.bf16.msra.mxu0 0
    %1273 = vmatprep.mubr.bf16.mxu0 0
    %1274 = vmatmul.mubr.bf16.gmra.mxu0 %v1236
    %v1275 = vpop.f32.mrf.mxu0
    %v1276 = vadd.f32 0.0, %v1275
    %v1277 = vpop.f32.mrf.mxu0
    %v1278 = vpop.f32.mrf.mxu0
    %v1279 = vadd.f32 0.0, %v1278
    %v1280 = vpop.f32.mrf.mxu0
    %1281 = vdwg.mxu0
    %v1282 = vadd.f32 %v1009, %v1276
    %v1283 = vadd.f32 %v1010, %v1279
    %v1284 = vadd.f32 %v79, %v1282
    %v1285 = vadd.f32 %v80, %v1283
    %v1286 = vlaneseq
    %v1287 = vshrl.u32 %v1286, 7
    %v1288 = vsub.s32 0, %v1287
    %v1289 = vrot.slane %v34, %v1288
    %v1290 = vadd.f32 %v1284, %v1289
    %v1291 = vadd.f32 %v1285, %v1289
    %v1292 = vsel %vm37, %v1290, 0.0
    %1293 = vadd.xlane.f32.xlu0 %v1292
    %v1294 = vpop.xlane.xlu0 %1293
    %v1295 = vsel %vm37, %v1291, 0.0
    %1296 = vadd.xlane.f32.xlu0 %v1295
    %v1297 = vpop.xlane.xlu0 %1296
    %v1298 = vmul.f32 %v1294, %v44
    %v1299 = vmul.f32 %v1297, %v44
    %v1300 = vmul.f32 %v1290, %v1290
    %v1301 = vmul.f32 %v1291, %v1291
    %v1302 = vsel %vm37, %v1300, 0.0
    %1303 = vadd.xlane.f32.xlu0 %v1302
    %v1304 = vpop.xlane.xlu0 %1303
    %v1305 = vsel %vm37, %v1301, 0.0
    %1306 = vadd.xlane.f32.xlu0 %v1305
    %v1307 = vpop.xlane.xlu0 %1306
    %v1308 = vmul.f32 %v1304, %v44
    %v1309 = vmul.f32 %v1307, %v44
    %v1310 = vmul.f32 %v1298, %v1298
    %v1311 = vmul.f32 %v1299, %v1299
    %v1312 = vsub.f32 %v1308, %v1310
    %v1313 = vsub.f32 %v1309, %v1311
    %v1314 = vsub.f32 %v1290, %v1298
    %v1315 = vsub.f32 %v1291, %v1299
    %v1316 = vadd.f32 %v1312, 1e-05
    %v1317 = vadd.f32 %v1313, 1e-05
    %v1318 = vrsqrt.pop %v1316
    %v1319 = vrsqrt.pop %v1317
    %v1320 = vmul.f32 %v1314, %v1318
    %v1321 = vmul.f32 %v1315, %v1319
    %v1322 = vlaneseq
    %v1323 = vshrl.u32 %v1322, 7
    %v1324 = vsub.s32 0, %v1323
    %v1325 = vrot.slane %v32, %v1324
    %v1326 = vmul.f32 %v1320, %v1325
    %v1327 = vmul.f32 %v1321, %v1325
    %v1328 = vlaneseq
    %v1329 = vshrl.u32 %v1328, 7
    %v1330 = vsub.s32 0, %v1329
    %v1331 = vrot.slane %v33, %v1330
    %v1332 = vadd.f32 %v1326, %v1331
    %v1333 = vadd.f32 %v1327, %v1331
    %v1334 = vpack.c.bf16 %v1333, %v1332
    %v1335 = vld [vmem:[%s2 + $0x10] sm:$0xf]
    %v1336 = vld [vmem:[%s2 + $0x14] sm:$0xf]
    %v1337 = vld [vmem:[%s2 + $0x18] sm:$0xf]
    %v1338 = vld [vmem:[%s2 + $0x1c] sm:$0xf]
    %v1339 = vlaneseq
    %v1340 = vshrl.u32 %v1339, 7
    %v1341 = vsub.s32 0, %v1340
    %v1342 = vrot.slane %v35, %v1341
    %v1347 = vunpack.c.l.b16 %v1335
    %v1348 = vunpack.c.l.b16 %v1336
    %v1349 = vunpack.c.l.b16 %v1337
    %v1350 = vunpack.c.l.b16 %v1338
    %v1351 = vpack.c.b16 %v1348, %v1347
    %v1352 = vpack.c.b16 %v1350, %v1349
    %v1356 = vsel %vm37, %v1334, 0
    %1358 = vmatprep.subr.bf16.mxu0 0
    %1359 = vmatpush1.bf16.msra.mxu0 0
    %1360 = vmatprep.subr.bf16.mxu0 0
    %1361 = vmatpush1.bf16.msra.mxu0 0
    %1362 = vmatprep.subr.bf16.mxu0 0
    %1363 = vmatpush1.bf16.msra.mxu0 0
    %1364 = vmatprep.subr.bf16.mxu0 0
    %1365 = vmatpush1.bf16.msra.mxu0 0
    %1366 = vmatprep.subr.bf16.mxu0 0
    %1367 = vmatpush1.bf16.msra.mxu0 0
    %1368 = vmatprep.subr.bf16.mxu0 0
    %1369 = vmatpush1.bf16.msra.mxu0 0
    %1370 = vmatprep.subr.bf16.mxu0 0
    %1371 = vmatpush1.bf16.msra.mxu0 %v1352
    %1372 = vmatprep.subr.bf16.mxu0 0
    %1373 = vmatpush1.bf16.msra.mxu0 %v1351
    %1374 = vmatprep.subr.bf16.mxu0 0
    %1375 = vmatpush2.bf16.msra.mxu0 0
    %1376 = vmatprep.subr.bf16.mxu0 0
    %1377 = vmatpush2.bf16.msra.mxu0 0
    %1378 = vmatprep.subr.bf16.mxu0 0
    %1379 = vmatpush2.bf16.msra.mxu0 0
    %1380 = vmatprep.subr.bf16.mxu0 0
    %1381 = vmatpush2.bf16.msra.mxu0 0
    %1382 = vmatprep.subr.bf16.mxu0 0
    %1383 = vmatpush2.bf16.msra.mxu0 0
    %1384 = vmatprep.subr.bf16.mxu0 0
    %1385 = vmatpush2.bf16.msra.mxu0 0
    %1386 = vmatprep.subr.bf16.mxu0 0
    %1387 = vmatpush2.bf16.msra.mxu0 0
    %1388 = vmatprep.subr.bf16.mxu0 0
    %1389 = vmatpush2.bf16.msra.mxu0 0
    %1390 = vmatprep.mubr.bf16.mxu0 0
    %1391 = vmatmul.mubr.bf16.gmra.mxu0 %v1356
    %v1392 = vpop.f32.mrf.mxu0
    %v1393 = vadd.f32 %v1342, %v1392
    %v1394 = vpop.f32.mrf.mxu0
    %v1395 = vpop.f32.mrf.mxu0
    %v1396 = vadd.f32 %v1342, %v1395
    %v1397 = vpop.f32.mrf.mxu0
    %1398 = vdwg.mxu0
    %v1399 = vmax.f32 %v1393, 0.0
    %v1400 = vmax.f32 %v1396, 0.0
    %v1401 = vpack.c.bf16 %v1400, %v1399
    %v1402 = vld [vmem:[%s2 + $0x20] sm:$0xf]
    %v1403 = vld [vmem:[%s2 + $0x24] sm:$0xf]
    %v1404 = vld [vmem:[%s2 + $0x28] sm:$0xf]
    %v1405 = vld [vmem:[%s2 + $0x2c] sm:$0xf]
    %v1406 = vld [vmem:[%s2 + $0x30] sm:$0xf]
    %v1407 = vld [vmem:[%s2 + $0x34] sm:$0xf]
    %v1408 = vld [vmem:[%s2 + $0x38] sm:$0xf]
    %v1409 = vld [vmem:[%s2 + $0x3c] sm:$0xf]
    %v1410 = vlaneseq
    %v1411 = vshrl.u32 %v1410, 7
    %v1412 = vsub.s32 0, %v1411
    %v1413 = vrot.slane %v36, %v1412
    %v1422 = vunpack.c.l.b16 %v1402
    %v1423 = vunpack.c.l.b16 %v1403
    %v1424 = vunpack.c.l.b16 %v1404
    %v1425 = vunpack.c.l.b16 %v1405
    %v1426 = vunpack.c.l.b16 %v1406
    %v1427 = vunpack.c.l.b16 %v1407
    %v1428 = vunpack.c.l.b16 %v1408
    %v1429 = vunpack.c.l.b16 %v1409
    %v1430 = vpack.c.b16 %v1423, %v1422
    %v1431 = vpack.c.b16 %v1425, %v1424
    %v1432 = vpack.c.b16 %v1427, %v1426
    %v1433 = vpack.c.b16 %v1429, %v1428
    %v1439 = vsel %vm140, %v1401, 0
    %1441 = vmatprep.subr.bf16.mxu0 0
    %1442 = vmatpush1.bf16.msra.mxu0 0
    %1443 = vmatprep.subr.bf16.mxu0 0
    %1444 = vmatpush1.bf16.msra.mxu0 0
    %1445 = vmatprep.subr.bf16.mxu0 0
    %1446 = vmatpush1.bf16.msra.mxu0 0
    %1447 = vmatprep.subr.bf16.mxu0 0
    %1448 = vmatpush1.bf16.msra.mxu0 0
    %1449 = vmatprep.subr.bf16.mxu0 0
    %1450 = vmatpush1.bf16.msra.mxu0 %v1433
    %1451 = vmatprep.subr.bf16.mxu0 0
    %1452 = vmatpush1.bf16.msra.mxu0 %v1432
    %1453 = vmatprep.subr.bf16.mxu0 0
    %1454 = vmatpush1.bf16.msra.mxu0 %v1431
    %1455 = vmatprep.subr.bf16.mxu0 0
    %1456 = vmatpush1.bf16.msra.mxu0 %v1430
    %1457 = vmatprep.subr.bf16.mxu0 0
    %1458 = vmatpush2.bf16.msra.mxu0 0
    %1459 = vmatprep.subr.bf16.mxu0 0
    %1460 = vmatpush2.bf16.msra.mxu0 0
    %1461 = vmatprep.subr.bf16.mxu0 0
    %1462 = vmatpush2.bf16.msra.mxu0 0
    %1463 = vmatprep.subr.bf16.mxu0 0
    %1464 = vmatpush2.bf16.msra.mxu0 0
    %1465 = vmatprep.subr.bf16.mxu0 0
    %1466 = vmatpush2.bf16.msra.mxu0 0
    %1467 = vmatprep.subr.bf16.mxu0 0
    %1468 = vmatpush2.bf16.msra.mxu0 0
    %1469 = vmatprep.subr.bf16.mxu0 0
    %1470 = vmatpush2.bf16.msra.mxu0 0
    %1471 = vmatprep.subr.bf16.mxu0 0
    %1472 = vmatpush2.bf16.msra.mxu0 0
    %1473 = vmatprep.mubr.bf16.mxu0 0
    %1474 = vmatmul.mubr.bf16.gmra.mxu0 %v1439
    %v1475 = vpop.f32.mrf.mxu0
    %v1476 = vadd.f32 %v1413, %v1475
    %v1477 = vpop.f32.mrf.mxu0
    %v1478 = vpop.f32.mrf.mxu0
    %v1479 = vadd.f32 %v1413, %v1478
    %v1480 = vpop.f32.mrf.mxu0
    %1481 = vdwg.mxu0
    %v1482 = vadd.f32 %v1290, %v1476
    %v1483 = vadd.f32 %v1291, %v1479
    %v1484 = vld [vmem:[%s3 + $0x7] sm:$0x1]
    %v1485 = vld [vmem:[%s3 + $0x8] sm:$0x1]
    %v1486 = vld [vmem:[%s3 + $0x9] sm:$0x1]
    %v1487 = vld [vmem:[%s3 + $0xa] sm:$0x1]
    %v1488 = vld [vmem:[%s3 + $0xb] sm:$0x1]
    %v1489 = vld [vmem:[%s3 + $0xc] sm:$0x1]
    %v1490 = vld [vmem:[%s3 + $0xd] sm:$0x1]
    %v1491 = vsel %vm37, %v1482, 0.0
    %1492 = vadd.xlane.f32.xlu0 %v1491
    %v1493 = vpop.xlane.xlu0 %1492
    %v1494 = vsel %vm37, %v1483, 0.0
    %1495 = vadd.xlane.f32.xlu0 %v1494
    %v1496 = vpop.xlane.xlu0 %1495
    %v1497 = vmul.f32 %v1493, %v44
    %v1498 = vmul.f32 %v1496, %v44
    %v1499 = vmul.f32 %v1482, %v1482
    %v1500 = vmul.f32 %v1483, %v1483
    %v1501 = vsel %vm37, %v1499, 0.0
    %1502 = vadd.xlane.f32.xlu0 %v1501
    %v1503 = vpop.xlane.xlu0 %1502
    %v1504 = vsel %vm37, %v1500, 0.0
    %1505 = vadd.xlane.f32.xlu0 %v1504
    %v1506 = vpop.xlane.xlu0 %1505
    %v1507 = vmul.f32 %v1503, %v44
    %v1508 = vmul.f32 %v1506, %v44
    %v1509 = vmul.f32 %v1497, %v1497
    %v1510 = vmul.f32 %v1498, %v1498
    %v1511 = vsub.f32 %v1507, %v1509
    %v1512 = vsub.f32 %v1508, %v1510
    %v1513 = vsub.f32 %v1482, %v1497
    %v1514 = vsub.f32 %v1483, %v1498
    %v1515 = vadd.f32 %v1511, 1e-05
    %v1516 = vadd.f32 %v1512, 1e-05
    %v1517 = vrsqrt.pop %v1515
    %v1518 = vrsqrt.pop %v1516
    %v1519 = vmul.f32 %v1513, %v1517
    %v1520 = vmul.f32 %v1514, %v1518
    %v1521 = vlaneseq
    %v1522 = vshrl.u32 %v1521, 7
    %v1523 = vsub.s32 0, %v1522
    %v1524 = vrot.slane %v1484, %v1523
    %v1525 = vmul.f32 %v1519, %v1524
    %v1526 = vmul.f32 %v1520, %v1524
    %v1527 = vlaneseq
    %v1528 = vshrl.u32 %v1527, 7
    %v1529 = vsub.s32 0, %v1528
    %v1530 = vrot.slane %v1485, %v1529
    %v1531 = vadd.f32 %v1525, %v1530
    %v1532 = vadd.f32 %v1526, %v1530
    %v1533 = vsel %vm37, %v1531, %v84
    %v1534 = vsel %vm37, %v1532, %v86
    %v1535 = vpack.c.bf16 %v1534, %v1533
    %v1536 = vld [vmem:[%s1 + $0x40] sm:$0xff]
    %v1537 = vld [vmem:[%s1 + $0x48] sm:$0xff]
    %v1538 = vld [vmem:[%s1 + $0x50] sm:$0xff]
    %v1539 = vld [vmem:[%s1 + $0x58] sm:$0xff]
    %v1540 = vld [vmem:[%s1 + $0x60] sm:$0xff]
    %v1541 = vld [vmem:[%s1 + $0x68] sm:$0xff]
    %v1542 = vld [vmem:[%s1 + $0x70] sm:$0xff]
    %v1543 = vld [vmem:[%s1 + $0x78] sm:$0xff]
    %v1552 = vunpack.c.l.b16 %v1536
    %v1553 = vunpack.c.h.b16 %v1536
    %v1554 = vunpack.c.l.b16 %v1537
    %v1555 = vunpack.c.h.b16 %v1537
    %v1556 = vunpack.c.l.b16 %v1538
    %v1557 = vunpack.c.h.b16 %v1538
    %v1558 = vunpack.c.l.b16 %v1539
    %v1559 = vunpack.c.h.b16 %v1539
    %v1560 = vunpack.c.l.b16 %v1540
    %v1561 = vunpack.c.h.b16 %v1540
    %v1562 = vunpack.c.l.b16 %v1541
    %v1563 = vunpack.c.h.b16 %v1541
    %v1564 = vunpack.c.l.b16 %v1542
    %v1565 = vunpack.c.h.b16 %v1542
    %v1566 = vunpack.c.l.b16 %v1543
    %v1567 = vunpack.c.h.b16 %v1543
    %v1568 = vpack.c.b16 %v1554, %v1552
    %v1569 = vpack.c.b16 %v1555, %v1553
    %v1570 = vpack.c.b16 %v1558, %v1556
    %v1571 = vpack.c.b16 %v1559, %v1557
    %v1572 = vpack.c.b16 %v1562, %v1560
    %v1573 = vpack.c.b16 %v1563, %v1561
    %v1574 = vpack.c.b16 %v1566, %v1564
    %v1575 = vpack.c.b16 %v1567, %v1565
    %v1585 = vsel %vm140, %v1535, 0
    %1587 = vmatprep.subr.bf16.mxu0 0
    %1588 = vmatpush1.bf16.msra.mxu0 0
    %1589 = vmatprep.subr.bf16.mxu0 0
    %1590 = vmatpush1.bf16.msra.mxu0 0
    %1591 = vmatprep.subr.bf16.mxu0 0
    %1592 = vmatpush1.bf16.msra.mxu0 0
    %1593 = vmatprep.subr.bf16.mxu0 0
    %1594 = vmatpush1.bf16.msra.mxu0 0
    %1595 = vmatprep.subr.bf16.mxu0 %v1575
    %1596 = vmatpush1.bf16.msra.mxu0 %v1574
    %1597 = vmatprep.subr.bf16.mxu0 %v1573
    %1598 = vmatpush1.bf16.msra.mxu0 %v1572
    %1599 = vmatprep.subr.bf16.mxu0 %v1571
    %1600 = vmatpush1.bf16.msra.mxu0 %v1570
    %1601 = vmatprep.subr.bf16.mxu0 %v1569
    %1602 = vmatpush1.bf16.msra.mxu0 %v1568
    %1603 = vmatprep.subr.bf16.mxu0 0
    %1604 = vmatpush2.bf16.msra.mxu0 0
    %1605 = vmatprep.subr.bf16.mxu0 0
    %1606 = vmatpush2.bf16.msra.mxu0 0
    %1607 = vmatprep.subr.bf16.mxu0 0
    %1608 = vmatpush2.bf16.msra.mxu0 0
    %1609 = vmatprep.subr.bf16.mxu0 0
    %1610 = vmatpush2.bf16.msra.mxu0 0
    %1611 = vmatprep.subr.bf16.mxu0 0
    %1612 = vmatpush2.bf16.msra.mxu0 0
    %1613 = vmatprep.subr.bf16.mxu0 0
    %1614 = vmatpush2.bf16.msra.mxu0 0
    %1615 = vmatprep.subr.bf16.mxu0 0
    %1616 = vmatpush2.bf16.msra.mxu0 0
    %1617 = vmatprep.subr.bf16.mxu0 0
    %1618 = vmatpush2.bf16.msra.mxu0 0
    %1619 = vmatprep.mubr.bf16.mxu0 0
    %1620 = vmatmul.mubr.bf16.gmra.mxu0 %v1585
    %v1621 = vpop.f32.mrf.mxu0
    %v1622 = vadd.f32 0.0, %v1621
    %v1623 = vpop.f32.mrf.mxu0
    %v1624 = vadd.f32 0.0, %v1623
    %v1625 = vpop.f32.mrf.mxu0
    %v1626 = vadd.f32 0.0, %v1625
    %v1627 = vpop.f32.mrf.mxu0
    %v1628 = vadd.f32 0.0, %v1627
    %1629 = vdwg.mxu0
    %v1630 = vpack.c.bf16 %v1626, %v1622
    %v1631 = vpack.c.bf16 %v1628, %v1624
    %v1633 = vunpack.c.l.b16 %v1630
    %v1634 = vunpack.c.h.b16 %v1630
    %v1635 = vpack.c.b16 %v1633, %v1633
    %v1636 = vpack.c.b16 %v1634, %v1634
    %v1638 = vunpack.c.l.b16 %v1631
    %v1639 = vunpack.c.h.b16 %v1631
    %v1640 = vpack.c.b16 %v1638, %v1638
    %v1641 = vpack.c.b16 %v1639, %v1639
    %1642 = vrot.lane.b32.xlu0 %v1635, 64
    %v1643 = vpop.permute.xlu0 %1642
    %v1645 = vsel %vm201, %v1635, 0
    %v1648 = vsel %vm201, %v1643, 0
    %1650 = vmatprep.subr.bf16.mxu0 0
    %1651 = vmatpush1.bf16.xpose.msra.mxu0 0
    %1652 = vmatprep.subr.bf16.mxu0 0
    %1653 = vmatpush1.bf16.xpose.msra.mxu0 0
    %1654 = vmatprep.subr.bf16.mxu0 0
    %1655 = vmatpush1.bf16.xpose.msra.mxu0 0
    %1656 = vmatprep.subr.bf16.mxu0 0
    %1657 = vmatpush1.bf16.xpose.msra.mxu0 0
    %1658 = vmatprep.subr.bf16.mxu0 0
    %1659 = vmatpush1.bf16.xpose.msra.mxu0 0
    %1660 = vmatprep.subr.bf16.mxu0 0
    %1661 = vmatpush1.bf16.xpose.msra.mxu0 0
    %1662 = vmatprep.subr.bf16.mxu0 0
    %1663 = vmatpush1.bf16.xpose.msra.mxu0 0
    %1664 = vmatprep.subr.bf16.mxu0 0
    %1665 = vmatpush1.bf16.xpose.msra.mxu0 %v1648
    %1666 = vmatprep.subr.bf16.mxu0 0
    %1667 = vmatpush2.bf16.xpose.msra.mxu0 0
    %1668 = vmatprep.subr.bf16.mxu0 0
    %1669 = vmatpush2.bf16.xpose.msra.mxu0 0
    %1670 = vmatprep.subr.bf16.mxu0 0
    %1671 = vmatpush2.bf16.xpose.msra.mxu0 0
    %1672 = vmatprep.subr.bf16.mxu0 0
    %1673 = vmatpush2.bf16.xpose.msra.mxu0 0
    %1674 = vmatprep.subr.bf16.mxu0 0
    %1675 = vmatpush2.bf16.xpose.msra.mxu0 0
    %1676 = vmatprep.subr.bf16.mxu0 0
    %1677 = vmatpush2.bf16.xpose.msra.mxu0 0
    %1678 = vmatprep.subr.bf16.mxu0 0
    %1679 = vmatpush2.bf16.xpose.msra.mxu0 0
    %1680 = vmatprep.subr.bf16.mxu0 0
    %1681 = vmatpush2.bf16.xpose.msra.mxu0 0
    %1682 = vmatprep.mubr.bf16.mxu0 0
    %1683 = vmatmul.mubr.bf16.gmra.mxu0 %v1645
    %v1684 = vpop.f32.mrf.mxu0
    %v1685 = vadd.f32 0.0, %v1684
    %v1686 = vpop.f32.mrf.mxu0
    %v1687 = vpop.f32.mrf.mxu0
    %v1688 = vpop.f32.mrf.mxu0
    %1689 = vdwg.mxu0
    %1690 = vrot.lane.b32.xlu0 %v1636, 64
    %v1691 = vpop.permute.xlu0 %1690
    %v1693 = vsel %vm201, %v1636, 0
    %v1696 = vsel %vm201, %v1691, 0
    %1698 = vmatprep.subr.bf16.mxu0 0
    %1699 = vmatpush1.bf16.xpose.msra.mxu0 0
    %1700 = vmatprep.subr.bf16.mxu0 0
    %1701 = vmatpush1.bf16.xpose.msra.mxu0 0
    %1702 = vmatprep.subr.bf16.mxu0 0
    %1703 = vmatpush1.bf16.xpose.msra.mxu0 0
    %1704 = vmatprep.subr.bf16.mxu0 0
    %1705 = vmatpush1.bf16.xpose.msra.mxu0 0
    %1706 = vmatprep.subr.bf16.mxu0 0
    %1707 = vmatpush1.bf16.xpose.msra.mxu0 0
    %1708 = vmatprep.subr.bf16.mxu0 0
    %1709 = vmatpush1.bf16.xpose.msra.mxu0 0
    %1710 = vmatprep.subr.bf16.mxu0 0
    %1711 = vmatpush1.bf16.xpose.msra.mxu0 0
    %1712 = vmatprep.subr.bf16.mxu0 0
    %1713 = vmatpush1.bf16.xpose.msra.mxu0 %v1696
    %1714 = vmatprep.subr.bf16.mxu0 0
    %1715 = vmatpush2.bf16.xpose.msra.mxu0 0
    %1716 = vmatprep.subr.bf16.mxu0 0
    %1717 = vmatpush2.bf16.xpose.msra.mxu0 0
    %1718 = vmatprep.subr.bf16.mxu0 0
    %1719 = vmatpush2.bf16.xpose.msra.mxu0 0
    %1720 = vmatprep.subr.bf16.mxu0 0
    %1721 = vmatpush2.bf16.xpose.msra.mxu0 0
    %1722 = vmatprep.subr.bf16.mxu0 0
    %1723 = vmatpush2.bf16.xpose.msra.mxu0 0
    %1724 = vmatprep.subr.bf16.mxu0 0
    %1725 = vmatpush2.bf16.xpose.msra.mxu0 0
    %1726 = vmatprep.subr.bf16.mxu0 0
    %1727 = vmatpush2.bf16.xpose.msra.mxu0 0
    %1728 = vmatprep.subr.bf16.mxu0 0
    %1729 = vmatpush2.bf16.xpose.msra.mxu0 0
    %1730 = vmatprep.mubr.bf16.mxu0 0
    %1731 = vmatmul.mubr.bf16.gmra.mxu0 %v1693
    %v1732 = vpop.f32.mrf.mxu0
    %v1733 = vadd.f32 0.0, %v1732
    %v1734 = vpop.f32.mrf.mxu0
    %v1735 = vpop.f32.mrf.mxu0
    %v1736 = vpop.f32.mrf.mxu0
    %1737 = vdwg.mxu0
    %v1738 = vsel %vm297, %v1685, -inf
    %v1739 = vsel %vm297, %v1733, -inf
    %v1740 = vsel %vm300, %v1738, -inf
    %1741 = vmax.xlane.f32.xlu0 %v1740
    %v1742 = vpop.xlane.xlu0 %1741
    %v1743 = vsel %vm300, %v1739, -inf
    %1744 = vmax.xlane.f32.xlu0 %v1743
    %v1745 = vpop.xlane.xlu0 %1744
    %v1746 = vsub.f32 %v1738, %v1742
    %v1747 = vsub.f32 %v1739, %v1745
    %v1748 = vmul.f32 %v1746, 1.442695
    %v1749 = vpow.pop %v1748
    %v1750 = vmul.f32 %v1747, 1.442695
    %v1751 = vpow.pop %v1750
    %v1752 = vsel %vm300, %v1749, 0.0
    %1753 = vadd.xlane.f32.xlu0 %v1752
    %v1754 = vpop.xlane.xlu0 %1753
    %v1755 = vsel %vm300, %v1751, 0.0
    %1756 = vadd.xlane.f32.xlu0 %v1755
    %v1757 = vpop.xlane.xlu0 %1756
    %v1758 = vrcp.pop %v1754
    %v1759 = vrcp.pop %v1757
    %v1760 = vmul.f32 %v1749, %v1758
    %v1761 = vmul.f32 %v1751, %v1759
    %v1762 = vpack.c.bf16 %v1760, %v1760
    %v1763 = vpack.c.bf16 %v1761, %v1761
    %v1765 = vsel %vm300, %v1762, 0
    %v1768 = vsel %vm328, %v1640, 0
    %1770 = vmatprep.subr.bf16.mxu0 0
    %1771 = vmatpush1.bf16.msra.mxu0 0
    %1772 = vmatprep.subr.bf16.mxu0 0
    %1773 = vmatpush1.bf16.msra.mxu0 0
    %1774 = vmatprep.subr.bf16.mxu0 0
    %1775 = vmatpush1.bf16.msra.mxu0 0
    %1776 = vmatprep.subr.bf16.mxu0 0
    %1777 = vmatpush1.bf16.msra.mxu0 0
    %1778 = vmatprep.subr.bf16.mxu0 0
    %1779 = vmatpush1.bf16.msra.mxu0 0
    %1780 = vmatprep.subr.bf16.mxu0 0
    %1781 = vmatpush1.bf16.msra.mxu0 0
    %1782 = vmatprep.subr.bf16.mxu0 0
    %1783 = vmatpush1.bf16.msra.mxu0 0
    %1784 = vmatprep.subr.bf16.mxu0 0
    %1785 = vmatpush1.bf16.msra.mxu0 %v1768
    %1786 = vmatprep.subr.bf16.mxu0 0
    %1787 = vmatpush2.bf16.msra.mxu0 0
    %1788 = vmatprep.subr.bf16.mxu0 0
    %1789 = vmatpush2.bf16.msra.mxu0 0
    %1790 = vmatprep.subr.bf16.mxu0 0
    %1791 = vmatpush2.bf16.msra.mxu0 0
    %1792 = vmatprep.subr.bf16.mxu0 0
    %1793 = vmatpush2.bf16.msra.mxu0 0
    %1794 = vmatprep.subr.bf16.mxu0 0
    %1795 = vmatpush2.bf16.msra.mxu0 0
    %1796 = vmatprep.subr.bf16.mxu0 0
    %1797 = vmatpush2.bf16.msra.mxu0 0
    %1798 = vmatprep.subr.bf16.mxu0 0
    %1799 = vmatpush2.bf16.msra.mxu0 0
    %1800 = vmatprep.subr.bf16.mxu0 0
    %1801 = vmatpush2.bf16.msra.mxu0 0
    %1802 = vmatprep.mubr.bf16.mxu0 0
    %1803 = vmatmul.mubr.bf16.gmra.mxu0 %v1765
    %v1804 = vpop.f32.mrf.mxu0
    %v1805 = vadd.f32 0.0, %v1804
    %v1806 = vpop.f32.mrf.mxu0
    %v1807 = vpop.f32.mrf.mxu0
    %v1808 = vpop.f32.mrf.mxu0
    %1809 = vdwg.mxu0
    %v1811 = vsel %vm300, %v1763, 0
    %v1814 = vsel %vm328, %v1641, 0
    %1816 = vmatprep.subr.bf16.mxu0 0
    %1817 = vmatpush1.bf16.msra.mxu0 0
    %1818 = vmatprep.subr.bf16.mxu0 0
    %1819 = vmatpush1.bf16.msra.mxu0 0
    %1820 = vmatprep.subr.bf16.mxu0 0
    %1821 = vmatpush1.bf16.msra.mxu0 0
    %1822 = vmatprep.subr.bf16.mxu0 0
    %1823 = vmatpush1.bf16.msra.mxu0 0
    %1824 = vmatprep.subr.bf16.mxu0 0
    %1825 = vmatpush1.bf16.msra.mxu0 0
    %1826 = vmatprep.subr.bf16.mxu0 0
    %1827 = vmatpush1.bf16.msra.mxu0 0
    %1828 = vmatprep.subr.bf16.mxu0 0
    %1829 = vmatpush1.bf16.msra.mxu0 0
    %1830 = vmatprep.subr.bf16.mxu0 0
    %1831 = vmatpush1.bf16.msra.mxu0 %v1814
    %1832 = vmatprep.subr.bf16.mxu0 0
    %1833 = vmatpush2.bf16.msra.mxu0 0
    %1834 = vmatprep.subr.bf16.mxu0 0
    %1835 = vmatpush2.bf16.msra.mxu0 0
    %1836 = vmatprep.subr.bf16.mxu0 0
    %1837 = vmatpush2.bf16.msra.mxu0 0
    %1838 = vmatprep.subr.bf16.mxu0 0
    %1839 = vmatpush2.bf16.msra.mxu0 0
    %1840 = vmatprep.subr.bf16.mxu0 0
    %1841 = vmatpush2.bf16.msra.mxu0 0
    %1842 = vmatprep.subr.bf16.mxu0 0
    %1843 = vmatpush2.bf16.msra.mxu0 0
    %1844 = vmatprep.subr.bf16.mxu0 0
    %1845 = vmatpush2.bf16.msra.mxu0 0
    %1846 = vmatprep.subr.bf16.mxu0 0
    %1847 = vmatpush2.bf16.msra.mxu0 0
    %1848 = vmatprep.mubr.bf16.mxu0 0
    %1849 = vmatmul.mubr.bf16.gmra.mxu0 %v1811
    %v1850 = vpop.f32.mrf.mxu0
    %v1851 = vadd.f32 0.0, %v1850
    %v1852 = vpop.f32.mrf.mxu0
    %v1853 = vpop.f32.mrf.mxu0
    %v1854 = vpop.f32.mrf.mxu0
    %1855 = vdwg.mxu0
    %v1856 = vpack.c.bf16 %v1851, %v1805
    %v1857 = vld [vmem:[%s2 + $0x40] sm:$0xf]
    %1858 = vrot.lane.b32.xlu0 %v1635, 112
    %v1859 = vpop.permute.xlu0 %1858
    %1860 = vrot.lane.b32.xlu0 %v1635, 48
    %v1861 = vpop.permute.xlu0 %1860
    %v1863 = vsel %vm201, %v1859, 0
    %v1866 = vsel %vm201, %v1861, 0
    %1868 = vmatprep.subr.bf16.mxu0 0
    %1869 = vmatpush1.bf16.xpose.msra.mxu0 0
    %1870 = vmatprep.subr.bf16.mxu0 0
    %1871 = vmatpush1.bf16.xpose.msra.mxu0 0
    %1872 = vmatprep.subr.bf16.mxu0 0
    %1873 = vmatpush1.bf16.xpose.msra.mxu0 0
    %1874 = vmatprep.subr.bf16.mxu0 0
    %1875 = vmatpush1.bf16.xpose.msra.mxu0 0
    %1876 = vmatprep.subr.bf16.mxu0 0
    %1877 = vmatpush1.bf16.xpose.msra.mxu0 0
    %1878 = vmatprep.subr.bf16.mxu0 0
    %1879 = vmatpush1.bf16.xpose.msra.mxu0 0
    %1880 = vmatprep.subr.bf16.mxu0 0
    %1881 = vmatpush1.bf16.xpose.msra.mxu0 0
    %1882 = vmatprep.subr.bf16.mxu0 0
    %1883 = vmatpush1.bf16.xpose.msra.mxu0 %v1866
    %1884 = vmatprep.subr.bf16.mxu0 0
    %1885 = vmatpush2.bf16.xpose.msra.mxu0 0
    %1886 = vmatprep.subr.bf16.mxu0 0
    %1887 = vmatpush2.bf16.xpose.msra.mxu0 0
    %1888 = vmatprep.subr.bf16.mxu0 0
    %1889 = vmatpush2.bf16.xpose.msra.mxu0 0
    %1890 = vmatprep.subr.bf16.mxu0 0
    %1891 = vmatpush2.bf16.xpose.msra.mxu0 0
    %1892 = vmatprep.subr.bf16.mxu0 0
    %1893 = vmatpush2.bf16.xpose.msra.mxu0 0
    %1894 = vmatprep.subr.bf16.mxu0 0
    %1895 = vmatpush2.bf16.xpose.msra.mxu0 0
    %1896 = vmatprep.subr.bf16.mxu0 0
    %1897 = vmatpush2.bf16.xpose.msra.mxu0 0
    %1898 = vmatprep.subr.bf16.mxu0 0
    %1899 = vmatpush2.bf16.xpose.msra.mxu0 0
    %1900 = vmatprep.mubr.bf16.mxu0 0
    %1901 = vmatmul.mubr.bf16.gmra.mxu0 %v1863
    %v1902 = vpop.f32.mrf.mxu0
    %v1903 = vadd.f32 0.0, %v1902
    %v1904 = vpop.f32.mrf.mxu0
    %v1905 = vpop.f32.mrf.mxu0
    %v1906 = vpop.f32.mrf.mxu0
    %1907 = vdwg.mxu0
    %1908 = vrot.lane.b32.xlu0 %v1636, 112
    %v1909 = vpop.permute.xlu0 %1908
    %1910 = vrot.lane.b32.xlu0 %v1636, 48
    %v1911 = vpop.permute.xlu0 %1910
    %v1913 = vsel %vm201, %v1909, 0
    %v1916 = vsel %vm201, %v1911, 0
    %1918 = vmatprep.subr.bf16.mxu0 0
    %1919 = vmatpush1.bf16.xpose.msra.mxu0 0
    %1920 = vmatprep.subr.bf16.mxu0 0
    %1921 = vmatpush1.bf16.xpose.msra.mxu0 0
    %1922 = vmatprep.subr.bf16.mxu0 0
    %1923 = vmatpush1.bf16.xpose.msra.mxu0 0
    %1924 = vmatprep.subr.bf16.mxu0 0
    %1925 = vmatpush1.bf16.xpose.msra.mxu0 0
    %1926 = vmatprep.subr.bf16.mxu0 0
    %1927 = vmatpush1.bf16.xpose.msra.mxu0 0
    %1928 = vmatprep.subr.bf16.mxu0 0
    %1929 = vmatpush1.bf16.xpose.msra.mxu0 0
    %1930 = vmatprep.subr.bf16.mxu0 0
    %1931 = vmatpush1.bf16.xpose.msra.mxu0 0
    %1932 = vmatprep.subr.bf16.mxu0 0
    %1933 = vmatpush1.bf16.xpose.msra.mxu0 %v1916
    %1934 = vmatprep.subr.bf16.mxu0 0
    %1935 = vmatpush2.bf16.xpose.msra.mxu0 0
    %1936 = vmatprep.subr.bf16.mxu0 0
    %1937 = vmatpush2.bf16.xpose.msra.mxu0 0
    %1938 = vmatprep.subr.bf16.mxu0 0
    %1939 = vmatpush2.bf16.xpose.msra.mxu0 0
    %1940 = vmatprep.subr.bf16.mxu0 0
    %1941 = vmatpush2.bf16.xpose.msra.mxu0 0
    %1942 = vmatprep.subr.bf16.mxu0 0
    %1943 = vmatpush2.bf16.xpose.msra.mxu0 0
    %1944 = vmatprep.subr.bf16.mxu0 0
    %1945 = vmatpush2.bf16.xpose.msra.mxu0 0
    %1946 = vmatprep.subr.bf16.mxu0 0
    %1947 = vmatpush2.bf16.xpose.msra.mxu0 0
    %1948 = vmatprep.subr.bf16.mxu0 0
    %1949 = vmatpush2.bf16.xpose.msra.mxu0 0
    %1950 = vmatprep.mubr.bf16.mxu0 0
    %1951 = vmatmul.mubr.bf16.gmra.mxu0 %v1913
    %v1952 = vpop.f32.mrf.mxu0
    %v1953 = vadd.f32 0.0, %v1952
    %v1954 = vpop.f32.mrf.mxu0
    %v1955 = vpop.f32.mrf.mxu0
    %v1956 = vpop.f32.mrf.mxu0
    %1957 = vdwg.mxu0
    %v1958 = vsel %vm297, %v1903, -inf
    %v1959 = vsel %vm297, %v1953, -inf
    %v1960 = vsel %vm300, %v1958, -inf
    %1961 = vmax.xlane.f32.xlu0 %v1960
    %v1962 = vpop.xlane.xlu0 %1961
    %v1963 = vsel %vm300, %v1959, -inf
    %1964 = vmax.xlane.f32.xlu0 %v1963
    %v1965 = vpop.xlane.xlu0 %1964
    %v1966 = vsub.f32 %v1958, %v1962
    %v1967 = vsub.f32 %v1959, %v1965
    %v1968 = vmul.f32 %v1966, 1.442695
    %v1969 = vpow.pop %v1968
    %v1970 = vmul.f32 %v1967, 1.442695
    %v1971 = vpow.pop %v1970
    %v1972 = vsel %vm300, %v1969, 0.0
    %1973 = vadd.xlane.f32.xlu0 %v1972
    %v1974 = vpop.xlane.xlu0 %1973
    %v1975 = vsel %vm300, %v1971, 0.0
    %1976 = vadd.xlane.f32.xlu0 %v1975
    %v1977 = vpop.xlane.xlu0 %1976
    %v1978 = vrcp.pop %v1974
    %v1979 = vrcp.pop %v1977
    %v1980 = vmul.f32 %v1969, %v1978
    %v1981 = vmul.f32 %v1971, %v1979
    %v1982 = vpack.c.bf16 %v1980, %v1980
    %v1983 = vpack.c.bf16 %v1981, %v1981
    %1984 = vrot.lane.b32.xlu0 %v1640, 120
    %v1985 = vpop.permute.xlu0 %1984
    %v1987 = vsel %vm300, %v1982, 0
    %v1990 = vsel %vm328, %v1985, 0
    %1992 = vmatprep.subr.bf16.mxu0 0
    %1993 = vmatpush1.bf16.msra.mxu0 0
    %1994 = vmatprep.subr.bf16.mxu0 0
    %1995 = vmatpush1.bf16.msra.mxu0 0
    %1996 = vmatprep.subr.bf16.mxu0 0
    %1997 = vmatpush1.bf16.msra.mxu0 0
    %1998 = vmatprep.subr.bf16.mxu0 0
    %1999 = vmatpush1.bf16.msra.mxu0 0
    %2000 = vmatprep.subr.bf16.mxu0 0
    %2001 = vmatpush1.bf16.msra.mxu0 0
    %2002 = vmatprep.subr.bf16.mxu0 0
    %2003 = vmatpush1.bf16.msra.mxu0 0
    %2004 = vmatprep.subr.bf16.mxu0 0
    %2005 = vmatpush1.bf16.msra.mxu0 0
    %2006 = vmatprep.subr.bf16.mxu0 0
    %2007 = vmatpush1.bf16.msra.mxu0 %v1990
    %2008 = vmatprep.subr.bf16.mxu0 0
    %2009 = vmatpush2.bf16.msra.mxu0 0
    %2010 = vmatprep.subr.bf16.mxu0 0
    %2011 = vmatpush2.bf16.msra.mxu0 0
    %2012 = vmatprep.subr.bf16.mxu0 0
    %2013 = vmatpush2.bf16.msra.mxu0 0
    %2014 = vmatprep.subr.bf16.mxu0 0
    %2015 = vmatpush2.bf16.msra.mxu0 0
    %2016 = vmatprep.subr.bf16.mxu0 0
    %2017 = vmatpush2.bf16.msra.mxu0 0
    %2018 = vmatprep.subr.bf16.mxu0 0
    %2019 = vmatpush2.bf16.msra.mxu0 0
    %2020 = vmatprep.subr.bf16.mxu0 0
    %2021 = vmatpush2.bf16.msra.mxu0 0
    %2022 = vmatprep.subr.bf16.mxu0 0
    %2023 = vmatpush2.bf16.msra.mxu0 0
    %2024 = vmatprep.mubr.bf16.mxu0 0
    %2025 = vmatmul.mubr.bf16.gmra.mxu0 %v1987
    %v2026 = vpop.f32.mrf.mxu0
    %v2027 = vadd.f32 0.0, %v2026
    %v2028 = vpop.f32.mrf.mxu0
    %v2029 = vpop.f32.mrf.mxu0
    %v2030 = vpop.f32.mrf.mxu0
    %2031 = vdwg.mxu0
    %2032 = vrot.lane.b32.xlu0 %v1641, 120
    %v2033 = vpop.permute.xlu0 %2032
    %v2035 = vsel %vm300, %v1983, 0
    %v2038 = vsel %vm328, %v2033, 0
    %2040 = vmatprep.subr.bf16.mxu0 0
    %2041 = vmatpush1.bf16.msra.mxu0 0
    %2042 = vmatprep.subr.bf16.mxu0 0
    %2043 = vmatpush1.bf16.msra.mxu0 0
    %2044 = vmatprep.subr.bf16.mxu0 0
    %2045 = vmatpush1.bf16.msra.mxu0 0
    %2046 = vmatprep.subr.bf16.mxu0 0
    %2047 = vmatpush1.bf16.msra.mxu0 0
    %2048 = vmatprep.subr.bf16.mxu0 0
    %2049 = vmatpush1.bf16.msra.mxu0 0
    %2050 = vmatprep.subr.bf16.mxu0 0
    %2051 = vmatpush1.bf16.msra.mxu0 0
    %2052 = vmatprep.subr.bf16.mxu0 0
    %2053 = vmatpush1.bf16.msra.mxu0 0
    %2054 = vmatprep.subr.bf16.mxu0 0
    %2055 = vmatpush1.bf16.msra.mxu0 %v2038
    %2056 = vmatprep.subr.bf16.mxu0 0
    %2057 = vmatpush2.bf16.msra.mxu0 0
    %2058 = vmatprep.subr.bf16.mxu0 0
    %2059 = vmatpush2.bf16.msra.mxu0 0
    %2060 = vmatprep.subr.bf16.mxu0 0
    %2061 = vmatpush2.bf16.msra.mxu0 0
    %2062 = vmatprep.subr.bf16.mxu0 0
    %2063 = vmatpush2.bf16.msra.mxu0 0
    %2064 = vmatprep.subr.bf16.mxu0 0
    %2065 = vmatpush2.bf16.msra.mxu0 0
    %2066 = vmatprep.subr.bf16.mxu0 0
    %2067 = vmatpush2.bf16.msra.mxu0 0
    %2068 = vmatprep.subr.bf16.mxu0 0
    %2069 = vmatpush2.bf16.msra.mxu0 0
    %2070 = vmatprep.subr.bf16.mxu0 0
    %2071 = vmatpush2.bf16.msra.mxu0 0
    %2072 = vmatprep.mubr.bf16.mxu0 0
    %2073 = vmatmul.mubr.bf16.gmra.mxu0 %v2035
    %v2074 = vpop.f32.mrf.mxu0
    %v2075 = vadd.f32 0.0, %v2074
    %v2076 = vpop.f32.mrf.mxu0
    %v2077 = vpop.f32.mrf.mxu0
    %v2078 = vpop.f32.mrf.mxu0
    %2079 = vdwg.mxu0
    %v2080 = vpack.c.bf16 %v2075, %v2027
    %v2081 = vld [vmem:[%s2 + $0x44] sm:$0xf]
    %v2083 = vsel %vm300, %v2080, 0
    %v2086 = vsel %vm328, %v2081, 0
    %2088 = vmatprep.subr.bf16.mxu0 0
    %2089 = vmatpush1.bf16.msra.mxu0 0
    %2090 = vmatprep.subr.bf16.mxu0 0
    %2091 = vmatpush1.bf16.msra.mxu0 0
    %2092 = vmatprep.subr.bf16.mxu0 0
    %2093 = vmatpush1.bf16.msra.mxu0 0
    %2094 = vmatprep.subr.bf16.mxu0 0
    %2095 = vmatpush1.bf16.msra.mxu0 0
    %2096 = vmatprep.subr.bf16.mxu0 0
    %2097 = vmatpush1.bf16.msra.mxu0 0
    %2098 = vmatprep.subr.bf16.mxu0 0
    %2099 = vmatpush1.bf16.msra.mxu0 0
    %2100 = vmatprep.subr.bf16.mxu0 0
    %2101 = vmatpush1.bf16.msra.mxu0 0
    %2102 = vmatprep.subr.bf16.mxu0 0
    %2103 = vmatpush1.bf16.msra.mxu0 %v2086
    %2104 = vmatprep.subr.bf16.mxu0 0
    %2105 = vmatpush2.bf16.msra.mxu0 0
    %2106 = vmatprep.subr.bf16.mxu0 0
    %2107 = vmatpush2.bf16.msra.mxu0 0
    %2108 = vmatprep.subr.bf16.mxu0 0
    %2109 = vmatpush2.bf16.msra.mxu0 0
    %2110 = vmatprep.subr.bf16.mxu0 0
    %2111 = vmatpush2.bf16.msra.mxu0 0
    %2112 = vmatprep.subr.bf16.mxu0 0
    %2113 = vmatpush2.bf16.msra.mxu0 0
    %2114 = vmatprep.subr.bf16.mxu0 0
    %2115 = vmatpush2.bf16.msra.mxu0 0
    %2116 = vmatprep.subr.bf16.mxu0 0
    %2117 = vmatpush2.bf16.msra.mxu0 0
    %2118 = vmatprep.subr.bf16.mxu0 0
    %2119 = vmatpush2.bf16.msra.mxu0 0
    %2120 = vmatprep.mubr.bf16.mxu0 0
    %2121 = vmatmul.mubr.bf16.gmra.mxu0 %v2083
    %v2122 = vpop.f32.mrf.mxu0
    %v2123 = vadd.f32 0.0, %v2122
    %v2124 = vpop.f32.mrf.mxu0
    %v2125 = vpop.f32.mrf.mxu0
    %v2126 = vadd.f32 0.0, %v2125
    %v2127 = vpop.f32.mrf.mxu0
    %2128 = vdwg.mxu0
    %v2130 = vsel %vm300, %v1856, 0
    %v2133 = vsel %vm328, %v1857, 0
    %2135 = vmatprep.subr.bf16.mxu0 0
    %2136 = vmatpush1.bf16.msra.mxu0 0
    %2137 = vmatprep.subr.bf16.mxu0 0
    %2138 = vmatpush1.bf16.msra.mxu0 0
    %2139 = vmatprep.subr.bf16.mxu0 0
    %2140 = vmatpush1.bf16.msra.mxu0 0
    %2141 = vmatprep.subr.bf16.mxu0 0
    %2142 = vmatpush1.bf16.msra.mxu0 0
    %2143 = vmatprep.subr.bf16.mxu0 0
    %2144 = vmatpush1.bf16.msra.mxu0 0
    %2145 = vmatprep.subr.bf16.mxu0 0
    %2146 = vmatpush1.bf16.msra.mxu0 0
    %2147 = vmatprep.subr.bf16.mxu0 0
    %2148 = vmatpush1.bf16.msra.mxu0 0
    %2149 = vmatprep.subr.bf16.mxu0 0
    %2150 = vmatpush1.bf16.msra.mxu0 %v2133
    %2151 = vmatprep.subr.bf16.mxu0 0
    %2152 = vmatpush2.bf16.msra.mxu0 0
    %2153 = vmatprep.subr.bf16.mxu0 0
    %2154 = vmatpush2.bf16.msra.mxu0 0
    %2155 = vmatprep.subr.bf16.mxu0 0
    %2156 = vmatpush2.bf16.msra.mxu0 0
    %2157 = vmatprep.subr.bf16.mxu0 0
    %2158 = vmatpush2.bf16.msra.mxu0 0
    %2159 = vmatprep.subr.bf16.mxu0 0
    %2160 = vmatpush2.bf16.msra.mxu0 0
    %2161 = vmatprep.subr.bf16.mxu0 0
    %2162 = vmatpush2.bf16.msra.mxu0 0
    %2163 = vmatprep.subr.bf16.mxu0 0
    %2164 = vmatpush2.bf16.msra.mxu0 0
    %2165 = vmatprep.subr.bf16.mxu0 0
    %2166 = vmatpush2.bf16.msra.mxu0 0
    %2167 = vmatprep.mubr.bf16.mxu0 0
    %2168 = vmatmul.mubr.bf16.gmra.mxu0 %v2130
    %v2169 = vpop.f32.mrf.mxu0
    %v2170 = vadd.f32 %v2123, %v2169
    %v2171 = vpop.f32.mrf.mxu0
    %v2172 = vpop.f32.mrf.mxu0
    %v2173 = vadd.f32 %v2126, %v2172
    %v2174 = vpop.f32.mrf.mxu0
    %2175 = vdwg.mxu0
    %2176 = vrot.lane.b32.xlu0 %v1635, 96
    %v2177 = vpop.permute.xlu0 %2176
    %2178 = vrot.lane.b32.xlu0 %v1635, 32
    %v2179 = vpop.permute.xlu0 %2178
    %v2181 = vsel %vm201, %v2177, 0
    %v2184 = vsel %vm201, %v2179, 0
    %2186 = vmatprep.subr.bf16.mxu0 0
    %2187 = vmatpush1.bf16.xpose.msra.mxu0 0
    %2188 = vmatprep.subr.bf16.mxu0 0
    %2189 = vmatpush1.bf16.xpose.msra.mxu0 0
    %2190 = vmatprep.subr.bf16.mxu0 0
    %2191 = vmatpush1.bf16.xpose.msra.mxu0 0
    %2192 = vmatprep.subr.bf16.mxu0 0
    %2193 = vmatpush1.bf16.xpose.msra.mxu0 0
    %2194 = vmatprep.subr.bf16.mxu0 0
    %2195 = vmatpush1.bf16.xpose.msra.mxu0 0
    %2196 = vmatprep.subr.bf16.mxu0 0
    %2197 = vmatpush1.bf16.xpose.msra.mxu0 0
    %2198 = vmatprep.subr.bf16.mxu0 0
    %2199 = vmatpush1.bf16.xpose.msra.mxu0 0
    %2200 = vmatprep.subr.bf16.mxu0 0
    %2201 = vmatpush1.bf16.xpose.msra.mxu0 %v2184
    %2202 = vmatprep.subr.bf16.mxu0 0
    %2203 = vmatpush2.bf16.xpose.msra.mxu0 0
    %2204 = vmatprep.subr.bf16.mxu0 0
    %2205 = vmatpush2.bf16.xpose.msra.mxu0 0
    %2206 = vmatprep.subr.bf16.mxu0 0
    %2207 = vmatpush2.bf16.xpose.msra.mxu0 0
    %2208 = vmatprep.subr.bf16.mxu0 0
    %2209 = vmatpush2.bf16.xpose.msra.mxu0 0
    %2210 = vmatprep.subr.bf16.mxu0 0
    %2211 = vmatpush2.bf16.xpose.msra.mxu0 0
    %2212 = vmatprep.subr.bf16.mxu0 0
    %2213 = vmatpush2.bf16.xpose.msra.mxu0 0
    %2214 = vmatprep.subr.bf16.mxu0 0
    %2215 = vmatpush2.bf16.xpose.msra.mxu0 0
    %2216 = vmatprep.subr.bf16.mxu0 0
    %2217 = vmatpush2.bf16.xpose.msra.mxu0 0
    %2218 = vmatprep.mubr.bf16.mxu0 0
    %2219 = vmatmul.mubr.bf16.gmra.mxu0 %v2181
    %v2220 = vpop.f32.mrf.mxu0
    %v2221 = vadd.f32 0.0, %v2220
    %v2222 = vpop.f32.mrf.mxu0
    %v2223 = vpop.f32.mrf.mxu0
    %v2224 = vpop.f32.mrf.mxu0
    %2225 = vdwg.mxu0
    %2226 = vrot.lane.b32.xlu0 %v1636, 96
    %v2227 = vpop.permute.xlu0 %2226
    %2228 = vrot.lane.b32.xlu0 %v1636, 32
    %v2229 = vpop.permute.xlu0 %2228
    %v2231 = vsel %vm201, %v2227, 0
    %v2234 = vsel %vm201, %v2229, 0
    %2236 = vmatprep.subr.bf16.mxu0 0
    %2237 = vmatpush1.bf16.xpose.msra.mxu0 0
    %2238 = vmatprep.subr.bf16.mxu0 0
    %2239 = vmatpush1.bf16.xpose.msra.mxu0 0
    %2240 = vmatprep.subr.bf16.mxu0 0
    %2241 = vmatpush1.bf16.xpose.msra.mxu0 0
    %2242 = vmatprep.subr.bf16.mxu0 0
    %2243 = vmatpush1.bf16.xpose.msra.mxu0 0
    %2244 = vmatprep.subr.bf16.mxu0 0
    %2245 = vmatpush1.bf16.xpose.msra.mxu0 0
    %2246 = vmatprep.subr.bf16.mxu0 0
    %2247 = vmatpush1.bf16.xpose.msra.mxu0 0
    %2248 = vmatprep.subr.bf16.mxu0 0
    %2249 = vmatpush1.bf16.xpose.msra.mxu0 0
    %2250 = vmatprep.subr.bf16.mxu0 0
    %2251 = vmatpush1.bf16.xpose.msra.mxu0 %v2234
    %2252 = vmatprep.subr.bf16.mxu0 0
    %2253 = vmatpush2.bf16.xpose.msra.mxu0 0
    %2254 = vmatprep.subr.bf16.mxu0 0
    %2255 = vmatpush2.bf16.xpose.msra.mxu0 0
    %2256 = vmatprep.subr.bf16.mxu0 0
    %2257 = vmatpush2.bf16.xpose.msra.mxu0 0
    %2258 = vmatprep.subr.bf16.mxu0 0
    %2259 = vmatpush2.bf16.xpose.msra.mxu0 0
    %2260 = vmatprep.subr.bf16.mxu0 0
    %2261 = vmatpush2.bf16.xpose.msra.mxu0 0
    %2262 = vmatprep.subr.bf16.mxu0 0
    %2263 = vmatpush2.bf16.xpose.msra.mxu0 0
    %2264 = vmatprep.subr.bf16.mxu0 0
    %2265 = vmatpush2.bf16.xpose.msra.mxu0 0
    %2266 = vmatprep.subr.bf16.mxu0 0
    %2267 = vmatpush2.bf16.xpose.msra.mxu0 0
    %2268 = vmatprep.mubr.bf16.mxu0 0
    %2269 = vmatmul.mubr.bf16.gmra.mxu0 %v2231
    %v2270 = vpop.f32.mrf.mxu0
    %v2271 = vadd.f32 0.0, %v2270
    %v2272 = vpop.f32.mrf.mxu0
    %v2273 = vpop.f32.mrf.mxu0
    %v2274 = vpop.f32.mrf.mxu0
    %2275 = vdwg.mxu0
    %v2276 = vsel %vm297, %v2221, -inf
    %v2277 = vsel %vm297, %v2271, -inf
    %v2278 = vsel %vm300, %v2276, -inf
    %2279 = vmax.xlane.f32.xlu0 %v2278
    %v2280 = vpop.xlane.xlu0 %2279
    %v2281 = vsel %vm300, %v2277, -inf
    %2282 = vmax.xlane.f32.xlu0 %v2281
    %v2283 = vpop.xlane.xlu0 %2282
    %v2284 = vsub.f32 %v2276, %v2280
    %v2285 = vsub.f32 %v2277, %v2283
    %v2286 = vmul.f32 %v2284, 1.442695
    %v2287 = vpow.pop %v2286
    %v2288 = vmul.f32 %v2285, 1.442695
    %v2289 = vpow.pop %v2288
    %v2290 = vsel %vm300, %v2287, 0.0
    %2291 = vadd.xlane.f32.xlu0 %v2290
    %v2292 = vpop.xlane.xlu0 %2291
    %v2293 = vsel %vm300, %v2289, 0.0
    %2294 = vadd.xlane.f32.xlu0 %v2293
    %v2295 = vpop.xlane.xlu0 %2294
    %v2296 = vrcp.pop %v2292
    %v2297 = vrcp.pop %v2295
    %v2298 = vmul.f32 %v2287, %v2296
    %v2299 = vmul.f32 %v2289, %v2297
    %v2300 = vpack.c.bf16 %v2298, %v2298
    %v2301 = vpack.c.bf16 %v2299, %v2299
    %2302 = vrot.lane.b32.xlu0 %v1640, 112
    %v2303 = vpop.permute.xlu0 %2302
    %v2305 = vsel %vm300, %v2300, 0
    %v2308 = vsel %vm328, %v2303, 0
    %2310 = vmatprep.subr.bf16.mxu0 0
    %2311 = vmatpush1.bf16.msra.mxu0 0
    %2312 = vmatprep.subr.bf16.mxu0 0
    %2313 = vmatpush1.bf16.msra.mxu0 0
    %2314 = vmatprep.subr.bf16.mxu0 0
    %2315 = vmatpush1.bf16.msra.mxu0 0
    %2316 = vmatprep.subr.bf16.mxu0 0
    %2317 = vmatpush1.bf16.msra.mxu0 0
    %2318 = vmatprep.subr.bf16.mxu0 0
    %2319 = vmatpush1.bf16.msra.mxu0 0
    %2320 = vmatprep.subr.bf16.mxu0 0
    %2321 = vmatpush1.bf16.msra.mxu0 0
    %2322 = vmatprep.subr.bf16.mxu0 0
    %2323 = vmatpush1.bf16.msra.mxu0 0
    %2324 = vmatprep.subr.bf16.mxu0 0
    %2325 = vmatpush1.bf16.msra.mxu0 %v2308
    %2326 = vmatprep.subr.bf16.mxu0 0
    %2327 = vmatpush2.bf16.msra.mxu0 0
    %2328 = vmatprep.subr.bf16.mxu0 0
    %2329 = vmatpush2.bf16.msra.mxu0 0
    %2330 = vmatprep.subr.bf16.mxu0 0
    %2331 = vmatpush2.bf16.msra.mxu0 0
    %2332 = vmatprep.subr.bf16.mxu0 0
    %2333 = vmatpush2.bf16.msra.mxu0 0
    %2334 = vmatprep.subr.bf16.mxu0 0
    %2335 = vmatpush2.bf16.msra.mxu0 0
    %2336 = vmatprep.subr.bf16.mxu0 0
    %2337 = vmatpush2.bf16.msra.mxu0 0
    %2338 = vmatprep.subr.bf16.mxu0 0
    %2339 = vmatpush2.bf16.msra.mxu0 0
    %2340 = vmatprep.subr.bf16.mxu0 0
    %2341 = vmatpush2.bf16.msra.mxu0 0
    %2342 = vmatprep.mubr.bf16.mxu0 0
    %2343 = vmatmul.mubr.bf16.gmra.mxu0 %v2305
    %v2344 = vpop.f32.mrf.mxu0
    %v2345 = vadd.f32 0.0, %v2344
    %v2346 = vpop.f32.mrf.mxu0
    %v2347 = vpop.f32.mrf.mxu0
    %v2348 = vpop.f32.mrf.mxu0
    %2349 = vdwg.mxu0
    %2350 = vrot.lane.b32.xlu0 %v1641, 112
    %v2351 = vpop.permute.xlu0 %2350
    %v2353 = vsel %vm300, %v2301, 0
    %v2356 = vsel %vm328, %v2351, 0
    %2358 = vmatprep.subr.bf16.mxu0 0
    %2359 = vmatpush1.bf16.msra.mxu0 0
    %2360 = vmatprep.subr.bf16.mxu0 0
    %2361 = vmatpush1.bf16.msra.mxu0 0
    %2362 = vmatprep.subr.bf16.mxu0 0
    %2363 = vmatpush1.bf16.msra.mxu0 0
    %2364 = vmatprep.subr.bf16.mxu0 0
    %2365 = vmatpush1.bf16.msra.mxu0 0
    %2366 = vmatprep.subr.bf16.mxu0 0
    %2367 = vmatpush1.bf16.msra.mxu0 0
    %2368 = vmatprep.subr.bf16.mxu0 0
    %2369 = vmatpush1.bf16.msra.mxu0 0
    %2370 = vmatprep.subr.bf16.mxu0 0
    %2371 = vmatpush1.bf16.msra.mxu0 0
    %2372 = vmatprep.subr.bf16.mxu0 0
    %2373 = vmatpush1.bf16.msra.mxu0 %v2356
    %2374 = vmatprep.subr.bf16.mxu0 0
    %2375 = vmatpush2.bf16.msra.mxu0 0
    %2376 = vmatprep.subr.bf16.mxu0 0
    %2377 = vmatpush2.bf16.msra.mxu0 0
    %2378 = vmatprep.subr.bf16.mxu0 0
    %2379 = vmatpush2.bf16.msra.mxu0 0
    %2380 = vmatprep.subr.bf16.mxu0 0
    %2381 = vmatpush2.bf16.msra.mxu0 0
    %2382 = vmatprep.subr.bf16.mxu0 0
    %2383 = vmatpush2.bf16.msra.mxu0 0
    %2384 = vmatprep.subr.bf16.mxu0 0
    %2385 = vmatpush2.bf16.msra.mxu0 0
    %2386 = vmatprep.subr.bf16.mxu0 0
    %2387 = vmatpush2.bf16.msra.mxu0 0
    %2388 = vmatprep.subr.bf16.mxu0 0
    %2389 = vmatpush2.bf16.msra.mxu0 0
    %2390 = vmatprep.mubr.bf16.mxu0 0
    %2391 = vmatmul.mubr.bf16.gmra.mxu0 %v2353
    %v2392 = vpop.f32.mrf.mxu0
    %v2393 = vadd.f32 0.0, %v2392
    %v2394 = vpop.f32.mrf.mxu0
    %v2395 = vpop.f32.mrf.mxu0
    %v2396 = vpop.f32.mrf.mxu0
    %2397 = vdwg.mxu0
    %v2398 = vpack.c.bf16 %v2393, %v2345
    %v2399 = vld [vmem:[%s2 + $0x48] sm:$0xf]
    %v2401 = vsel %vm300, %v2398, 0
    %v2404 = vsel %vm328, %v2399, 0
    %2406 = vmatprep.subr.bf16.mxu0 0
    %2407 = vmatpush1.bf16.msra.mxu0 0
    %2408 = vmatprep.subr.bf16.mxu0 0
    %2409 = vmatpush1.bf16.msra.mxu0 0
    %2410 = vmatprep.subr.bf16.mxu0 0
    %2411 = vmatpush1.bf16.msra.mxu0 0
    %2412 = vmatprep.subr.bf16.mxu0 0
    %2413 = vmatpush1.bf16.msra.mxu0 0
    %2414 = vmatprep.subr.bf16.mxu0 0
    %2415 = vmatpush1.bf16.msra.mxu0 0
    %2416 = vmatprep.subr.bf16.mxu0 0
    %2417 = vmatpush1.bf16.msra.mxu0 0
    %2418 = vmatprep.subr.bf16.mxu0 0
    %2419 = vmatpush1.bf16.msra.mxu0 0
    %2420 = vmatprep.subr.bf16.mxu0 0
    %2421 = vmatpush1.bf16.msra.mxu0 %v2404
    %2422 = vmatprep.subr.bf16.mxu0 0
    %2423 = vmatpush2.bf16.msra.mxu0 0
    %2424 = vmatprep.subr.bf16.mxu0 0
    %2425 = vmatpush2.bf16.msra.mxu0 0
    %2426 = vmatprep.subr.bf16.mxu0 0
    %2427 = vmatpush2.bf16.msra.mxu0 0
    %2428 = vmatprep.subr.bf16.mxu0 0
    %2429 = vmatpush2.bf16.msra.mxu0 0
    %2430 = vmatprep.subr.bf16.mxu0 0
    %2431 = vmatpush2.bf16.msra.mxu0 0
    %2432 = vmatprep.subr.bf16.mxu0 0
    %2433 = vmatpush2.bf16.msra.mxu0 0
    %2434 = vmatprep.subr.bf16.mxu0 0
    %2435 = vmatpush2.bf16.msra.mxu0 0
    %2436 = vmatprep.subr.bf16.mxu0 0
    %2437 = vmatpush2.bf16.msra.mxu0 0
    %2438 = vmatprep.mubr.bf16.mxu0 0
    %2439 = vmatmul.mubr.bf16.gmra.mxu0 %v2401
    %v2440 = vpop.f32.mrf.mxu0
    %v2441 = vadd.f32 0.0, %v2440
    %v2442 = vpop.f32.mrf.mxu0
    %v2443 = vpop.f32.mrf.mxu0
    %v2444 = vadd.f32 0.0, %v2443
    %v2445 = vpop.f32.mrf.mxu0
    %2446 = vdwg.mxu0
    %v2447 = vadd.f32 %v2170, %v2441
    %v2448 = vadd.f32 %v2173, %v2444
    %2449 = vrot.lane.b32.xlu0 %v1635, 80
    %v2450 = vpop.permute.xlu0 %2449
    %2451 = vrot.lane.b32.xlu0 %v1635, 16
    %v2452 = vpop.permute.xlu0 %2451
    %v2454 = vsel %vm201, %v2450, 0
    %v2457 = vsel %vm201, %v2452, 0
    %2459 = vmatprep.subr.bf16.mxu0 0
    %2460 = vmatpush1.bf16.xpose.msra.mxu0 0
    %2461 = vmatprep.subr.bf16.mxu0 0
    %2462 = vmatpush1.bf16.xpose.msra.mxu0 0
    %2463 = vmatprep.subr.bf16.mxu0 0
    %2464 = vmatpush1.bf16.xpose.msra.mxu0 0
    %2465 = vmatprep.subr.bf16.mxu0 0
    %2466 = vmatpush1.bf16.xpose.msra.mxu0 0
    %2467 = vmatprep.subr.bf16.mxu0 0
    %2468 = vmatpush1.bf16.xpose.msra.mxu0 0
    %2469 = vmatprep.subr.bf16.mxu0 0
    %2470 = vmatpush1.bf16.xpose.msra.mxu0 0
    %2471 = vmatprep.subr.bf16.mxu0 0
    %2472 = vmatpush1.bf16.xpose.msra.mxu0 0
    %2473 = vmatprep.subr.bf16.mxu0 0
    %2474 = vmatpush1.bf16.xpose.msra.mxu0 %v2457
    %2475 = vmatprep.subr.bf16.mxu0 0
    %2476 = vmatpush2.bf16.xpose.msra.mxu0 0
    %2477 = vmatprep.subr.bf16.mxu0 0
    %2478 = vmatpush2.bf16.xpose.msra.mxu0 0
    %2479 = vmatprep.subr.bf16.mxu0 0
    %2480 = vmatpush2.bf16.xpose.msra.mxu0 0
    %2481 = vmatprep.subr.bf16.mxu0 0
    %2482 = vmatpush2.bf16.xpose.msra.mxu0 0
    %2483 = vmatprep.subr.bf16.mxu0 0
    %2484 = vmatpush2.bf16.xpose.msra.mxu0 0
    %2485 = vmatprep.subr.bf16.mxu0 0
    %2486 = vmatpush2.bf16.xpose.msra.mxu0 0
    %2487 = vmatprep.subr.bf16.mxu0 0
    %2488 = vmatpush2.bf16.xpose.msra.mxu0 0
    %2489 = vmatprep.subr.bf16.mxu0 0
    %2490 = vmatpush2.bf16.xpose.msra.mxu0 0
    %2491 = vmatprep.mubr.bf16.mxu0 0
    %2492 = vmatmul.mubr.bf16.gmra.mxu0 %v2454
    %v2493 = vpop.f32.mrf.mxu0
    %v2494 = vadd.f32 0.0, %v2493
    %v2495 = vpop.f32.mrf.mxu0
    %v2496 = vpop.f32.mrf.mxu0
    %v2497 = vpop.f32.mrf.mxu0
    %2498 = vdwg.mxu0
    %2499 = vrot.lane.b32.xlu0 %v1636, 80
    %v2500 = vpop.permute.xlu0 %2499
    %2501 = vrot.lane.b32.xlu0 %v1636, 16
    %v2502 = vpop.permute.xlu0 %2501
    %v2504 = vsel %vm201, %v2500, 0
    %v2507 = vsel %vm201, %v2502, 0
    %2509 = vmatprep.subr.bf16.mxu0 0
    %2510 = vmatpush1.bf16.xpose.msra.mxu0 0
    %2511 = vmatprep.subr.bf16.mxu0 0
    %2512 = vmatpush1.bf16.xpose.msra.mxu0 0
    %2513 = vmatprep.subr.bf16.mxu0 0
    %2514 = vmatpush1.bf16.xpose.msra.mxu0 0
    %2515 = vmatprep.subr.bf16.mxu0 0
    %2516 = vmatpush1.bf16.xpose.msra.mxu0 0
    %2517 = vmatprep.subr.bf16.mxu0 0
    %2518 = vmatpush1.bf16.xpose.msra.mxu0 0
    %2519 = vmatprep.subr.bf16.mxu0 0
    %2520 = vmatpush1.bf16.xpose.msra.mxu0 0
    %2521 = vmatprep.subr.bf16.mxu0 0
    %2522 = vmatpush1.bf16.xpose.msra.mxu0 0
    %2523 = vmatprep.subr.bf16.mxu0 0
    %2524 = vmatpush1.bf16.xpose.msra.mxu0 %v2507
    %2525 = vmatprep.subr.bf16.mxu0 0
    %2526 = vmatpush2.bf16.xpose.msra.mxu0 0
    %2527 = vmatprep.subr.bf16.mxu0 0
    %2528 = vmatpush2.bf16.xpose.msra.mxu0 0
    %2529 = vmatprep.subr.bf16.mxu0 0
    %2530 = vmatpush2.bf16.xpose.msra.mxu0 0
    %2531 = vmatprep.subr.bf16.mxu0 0
    %2532 = vmatpush2.bf16.xpose.msra.mxu0 0
    %2533 = vmatprep.subr.bf16.mxu0 0
    %2534 = vmatpush2.bf16.xpose.msra.mxu0 0
    %2535 = vmatprep.subr.bf16.mxu0 0
    %2536 = vmatpush2.bf16.xpose.msra.mxu0 0
    %2537 = vmatprep.subr.bf16.mxu0 0
    %2538 = vmatpush2.bf16.xpose.msra.mxu0 0
    %2539 = vmatprep.subr.bf16.mxu0 0
    %2540 = vmatpush2.bf16.xpose.msra.mxu0 0
    %2541 = vmatprep.mubr.bf16.mxu0 0
    %2542 = vmatmul.mubr.bf16.gmra.mxu0 %v2504
    %v2543 = vpop.f32.mrf.mxu0
    %v2544 = vadd.f32 0.0, %v2543
    %v2545 = vpop.f32.mrf.mxu0
    %v2546 = vpop.f32.mrf.mxu0
    %v2547 = vpop.f32.mrf.mxu0
    %2548 = vdwg.mxu0
    %v2549 = vsel %vm297, %v2494, -inf
    %v2550 = vsel %vm297, %v2544, -inf
    %v2551 = vsel %vm300, %v2549, -inf
    %2552 = vmax.xlane.f32.xlu0 %v2551
    %v2553 = vpop.xlane.xlu0 %2552
    %v2554 = vsel %vm300, %v2550, -inf
    %2555 = vmax.xlane.f32.xlu0 %v2554
    %v2556 = vpop.xlane.xlu0 %2555
    %v2557 = vsub.f32 %v2549, %v2553
    %v2558 = vsub.f32 %v2550, %v2556
    %v2559 = vmul.f32 %v2557, 1.442695
    %v2560 = vpow.pop %v2559
    %v2561 = vmul.f32 %v2558, 1.442695
    %v2562 = vpow.pop %v2561
    %v2563 = vsel %vm300, %v2560, 0.0
    %2564 = vadd.xlane.f32.xlu0 %v2563
    %v2565 = vpop.xlane.xlu0 %2564
    %v2566 = vsel %vm300, %v2562, 0.0
    %2567 = vadd.xlane.f32.xlu0 %v2566
    %v2568 = vpop.xlane.xlu0 %2567
    %v2569 = vrcp.pop %v2565
    %v2570 = vrcp.pop %v2568
    %v2571 = vmul.f32 %v2560, %v2569
    %v2572 = vmul.f32 %v2562, %v2570
    %v2573 = vpack.c.bf16 %v2571, %v2571
    %v2574 = vpack.c.bf16 %v2572, %v2572
    %2575 = vrot.lane.b32.xlu0 %v1640, 104
    %v2576 = vpop.permute.xlu0 %2575
    %v2578 = vsel %vm300, %v2573, 0
    %v2581 = vsel %vm328, %v2576, 0
    %2583 = vmatprep.subr.bf16.mxu0 0
    %2584 = vmatpush1.bf16.msra.mxu0 0
    %2585 = vmatprep.subr.bf16.mxu0 0
    %2586 = vmatpush1.bf16.msra.mxu0 0
    %2587 = vmatprep.subr.bf16.mxu0 0
    %2588 = vmatpush1.bf16.msra.mxu0 0
    %2589 = vmatprep.subr.bf16.mxu0 0
    %2590 = vmatpush1.bf16.msra.mxu0 0
    %2591 = vmatprep.subr.bf16.mxu0 0
    %2592 = vmatpush1.bf16.msra.mxu0 0
    %2593 = vmatprep.subr.bf16.mxu0 0
    %2594 = vmatpush1.bf16.msra.mxu0 0
    %2595 = vmatprep.subr.bf16.mxu0 0
    %2596 = vmatpush1.bf16.msra.mxu0 0
    %2597 = vmatprep.subr.bf16.mxu0 0
    %2598 = vmatpush1.bf16.msra.mxu0 %v2581
    %2599 = vmatprep.subr.bf16.mxu0 0
    %2600 = vmatpush2.bf16.msra.mxu0 0
    %2601 = vmatprep.subr.bf16.mxu0 0
    %2602 = vmatpush2.bf16.msra.mxu0 0
    %2603 = vmatprep.subr.bf16.mxu0 0
    %2604 = vmatpush2.bf16.msra.mxu0 0
    %2605 = vmatprep.subr.bf16.mxu0 0
    %2606 = vmatpush2.bf16.msra.mxu0 0
    %2607 = vmatprep.subr.bf16.mxu0 0
    %2608 = vmatpush2.bf16.msra.mxu0 0
    %2609 = vmatprep.subr.bf16.mxu0 0
    %2610 = vmatpush2.bf16.msra.mxu0 0
    %2611 = vmatprep.subr.bf16.mxu0 0
    %2612 = vmatpush2.bf16.msra.mxu0 0
    %2613 = vmatprep.subr.bf16.mxu0 0
    %2614 = vmatpush2.bf16.msra.mxu0 0
    %2615 = vmatprep.mubr.bf16.mxu0 0
    %2616 = vmatmul.mubr.bf16.gmra.mxu0 %v2578
    %v2617 = vpop.f32.mrf.mxu0
    %v2618 = vadd.f32 0.0, %v2617
    %v2619 = vpop.f32.mrf.mxu0
    %v2620 = vpop.f32.mrf.mxu0
    %v2621 = vpop.f32.mrf.mxu0
    %2622 = vdwg.mxu0
    %2623 = vrot.lane.b32.xlu0 %v1641, 104
    %v2624 = vpop.permute.xlu0 %2623
    %v2626 = vsel %vm300, %v2574, 0
    %v2629 = vsel %vm328, %v2624, 0
    %2631 = vmatprep.subr.bf16.mxu0 0
    %2632 = vmatpush1.bf16.msra.mxu0 0
    %2633 = vmatprep.subr.bf16.mxu0 0
    %2634 = vmatpush1.bf16.msra.mxu0 0
    %2635 = vmatprep.subr.bf16.mxu0 0
    %2636 = vmatpush1.bf16.msra.mxu0 0
    %2637 = vmatprep.subr.bf16.mxu0 0
    %2638 = vmatpush1.bf16.msra.mxu0 0
    %2639 = vmatprep.subr.bf16.mxu0 0
    %2640 = vmatpush1.bf16.msra.mxu0 0
    %2641 = vmatprep.subr.bf16.mxu0 0
    %2642 = vmatpush1.bf16.msra.mxu0 0
    %2643 = vmatprep.subr.bf16.mxu0 0
    %2644 = vmatpush1.bf16.msra.mxu0 0
    %2645 = vmatprep.subr.bf16.mxu0 0
    %2646 = vmatpush1.bf16.msra.mxu0 %v2629
    %2647 = vmatprep.subr.bf16.mxu0 0
    %2648 = vmatpush2.bf16.msra.mxu0 0
    %2649 = vmatprep.subr.bf16.mxu0 0
    %2650 = vmatpush2.bf16.msra.mxu0 0
    %2651 = vmatprep.subr.bf16.mxu0 0
    %2652 = vmatpush2.bf16.msra.mxu0 0
    %2653 = vmatprep.subr.bf16.mxu0 0
    %2654 = vmatpush2.bf16.msra.mxu0 0
    %2655 = vmatprep.subr.bf16.mxu0 0
    %2656 = vmatpush2.bf16.msra.mxu0 0
    %2657 = vmatprep.subr.bf16.mxu0 0
    %2658 = vmatpush2.bf16.msra.mxu0 0
    %2659 = vmatprep.subr.bf16.mxu0 0
    %2660 = vmatpush2.bf16.msra.mxu0 0
    %2661 = vmatprep.subr.bf16.mxu0 0
    %2662 = vmatpush2.bf16.msra.mxu0 0
    %2663 = vmatprep.mubr.bf16.mxu0 0
    %2664 = vmatmul.mubr.bf16.gmra.mxu0 %v2626
    %v2665 = vpop.f32.mrf.mxu0
    %v2666 = vadd.f32 0.0, %v2665
    %v2667 = vpop.f32.mrf.mxu0
    %v2668 = vpop.f32.mrf.mxu0
    %v2669 = vpop.f32.mrf.mxu0
    %2670 = vdwg.mxu0
    %v2671 = vpack.c.bf16 %v2666, %v2618
    %v2672 = vld [vmem:[%s2 + $0x4c] sm:$0xf]
    %v2674 = vsel %vm300, %v2671, 0
    %v2677 = vsel %vm328, %v2672, 0
    %2679 = vmatprep.subr.bf16.mxu0 0
    %2680 = vmatpush1.bf16.msra.mxu0 0
    %2681 = vmatprep.subr.bf16.mxu0 0
    %2682 = vmatpush1.bf16.msra.mxu0 0
    %2683 = vmatprep.subr.bf16.mxu0 0
    %2684 = vmatpush1.bf16.msra.mxu0 0
    %2685 = vmatprep.subr.bf16.mxu0 0
    %2686 = vmatpush1.bf16.msra.mxu0 0
    %2687 = vmatprep.subr.bf16.mxu0 0
    %2688 = vmatpush1.bf16.msra.mxu0 0
    %2689 = vmatprep.subr.bf16.mxu0 0
    %2690 = vmatpush1.bf16.msra.mxu0 0
    %2691 = vmatprep.subr.bf16.mxu0 0
    %2692 = vmatpush1.bf16.msra.mxu0 0
    %2693 = vmatprep.subr.bf16.mxu0 0
    %2694 = vmatpush1.bf16.msra.mxu0 %v2677
    %2695 = vmatprep.subr.bf16.mxu0 0
    %2696 = vmatpush2.bf16.msra.mxu0 0
    %2697 = vmatprep.subr.bf16.mxu0 0
    %2698 = vmatpush2.bf16.msra.mxu0 0
    %2699 = vmatprep.subr.bf16.mxu0 0
    %2700 = vmatpush2.bf16.msra.mxu0 0
    %2701 = vmatprep.subr.bf16.mxu0 0
    %2702 = vmatpush2.bf16.msra.mxu0 0
    %2703 = vmatprep.subr.bf16.mxu0 0
    %2704 = vmatpush2.bf16.msra.mxu0 0
    %2705 = vmatprep.subr.bf16.mxu0 0
    %2706 = vmatpush2.bf16.msra.mxu0 0
    %2707 = vmatprep.subr.bf16.mxu0 0
    %2708 = vmatpush2.bf16.msra.mxu0 0
    %2709 = vmatprep.subr.bf16.mxu0 0
    %2710 = vmatpush2.bf16.msra.mxu0 0
    %2711 = vmatprep.mubr.bf16.mxu0 0
    %2712 = vmatmul.mubr.bf16.gmra.mxu0 %v2674
    %v2713 = vpop.f32.mrf.mxu0
    %v2714 = vadd.f32 0.0, %v2713
    %v2715 = vpop.f32.mrf.mxu0
    %v2716 = vpop.f32.mrf.mxu0
    %v2717 = vadd.f32 0.0, %v2716
    %v2718 = vpop.f32.mrf.mxu0
    %2719 = vdwg.mxu0
    %v2720 = vadd.f32 %v2447, %v2714
    %v2721 = vadd.f32 %v2448, %v2717
    %v2722 = vadd.f32 %v1531, %v2720
    %v2723 = vadd.f32 %v1532, %v2721
    %v2724 = vlaneseq
    %v2725 = vshrl.u32 %v2724, 7
    %v2726 = vsub.s32 0, %v2725
    %v2727 = vrot.slane %v1488, %v2726
    %v2728 = vadd.f32 %v2722, %v2727
    %v2729 = vadd.f32 %v2723, %v2727
    %v2730 = vsel %vm37, %v2728, 0.0
    %2731 = vadd.xlane.f32.xlu0 %v2730
    %v2732 = vpop.xlane.xlu0 %2731
    %v2733 = vsel %vm37, %v2729, 0.0
    %2734 = vadd.xlane.f32.xlu0 %v2733
    %v2735 = vpop.xlane.xlu0 %2734
    %v2736 = vmul.f32 %v2732, %v44
    %v2737 = vmul.f32 %v2735, %v44
    %v2738 = vmul.f32 %v2728, %v2728
    %v2739 = vmul.f32 %v2729, %v2729
    %v2740 = vsel %vm37, %v2738, 0.0
    %2741 = vadd.xlane.f32.xlu0 %v2740
    %v2742 = vpop.xlane.xlu0 %2741
    %v2743 = vsel %vm37, %v2739, 0.0
    %2744 = vadd.xlane.f32.xlu0 %v2743
    %v2745 = vpop.xlane.xlu0 %2744
    %v2746 = vmul.f32 %v2742, %v44
    %v2747 = vmul.f32 %v2745, %v44
    %v2748 = vmul.f32 %v2736, %v2736
    %v2749 = vmul.f32 %v2737, %v2737
    %v2750 = vsub.f32 %v2746, %v2748
    %v2751 = vsub.f32 %v2747, %v2749
    %v2752 = vsub.f32 %v2728, %v2736
    %v2753 = vsub.f32 %v2729, %v2737
    %v2754 = vadd.f32 %v2750, 1e-05
    %v2755 = vadd.f32 %v2751, 1e-05
    %v2756 = vrsqrt.pop %v2754
    %v2757 = vrsqrt.pop %v2755
    %v2758 = vmul.f32 %v2752, %v2756
    %v2759 = vmul.f32 %v2753, %v2757
    %v2760 = vlaneseq
    %v2761 = vshrl.u32 %v2760, 7
    %v2762 = vsub.s32 0, %v2761
    %v2763 = vrot.slane %v1486, %v2762
    %v2764 = vmul.f32 %v2758, %v2763
    %v2765 = vmul.f32 %v2759, %v2763
    %v2766 = vlaneseq
    %v2767 = vshrl.u32 %v2766, 7
    %v2768 = vsub.s32 0, %v2767
    %v2769 = vrot.slane %v1487, %v2768
    %v2770 = vadd.f32 %v2764, %v2769
    %v2771 = vadd.f32 %v2765, %v2769
    %v2772 = vpack.c.bf16 %v2771, %v2770
    %v2773 = vld [vmem:[%s2 + $0x50] sm:$0xf]
    %v2774 = vld [vmem:[%s2 + $0x54] sm:$0xf]
    %v2775 = vld [vmem:[%s2 + $0x58] sm:$0xf]
    %v2776 = vld [vmem:[%s2 + $0x5c] sm:$0xf]
    %v2777 = vlaneseq
    %v2778 = vshrl.u32 %v2777, 7
    %v2779 = vsub.s32 0, %v2778
    %v2780 = vrot.slane %v1489, %v2779
    %v2785 = vunpack.c.l.b16 %v2773
    %v2786 = vunpack.c.l.b16 %v2774
    %v2787 = vunpack.c.l.b16 %v2775
    %v2788 = vunpack.c.l.b16 %v2776
    %v2789 = vpack.c.b16 %v2786, %v2785
    %v2790 = vpack.c.b16 %v2788, %v2787
    %v2794 = vsel %vm37, %v2772, 0
    %2796 = vmatprep.subr.bf16.mxu0 0
    %2797 = vmatpush1.bf16.msra.mxu0 0
    %2798 = vmatprep.subr.bf16.mxu0 0
    %2799 = vmatpush1.bf16.msra.mxu0 0
    %2800 = vmatprep.subr.bf16.mxu0 0
    %2801 = vmatpush1.bf16.msra.mxu0 0
    %2802 = vmatprep.subr.bf16.mxu0 0
    %2803 = vmatpush1.bf16.msra.mxu0 0
    %2804 = vmatprep.subr.bf16.mxu0 0
    %2805 = vmatpush1.bf16.msra.mxu0 0
    %2806 = vmatprep.subr.bf16.mxu0 0
    %2807 = vmatpush1.bf16.msra.mxu0 0
    %2808 = vmatprep.subr.bf16.mxu0 0
    %2809 = vmatpush1.bf16.msra.mxu0 %v2790
    %2810 = vmatprep.subr.bf16.mxu0 0
    %2811 = vmatpush1.bf16.msra.mxu0 %v2789
    %2812 = vmatprep.subr.bf16.mxu0 0
    %2813 = vmatpush2.bf16.msra.mxu0 0
    %2814 = vmatprep.subr.bf16.mxu0 0
    %2815 = vmatpush2.bf16.msra.mxu0 0
    %2816 = vmatprep.subr.bf16.mxu0 0
    %2817 = vmatpush2.bf16.msra.mxu0 0
    %2818 = vmatprep.subr.bf16.mxu0 0
    %2819 = vmatpush2.bf16.msra.mxu0 0
    %2820 = vmatprep.subr.bf16.mxu0 0
    %2821 = vmatpush2.bf16.msra.mxu0 0
    %2822 = vmatprep.subr.bf16.mxu0 0
    %2823 = vmatpush2.bf16.msra.mxu0 0
    %2824 = vmatprep.subr.bf16.mxu0 0
    %2825 = vmatpush2.bf16.msra.mxu0 0
    %2826 = vmatprep.subr.bf16.mxu0 0
    %2827 = vmatpush2.bf16.msra.mxu0 0
    %2828 = vmatprep.mubr.bf16.mxu0 0
    %2829 = vmatmul.mubr.bf16.gmra.mxu0 %v2794
    %v2830 = vpop.f32.mrf.mxu0
    %v2831 = vadd.f32 %v2780, %v2830
    %v2832 = vpop.f32.mrf.mxu0
    %v2833 = vpop.f32.mrf.mxu0
    %v2834 = vadd.f32 %v2780, %v2833
    %v2835 = vpop.f32.mrf.mxu0
    %2836 = vdwg.mxu0
    %v2837 = vmax.f32 %v2831, 0.0
    %v2838 = vmax.f32 %v2834, 0.0
    %v2839 = vpack.c.bf16 %v2838, %v2837
    %v2840 = vld [vmem:[%s2 + $0x60] sm:$0xf]
    %v2841 = vld [vmem:[%s2 + $0x64] sm:$0xf]
    %v2842 = vld [vmem:[%s2 + $0x68] sm:$0xf]
    %v2843 = vld [vmem:[%s2 + $0x6c] sm:$0xf]
    %v2844 = vld [vmem:[%s2 + $0x70] sm:$0xf]
    %v2845 = vld [vmem:[%s2 + $0x74] sm:$0xf]
    %v2846 = vld [vmem:[%s2 + $0x78] sm:$0xf]
    %v2847 = vld [vmem:[%s2 + $0x7c] sm:$0xf]
    %v2848 = vlaneseq
    %v2849 = vshrl.u32 %v2848, 7
    %v2850 = vsub.s32 0, %v2849
    %v2851 = vrot.slane %v1490, %v2850
    %v2860 = vunpack.c.l.b16 %v2840
    %v2861 = vunpack.c.l.b16 %v2841
    %v2862 = vunpack.c.l.b16 %v2842
    %v2863 = vunpack.c.l.b16 %v2843
    %v2864 = vunpack.c.l.b16 %v2844
    %v2865 = vunpack.c.l.b16 %v2845
    %v2866 = vunpack.c.l.b16 %v2846
    %v2867 = vunpack.c.l.b16 %v2847
    %v2868 = vpack.c.b16 %v2861, %v2860
    %v2869 = vpack.c.b16 %v2863, %v2862
    %v2870 = vpack.c.b16 %v2865, %v2864
    %v2871 = vpack.c.b16 %v2867, %v2866
    %v2877 = vsel %vm140, %v2839, 0
    %2879 = vmatprep.subr.bf16.mxu0 0
    %2880 = vmatpush1.bf16.msra.mxu0 0
    %2881 = vmatprep.subr.bf16.mxu0 0
    %2882 = vmatpush1.bf16.msra.mxu0 0
    %2883 = vmatprep.subr.bf16.mxu0 0
    %2884 = vmatpush1.bf16.msra.mxu0 0
    %2885 = vmatprep.subr.bf16.mxu0 0
    %2886 = vmatpush1.bf16.msra.mxu0 0
    %2887 = vmatprep.subr.bf16.mxu0 0
    %2888 = vmatpush1.bf16.msra.mxu0 %v2871
    %2889 = vmatprep.subr.bf16.mxu0 0
    %2890 = vmatpush1.bf16.msra.mxu0 %v2870
    %2891 = vmatprep.subr.bf16.mxu0 0
    %2892 = vmatpush1.bf16.msra.mxu0 %v2869
    %2893 = vmatprep.subr.bf16.mxu0 0
    %2894 = vmatpush1.bf16.msra.mxu0 %v2868
    %2895 = vmatprep.subr.bf16.mxu0 0
    %2896 = vmatpush2.bf16.msra.mxu0 0
    %2897 = vmatprep.subr.bf16.mxu0 0
    %2898 = vmatpush2.bf16.msra.mxu0 0
    %2899 = vmatprep.subr.bf16.mxu0 0
    %2900 = vmatpush2.bf16.msra.mxu0 0
    %2901 = vmatprep.subr.bf16.mxu0 0
    %2902 = vmatpush2.bf16.msra.mxu0 0
    %2903 = vmatprep.subr.bf16.mxu0 0
    %2904 = vmatpush2.bf16.msra.mxu0 0
    %2905 = vmatprep.subr.bf16.mxu0 0
    %2906 = vmatpush2.bf16.msra.mxu0 0
    %2907 = vmatprep.subr.bf16.mxu0 0
    %2908 = vmatpush2.bf16.msra.mxu0 0
    %2909 = vmatprep.subr.bf16.mxu0 0
    %2910 = vmatpush2.bf16.msra.mxu0 0
    %2911 = vmatprep.mubr.bf16.mxu0 0
    %2912 = vmatmul.mubr.bf16.gmra.mxu0 %v2877
    %v2913 = vpop.f32.mrf.mxu0
    %v2914 = vadd.f32 %v2851, %v2913
    %v2915 = vpop.f32.mrf.mxu0
    %v2916 = vpop.f32.mrf.mxu0
    %v2917 = vadd.f32 %v2851, %v2916
    %v2918 = vpop.f32.mrf.mxu0
    %2919 = vdwg.mxu0
    %v2920 = vadd.f32 %v2728, %v2914
    %v2921 = vadd.f32 %v2729, %v2917
    %v2922 = vld [vmem:[%s3 + $0xe] sm:$0x1]
    %v2923 = vld [vmem:[%s3 + $0xf] sm:$0x1]
    %v2924 = vsel %vm37, %v2920, 0.0
    %2925 = vadd.xlane.f32.xlu0 %v2924
    %v2926 = vpop.xlane.xlu0 %2925
    %v2927 = vsel %vm37, %v2921, 0.0
    %2928 = vadd.xlane.f32.xlu0 %v2927
    %v2929 = vpop.xlane.xlu0 %2928
    %v2930 = vmul.f32 %v2926, %v44
    %v2931 = vmul.f32 %v2929, %v44
    %v2932 = vmul.f32 %v2920, %v2920
    %v2933 = vmul.f32 %v2921, %v2921
    %v2934 = vsel %vm37, %v2932, 0.0
    %2935 = vadd.xlane.f32.xlu0 %v2934
    %v2936 = vpop.xlane.xlu0 %2935
    %v2937 = vsel %vm37, %v2933, 0.0
    %2938 = vadd.xlane.f32.xlu0 %v2937
    %v2939 = vpop.xlane.xlu0 %2938
    %v2940 = vmul.f32 %v2936, %v44
    %v2941 = vmul.f32 %v2939, %v44
    %v2942 = vmul.f32 %v2930, %v2930
    %v2943 = vmul.f32 %v2931, %v2931
    %v2944 = vsub.f32 %v2940, %v2942
    %v2945 = vsub.f32 %v2941, %v2943
    %v2946 = vsub.f32 %v2920, %v2930
    %v2947 = vsub.f32 %v2921, %v2931
    %v2948 = vadd.f32 %v2944, 1e-05
    %v2949 = vadd.f32 %v2945, 1e-05
    %v2950 = vrsqrt.pop %v2948
    %v2951 = vrsqrt.pop %v2949
    %v2952 = vmul.f32 %v2946, %v2950
    %v2953 = vmul.f32 %v2947, %v2951
    %v2954 = vlaneseq
    %v2955 = vshrl.u32 %v2954, 7
    %v2956 = vsub.s32 0, %v2955
    %v2957 = vrot.slane %v2922, %v2956
    %v2958 = vmul.f32 %v2952, %v2957
    %v2959 = vmul.f32 %v2953, %v2957
    %v2960 = vlaneseq
    %v2961 = vshrl.u32 %v2960, 7
    %v2962 = vsub.s32 0, %v2961
    %v2963 = vrot.slane %v2923, %v2962
    %v2964 = vadd.f32 %v2958, %v2963
    %v2965 = vadd.f32 %v2959, %v2963
    %v2966 = vpack.c.bf16 %v2965, %v2964
    %v2967 = vld [vmem:[%s2 + $0x80] sm:$0xf]
    %v2968 = vld [vmem:[%s2 + $0x84] sm:$0xf]
    %v2969 = vld [vmem:[%s2 + $0x88] sm:$0xf]
    %v2970 = vld [vmem:[%s2 + $0x8c] sm:$0xf]
    %v2971 = vld [vmem:[%s3 + $0x10] sm:$0x1]
    %v2972 = vlaneseq
    %v2973 = vshrl.u32 %v2972, 7
    %v2974 = vsub.s32 0, %v2973
    %v2975 = vrot.slane %v2971, %v2974
    %v2980 = vunpack.c.l.b16 %v2967
    %v2981 = vunpack.c.l.b16 %v2968
    %v2982 = vunpack.c.l.b16 %v2969
    %v2983 = vunpack.c.l.b16 %v2970
    %v2984 = vpack.c.b16 %v2981, %v2980
    %v2985 = vpack.c.b16 %v2983, %v2982
    %v2989 = vsel %vm37, %v2966, 0
    %2991 = vmatprep.subr.bf16.mxu0 0
    %2992 = vmatpush1.bf16.msra.mxu0 0
    %2993 = vmatprep.subr.bf16.mxu0 0
    %2994 = vmatpush1.bf16.msra.mxu0 0
    %2995 = vmatprep.subr.bf16.mxu0 0
    %2996 = vmatpush1.bf16.msra.mxu0 0
    %2997 = vmatprep.subr.bf16.mxu0 0
    %2998 = vmatpush1.bf16.msra.mxu0 0
    %2999 = vmatprep.subr.bf16.mxu0 0
    %3000 = vmatpush1.bf16.msra.mxu0 0
    %3001 = vmatprep.subr.bf16.mxu0 0
    %3002 = vmatpush1.bf16.msra.mxu0 0
    %3003 = vmatprep.subr.bf16.mxu0 0
    %3004 = vmatpush1.bf16.msra.mxu0 %v2985
    %3005 = vmatprep.subr.bf16.mxu0 0
    %3006 = vmatpush1.bf16.msra.mxu0 %v2984
    %3007 = vmatprep.subr.bf16.mxu0 0
    %3008 = vmatpush2.bf16.msra.mxu0 0
    %3009 = vmatprep.subr.bf16.mxu0 0
    %3010 = vmatpush2.bf16.msra.mxu0 0
    %3011 = vmatprep.subr.bf16.mxu0 0
    %3012 = vmatpush2.bf16.msra.mxu0 0
    %3013 = vmatprep.subr.bf16.mxu0 0
    %3014 = vmatpush2.bf16.msra.mxu0 0
    %3015 = vmatprep.subr.bf16.mxu0 0
    %3016 = vmatpush2.bf16.msra.mxu0 0
    %3017 = vmatprep.subr.bf16.mxu0 0
    %3018 = vmatpush2.bf16.msra.mxu0 0
    %3019 = vmatprep.subr.bf16.mxu0 0
    %3020 = vmatpush2.bf16.msra.mxu0 0
    %3021 = vmatprep.subr.bf16.mxu0 0
    %3022 = vmatpush2.bf16.msra.mxu0 0
    %3023 = vmatprep.mubr.bf16.mxu0 0
    %3024 = vmatmul.mubr.bf16.gmra.mxu0 %v2989
    %v3025 = vpop.f32.mrf.mxu0
    %v3026 = vadd.f32 %v2975, %v3025
    %v3027 = vpop.f32.mrf.mxu0
    %v3028 = vpop.f32.mrf.mxu0
    %v3029 = vadd.f32 %v2975, %v3028
    %v3030 = vpop.f32.mrf.mxu0
    %3031 = vdwg.mxu0
    %v3032 = vsel %vm201, %v3026, -inf
    %3033 = vmax.xlane.f32.xlu0 %v3032
    %v3034 = vpop.xlane.xlu0 %3033
    %v3035 = vsel %vm201, %v3029, -inf
    %3036 = vmax.xlane.f32.xlu0 %v3035
    %v3037 = vpop.xlane.xlu0 %3036
    %v3038 = vsub.f32 %v3026, %v3034
    %v3039 = vsub.f32 %v3029, %v3037
    %v3040 = vmul.f32 %v3038, 1.442695
    %v3041 = vpow.pop %v3040
    %v3042 = vmul.f32 %v3039, 1.442695
    %v3043 = vpow.pop %v3042
    %v3044 = vsel %vm201, %v3041, 0.0
    %3045 = vadd.xlane.f32.xlu0 %v3044
    %v3046 = vpop.xlane.xlu0 %3045
    %v3047 = vsel %vm201, %v3043, 0.0
    %3048 = vadd.xlane.f32.xlu0 %v3047
    %v3049 = vpop.xlane.xlu0 %3048
    %v3050 = vlog2.pop %v3046
    %v3051 = vmul.f32 %v3050, 0.6931472
    %v3052 = vlog2.pop %v3049
    %v3053 = vmul.f32 %v3052, 0.6931472
    %v3054 = vadd.f32 %v3034, %v3051
    %v3055 = vadd.f32 %v3037, %v3053
    %v3056 = vmul.f32 %v3026, %v23
    %v3057 = vmul.f32 %v3029, %v24
    %v3058 = vsel %vm201, %v3056, 0.0
    %3059 = vadd.xlane.f32.xlu0 %v3058
    %v3060 = vpop.xlane.xlu0 %3059
    %v3061 = vsel %vm201, %v3057, 0.0
    %3062 = vadd.xlane.f32.xlu0 %v3061
    %v3063 = vpop.xlane.xlu0 %3062
    %v3064 = vsub.f32 %v3054, %v3060
    %v3065 = vsub.f32 %v3055, %v3063
    %vm3066 = vcmask 7168
    %v3067 = vsel %vm3066, %v3064, 0.0
    %v3068 = vsel %vm3066, %v3065, 0.0
    %v3069 = vadd.f32 %v3067, %v3068
    %3070 = vadd.xlane.f32.xlu0 %v3069
    %v3071 = vpop.xlane.xlu0 %3070
    %v3072 = vrot.slane %v3071, 4
    %v3073 = vadd.f32 %v3071, %v3072
    %v3074 = vrot.slane %v3073, 2
    %v3075 = vadd.f32 %v3073, %v3074
    %v3076 = vrot.slane %v3075, 1
    %v3077 = vadd.f32 %v3075, %v3076
    %s3078 = vtos %v3077
    %s3079 = smul.f32 %s3078, 0.0625
    %s3080 = scalar_lea.smem [#allocation2], 0
    %3081 = sst [smem:[%s3080]] %s3079
    // Predicated region
    $region18: #{tpu_custom_call.1} parent=1 // pred_check
      _
    $region19: #{tpu_custom_call.1} parent=1 // pred_check_branch
      %3083 = sbr.rel (0) target = $region21
    $region20: #{tpu_custom_call.1} parent=1 // pred_region
      %s3085 = ssub.s32 16, 16
      %3086 = vsyncadd [#allocation3], %s3085
      %3089 = dma.smem_to_hbm [#allocation2], 16, %s4, [#allocation3]
    $region21: #{tpu_custom_call.1} parent=1 // pred_fallthru
      _
    // Predicated region
    $region22: #{tpu_custom_call.1} parent=1 // pred_check
      _
    $region23: #{tpu_custom_call.1} parent=1 // pred_check_branch
      %3091 = sbr.rel (0) target = $region25
    $region24: #{tpu_custom_call.1} parent=1 // pred_region
      %3092 = dma.done [#allocation3], 16
    $region25: #{tpu_custom_call.1} parent=1 // pred_fallthru
      _
    %3093 = sfence
    %3094 = vsyncpa [#allocation3], 1

</llo_original>
